<compile_context>
chip_gen: v7x
topology: tpu7x:2x2x1
jax: 0.10.0
libtpu: 0.0.40
codegen_flags: <defaults>
</compile_context>

<pallas_src>
import jax
import jax.numpy as jnp
import numpy as np
from jax.experimental import pallas as pl
from jax.experimental.pallas import tpu as pltpu


def _round_up(x, m):
    return ((x + m - 1) // m) * m


def _pick_tile_n(n, s):
    """Largest lane tile such that ~8 live [S, tile] f32 temps stay under ~8 MiB
    (v7x-safe); prefer tiles that divide the 128-padded N to avoid padding."""
    cap_elems = (8 << 20) // (8 * 4 * max(s, 8))
    cap = max(128, min(1024, (cap_elems // 128) * 128))
    cands = [t for t in (1024, 512, 256, 128) if t <= cap]
    n128 = _round_up(n, 128)
    for t in cands:
        if n128 % t == 0:
            return t
    return cands[0]


def _make_fp_kernel(num_layers, mlp_dtype, interp_in_bf16):
    """Fused: distance matmul -> packed-key 3-NN -> interp matmul -> folded MLP."""

    def kernel(qa_ref, ka_ref, p1_ref, p2_ref, *rest):
        out_ref = rest[-1]
        prm = rest[:-1]     # w0a, w0b, b0, (w, b) per remaining layer

        qa = qa_ref[0]      # [5, T]  f32  rows: -2*x1, sq1, ones
        ka = ka_ref[0]      # [5, S]  f32  rows:  x2,  ones, sq2
        p1 = p1_ref[0]      # [D1, T] mlp_dtype
        p2 = p2_ref[0]      # [D2, S] f32

        s = ka.shape[1]

        # d[s, n] = sq2[s] + sq1[n] - 2 * <x2[:,s], x1[:,n]>  in ONE MXU pass.
        d = jax.lax.dot_general(
            ka, qa, (((0,), (0,)), ((), ())),
            preferred_element_type=jnp.float32,
            precision=jax.lax.Precision.HIGHEST)                 # [S, T]
        d = jnp.maximum(d, 0.0)      # clamp cancellation negatives

        # Packed-key 3-NN: candidate index in the low ceil(log2 S) bits of the
        # (non-negative, hence int-monotone) distance bits.  One int min-reduce
        # per iteration; first-index tie-break comes for free.
        bits = max(1, (s - 1).bit_length())
        hi_mask = jnp.int32(-(1 << bits))
        iota = jax.lax.broadcasted_iota(jnp.int32, d.shape, 0)
        key = (pltpu.bitcast(d, jnp.int32) & hi_mask) | iota

        wmat = jnp.zeros(d.shape, jnp.float32)                   # sparse weights
        norm = jnp.zeros((1, d.shape[1]), jnp.float32)
        for it in range(3):
            kmin = jnp.min(key, axis=0, keepdims=True)           # [1, T] int32
            dmin = pltpu.bitcast(kmin & hi_mask, jnp.float32)    # [1, T]
            w_it = pl.reciprocal(dmin + 1e-8, approx=True)       # EUP
            sel = key == kmin
            wmat = wmat + jnp.where(sel, w_it, 0.0)
            norm = norm + w_it
            if it < 2:
                key = jnp.where(sel, jnp.int32(2147483647), key)

        # interpolated_points (un-normalized) = points2 @ W, then divide once.
        if interp_in_bf16:
            interp = jnp.dot(p2.astype(jnp.bfloat16), wmat.astype(jnp.bfloat16),
                             preferred_element_type=jnp.float32)
        else:
            interp = jnp.dot(p2, wmat, preferred_element_type=jnp.float32)
        interp = interp * pl.reciprocal(norm, approx=True)       # [D2, T]

        # Folded MLP.  Layer 0 is split so concat([points1, interp]) is never
        # materialized; the points1 half has no dependence on the NN chain.
        w0a = prm[0][...]            # [C0, D1] mlp_dtype
        w0b = prm[1][...]            # [C0, D2] mlp_dtype
        b0 = prm[2][...]             # [C0, 1]  f32
        h = jnp.dot(w0a, p1, preferred_element_type=jnp.float32)
        h = h + jnp.dot(w0b, interp.astype(mlp_dtype),
                        preferred_element_type=jnp.float32)
        h = jnp.maximum(h + b0, 0.0)
        for li in range(1, num_layers):
            w = prm[1 + 2 * li][...]
            b = prm[2 + 2 * li][...]
            h = jnp.dot(w, h.astype(mlp_dtype),
                        preferred_element_type=jnp.float32) + b
            h = jnp.maximum(h, 0.0)

        out_ref[0] = h.astype(out_ref.dtype)     # [C_last, T], lane-dense store

    return kernel


def init_folded_params(key, in_channel, mlp, eps=1e-5):
    """Deterministic Conv1d(k=1)+BatchNorm1d params, BN folded (eval mode).

    Returns a list of (w [Cout, Cin] f32, b [Cout, 1] f32).
    """
    params = []
    last = in_channel
    for out_c in mlp:
        key, kw, kb, kg, kbt = jax.random.split(key, 5)
        w = jax.random.normal(kw, (out_c, last), jnp.float32) * 0.1
        b = jax.random.normal(kb, (out_c,), jnp.float32) * 0.1
        gamma = 1.0 + 0.1 * jax.random.normal(kg, (out_c,), jnp.float32)
        beta = 0.1 * jax.random.normal(kbt, (out_c,), jnp.float32)
        running_mean = jnp.zeros((out_c,), jnp.float32)
        running_var = jnp.ones((out_c,), jnp.float32)
        scale = gamma / jnp.sqrt(running_var + eps)
        params.append((w * scale[:, None],
                       (scale * (b - running_mean) + beta).reshape(out_c, 1)))
        last = out_c
    return params


def pointnet_fp_forward(xyz1, xyz2, points1, points2, folded_params,
                        tile_n=None, mlp_dtype=jnp.bfloat16, interp_in_bf16=False):
    """xyz1 [B,3,N], xyz2 [B,3,S], points1 [B,D1,N], points2 [B,D2,S] -> [B,C_last,N]."""
    B, _, N = xyz1.shape
    S = xyz2.shape[2]
    assert S >= 3                      # TODO(synk): S==1 / S==2 branches not implemented
    if points1 is None:
        raise NotImplementedError("points1=None path not implemented")

    xyz1 = xyz1.astype(jnp.float32)
    xyz2 = xyz2.astype(jnp.float32)
    p1 = points1.astype(mlp_dtype)     # only ever used as a bf16 MXU operand
    p2 = points2.astype(jnp.float32)
    D1 = p1.shape[1]
    D2 = p2.shape[1]
    assert folded_params[0][0].shape[1] == D1 + D2

    # Fold both squared norms into the distance matmul: 5-row augmented operands.
    sq1 = jnp.sum(xyz1 * xyz1, axis=1, keepdims=True)                  # [B,1,N]
    sq2 = jnp.sum(xyz2 * xyz2, axis=1, keepdims=True)                  # [B,1,S]
    qa = jnp.concatenate([-2.0 * xyz1, sq1, jnp.ones_like(sq1)], axis=1)   # [B,5,N]
    ka = jnp.concatenate([xyz2, jnp.ones_like(sq2), sq2], axis=1)          # [B,5,S]

    # Tile selection (+ ragged-N padding so the grid always pipelines).
    if tile_n is None:
        tile_n = _pick_tile_n(N, S)
        if B == 1:   # keep >= 2 grid steps for v7x's two TensorCores
            while tile_n > 128 and _round_up(N, tile_n) // tile_n < 2:
                tile_n //= 2
    Np = _round_up(N, tile_n)
    if Np != N:
        qa = jnp.pad(qa, ((0, 0), (0, 0), (0, Np - N)))
        p1 = jnp.pad(p1, ((0, 0), (0, 0), (0, Np - N)))
    n_tiles = Np // tile_n

    num_layers = len(folded_params)
    c_last = folded_params[-1][0].shape[0]

    # Flatten folded params; split layer-0 weight so no channel concat is needed.
    flat_params, param_specs = [], []
    w0, b0 = folded_params[0]
    for arr in (w0[:, :D1].astype(mlp_dtype), w0[:, D1:].astype(mlp_dtype),
                b0.astype(jnp.float32)):
        flat_params.append(arr)
        param_specs.append(pl.BlockSpec(arr.shape, lambda b, n: (0, 0)))
    for w, b in folded_params[1:]:
        for arr in (w.astype(mlp_dtype), b.astype(jnp.float32)):
            flat_params.append(arr)
            param_specs.append(pl.BlockSpec(arr.shape, lambda b, n: (0, 0)))

    kernel = _make_fp_kernel(num_layers, mlp_dtype, interp_in_bf16)

    # VMEM sizing: double-buffered blocks + in-kernel temps, capped at 64 MiB so
    # it is safe on v7x while letting v5e/v6e use larger tiles/weights.
    est = (2 * 5 * tile_n * 4 + 2 * 5 * S * 4 + 2 * D1 * tile_n * 2
           + 2 * D2 * S * 4 + 2 * c_last * tile_n * 4)
    est += sum(2 * int(np.prod(a.shape)) * a.dtype.itemsize for a in flat_params)
    est += 8 * S * tile_n * 4
    est += 2 * sum([D2] + [w.shape[0] for w, _ in folded_params]) * tile_n * 4
    vmem_limit = int(min(64 << 20, max(32 << 20, 2 * est)))

    # Advisory cost estimate.
    flops = 2 * B * Np * S * 5                 # distance matmul
    flops += 15 * B * Np * S                   # packed-key 3-NN selection
    flops += 2 * B * Np * S * D2               # interpolation matmul
    cin = D1 + D2
    for w, _ in folded_params:
        cout = w.shape[0]
        flops += 2 * B * Np * cin * cout + 2 * B * Np * cout
        cin = cout
    bytes_accessed = (qa.size + ka.size + p2.size) * 4 + p1.size * 2 \
        + B * Np * c_last * 4
    bytes_accessed += sum(int(np.prod(a.shape)) * a.dtype.itemsize
                          for a in flat_params)
    cost = pl.CostEstimate(flops=int(flops), transcendentals=int(4 * B * Np),
                           bytes_accessed=int(bytes_accessed))

    out = pl.pallas_call(
        kernel,
        out_shape=jax.ShapeDtypeStruct((B, c_last, Np), jnp.float32),
        grid=(B, n_tiles),
        in_specs=[
            pl.BlockSpec((1, 5, tile_n), lambda b, n: (b, 0, n)),
            pl.BlockSpec((1, 5, S), lambda b, n: (b, 0, 0)),
            pl.BlockSpec((1, D1, tile_n), lambda b, n: (b, 0, n)),
            pl.BlockSpec((1, D2, S), lambda b, n: (b, 0, 0)),
        ] + param_specs,
        out_specs=pl.BlockSpec((1, c_last, tile_n), lambda b, n: (b, 0, n)),
        compiler_params=pltpu.CompilerParams(
            dimension_semantics=("parallel", "parallel"),
            vmem_limit_bytes=vmem_limit,
        ),
        cost_estimate=cost,
    )(qa, ka, p1, p2, *flat_params)

    return out[:, :, :N] if Np != N else out


def reference_forward(xyz1, xyz2, points1, points2, folded_params):
    """Pure-JAX f32 reference mirroring the torch forward (eval-mode BN folded)."""
    x1 = jnp.transpose(xyz1, (0, 2, 1)).astype(jnp.float32)
    x2 = jnp.transpose(xyz2, (0, 2, 1)).astype(jnp.float32)
    p1 = jnp.transpose(points1, (0, 2, 1)).astype(jnp.float32)
    p2 = jnp.transpose(points2, (0, 2, 1)).astype(jnp.float32)
    d = (jnp.sum(x1 ** 2, -1)[..., None] + jnp.sum(x2 ** 2, -1)[:, None, :]
         - 2.0 * jnp.einsum('bnc,bmc->bnm', x1, x2,
                            precision=jax.lax.Precision.HIGHEST))
    neg_top, idx = jax.lax.top_k(-d, 3)
    dd = -neg_top
    recip = 1.0 / (dd + 1e-8)
    w = recip / jnp.sum(recip, -1, keepdims=True)
    gathered = jax.vmap(lambda pts, ix: pts[ix])(p2, idx)        # [B, N, 3, D2]
    interp = jnp.sum(gathered * w[..., None], axis=2)
    h = jnp.concatenate([p1, interp], axis=-1)
    for w_mat, b_col in folded_params:
        h = jnp.maximum(h @ w_mat.T + b_col[:, 0], 0.0)
    return jnp.transpose(h, (0, 2, 1))


def _separate_knn_gaps(xyz1, xyz2, k=3, min_gap=1e-2):
    """Deterministically replace query points whose k-th / (k+1)-th NN distances
    nearly tie, so tiny rounding differences cannot flip the selected neighbour
    set between the kernel and the reference."""
    a = np.array(xyz1, np.float64)     # [B,3,N]
    b = np.array(xyz2, np.float64)     # [B,3,S]
    assert b.shape[2] > k
    d = (np.sum(a * a, 1)[:, :, None] + np.sum(b * b, 1)[:, None, :]
         - 2.0 * np.einsum('bcn,bcs->bns', a, b))               # [B,N,S]
    ds = np.sort(d, axis=-1)
    gap = ds[..., k] - ds[..., k - 1]                            # [B,N]
    for bi in range(a.shape[0]):
        bad = np.where(gap[bi] < min_gap)[0]
        if bad.size:
            good = int(np.argmax(gap[bi]))
            a[bi][:, bad] = a[bi][:, good:good + 1]
    return jnp.asarray(a.astype(np.float32))


if __name__ == "__main__":
    key = jax.random.PRNGKey(0)
    B, N, S = 2, 512, 64
    D1, D2 = 6, 10
    mlp = [32, 16]

    k1, k2, k3, k4, kp = jax.random.split(key, 5)
    xyz1 = jax.random.normal(k1, (B, 3, N), jnp.float32)
    xyz2 = jax.random.normal(k2, (B, 3, S), jnp.float32)
    points1 = jax.random.normal(k3, (B, D1, N), jnp.float32)
    points2 = jax.random.normal(k4, (B, D2, S), jnp.float32)

    # Keep the 3rd/4th-nearest-neighbour gap well separated for the self-test.
    xyz1 = _separate_knn_gaps(xyz1, xyz2, k=3, min_gap=1e-2)

    folded = init_folded_params(kp, D1 + D2, mlp)

    out = pointnet_fp_forward(xyz1, xyz2, points1, points2, folded)
    out = jax.block_until_ready(out)
    assert out.shape == (B, mlp[-1], N)

    ref = reference_forward(xyz1, xyz2, points1, points2, folded)
    # bf16 MXU operands + approx reciprocals in the kernel vs. pure-f32
    # reference -> modest tolerance.
    np.testing.assert_allclose(np.asarray(out), np.asarray(ref),
                               rtol=2e-2, atol=2e-2)
    print("KERNEL_OK")
</pallas_src>

<mosaic_0001>
module attributes {stable_mosaic.version = 11 : i64} {
  func.func @kernel(%arg0: i32, %arg1: i32, %arg2: memref<1x5x512xf32, #tpu.memory_space<vmem>>, %arg3: memref<1x5x64xf32, #tpu.memory_space<vmem>>, %arg4: memref<1x6x512xbf16, #tpu.memory_space<vmem>>, %arg5: memref<1x10x64xf32, #tpu.memory_space<vmem>>, %arg6: memref<32x6xbf16, #tpu.memory_space<vmem>>, %arg7: memref<32x10xbf16, #tpu.memory_space<vmem>>, %arg8: memref<32x1xf32, #tpu.memory_space<vmem>>, %arg9: memref<16x32xbf16, #tpu.memory_space<vmem>>, %arg10: memref<16x1xf32, #tpu.memory_space<vmem>>, %arg11: memref<1x16x512xf32, #tpu.memory_space<vmem>>) attributes {dimension_semantics = [#tpu.dimension_semantics<parallel>, #tpu.dimension_semantics<parallel>], iteration_bounds = array<i64: 2, 1>, scalar_prefetch = 0 : i64, scratch_operands = 0 : i64, tpu.core_type = #tpu.core_type<tc>, window_params = [{transform_indices = @transform_0, window_bounds = array<i64: 1, 5, 512>}, {transform_indices = @transform_1, window_bounds = array<i64: 1, 5, 64>}, {transform_indices = @transform_2, window_bounds = array<i64: 1, 6, 512>}, {transform_indices = @transform_3, window_bounds = array<i64: 1, 10, 64>}, {pipeline_mode = #tpu.pipeline_mode<synchronous>, transform_indices = @transform_4, window_bounds = array<i64: 32, 6>}, {pipeline_mode = #tpu.pipeline_mode<synchronous>, transform_indices = @transform_5, window_bounds = array<i64: 32, 10>}, {pipeline_mode = #tpu.pipeline_mode<synchronous>, transform_indices = @transform_6, window_bounds = array<i64: 32, 1>}, {pipeline_mode = #tpu.pipeline_mode<synchronous>, transform_indices = @transform_7, window_bounds = array<i64: 16, 32>}, {pipeline_mode = #tpu.pipeline_mode<synchronous>, transform_indices = @transform_8, window_bounds = array<i64: 16, 1>}, {transform_indices = @transform_9, window_bounds = array<i64: 1, 16, 512>}]} {
    %c0 = arith.constant 0 : index
    %c0_0 = arith.constant 0 : index
    %c0_1 = arith.constant 0 : index
    %0 = vector.load %arg2[%c0, %c0_0, %c0_1] : memref<1x5x512xf32, #tpu.memory_space<vmem>>, vector<1x5x512xf32>
    %1 = vector.shape_cast %0 : vector<1x5x512xf32> to vector<5x512xf32>
    %c0_2 = arith.constant 0 : index
    %c0_3 = arith.constant 0 : index
    %c0_4 = arith.constant 0 : index
    %2 = vector.load %arg3[%c0_2, %c0_3, %c0_4] : memref<1x5x64xf32, #tpu.memory_space<vmem>>, vector<1x5x64xf32>
    %3 = vector.shape_cast %2 : vector<1x5x64xf32> to vector<5x64xf32>
    %c0_5 = arith.constant 0 : index
    %c0_6 = arith.constant 0 : index
    %c0_7 = arith.constant 0 : index
    %4 = vector.load %arg4[%c0_5, %c0_6, %c0_7] : memref<1x6x512xbf16, #tpu.memory_space<vmem>>, vector<1x6x512xbf16>
    %5 = vector.shape_cast %4 : vector<1x6x512xbf16> to vector<6x512xbf16>
    %c0_8 = arith.constant 0 : index
    %c0_9 = arith.constant 0 : index
    %c0_10 = arith.constant 0 : index
    %6 = vector.load %arg5[%c0_8, %c0_9, %c0_10] : memref<1x10x64xf32, #tpu.memory_space<vmem>>, vector<1x10x64xf32>
    %7 = vector.shape_cast %6 : vector<1x10x64xf32> to vector<10x64xf32>
    %cst = arith.constant dense<0.000000e+00> : vector<64x512xf32>
    %8 = tpu.matmul %3, %1, %cst {dimension_numbers = #tpu.dot_dimension_numbers<[0], [0], [1], [1], [0, 1, 1, 1], [], []>, precision = #tpu.contract_precision<fp32>} : vector<5x64xf32>, vector<5x512xf32>, vector<64x512xf32> -> vector<64x512xf32>
    %cst_11 = arith.constant 0.000000e+00 : f32
    %9 = vector.broadcast %cst_11 : f32 to vector<64x512xf32>
    %10 = arith.maximumf %8, %9 : vector<64x512xf32>
    %11 = tpu.iota {dimensions = array<i32: 0>} : vector<64x512xi32>
    %12 = tpu.bitcast %10 : vector<64x512xf32> -> vector<64x512xi32>
    %c-64_i32 = arith.constant -64 : i32
    %13 = vector.broadcast %c-64_i32 : i32 to vector<64x512xi32>
    %14 = arith.andi %12, %13 : vector<64x512xi32>
    %15 = arith.ori %14, %11 : vector<64x512xi32>
    %cst_12 = arith.constant 0.000000e+00 : f32
    %16 = vector.broadcast %cst_12 : f32 to vector<64x512xf32>
    %cst_13 = arith.constant 0.000000e+00 : f32
    %17 = vector.broadcast %cst_13 : f32 to vector<1x512xf32>
    %cst_14 = arith.constant dense<2147483647> : vector<512xi32>
    %18 = vector.multi_reduction <minsi>, %15, %cst_14 [0] : vector<64x512xi32> to vector<512xi32>
    %19 = vector.shape_cast %18 : vector<512xi32> to vector<1x512xi32>
    %c-64_i32_15 = arith.constant -64 : i32
    %20 = vector.broadcast %c-64_i32_15 : i32 to vector<1x512xi32>
    %21 = arith.andi %19, %20 : vector<1x512xi32>
    %22 = tpu.bitcast %21 : vector<1x512xi32> -> vector<1x512xf32>
    %cst_16 = arith.constant 9.99999993E-9 : f32
    %23 = vector.broadcast %cst_16 : f32 to vector<1x512xf32>
    %24 = arith.addf %22, %23 : vector<1x512xf32>
    %25 = tpu.reciprocal %24 {approx = true} : vector<1x512xf32> -> vector<1x512xf32>
    %26 = vector.broadcast %19 : vector<1x512xi32> to vector<64x512xi32>
    %27 = arith.cmpi eq, %15, %26 : vector<64x512xi32>
    %cst_17 = arith.constant 0.000000e+00 : f32
    %28 = vector.shape_cast %25 : vector<1x512xf32> to vector<1x512xf32>
    %29 = vector.broadcast %28 : vector<1x512xf32> to vector<64x512xf32>
    %30 = vector.broadcast %cst_17 : f32 to vector<64x512xf32>
    %31 = arith.select %27, %29, %30 : vector<64x512xi1>, vector<64x512xf32>
    %32 = arith.addf %16, %31 : vector<64x512xf32>
    %33 = arith.addf %17, %25 : vector<1x512xf32>
    %c2147483647_i32 = arith.constant 2147483647 : i32
    %34 = vector.broadcast %c2147483647_i32 : i32 to vector<64x512xi32>
    %35 = arith.select %27, %34, %15 : vector<64x512xi1>, vector<64x512xi32>
    %cst_18 = arith.constant dense<2147483647> : vector<512xi32>
    %36 = vector.multi_reduction <minsi>, %35, %cst_18 [0] : vector<64x512xi32> to vector<512xi32>
    %37 = vector.shape_cast %36 : vector<512xi32> to vector<1x512xi32>
    %c-64_i32_19 = arith.constant -64 : i32
    %38 = vector.broadcast %c-64_i32_19 : i32 to vector<1x512xi32>
    %39 = arith.andi %37, %38 : vector<1x512xi32>
    %40 = tpu.bitcast %39 : vector<1x512xi32> -> vector<1x512xf32>
    %cst_20 = arith.constant 9.99999993E-9 : f32
    %41 = vector.broadcast %cst_20 : f32 to vector<1x512xf32>
    %42 = arith.addf %40, %41 : vector<1x512xf32>
    %43 = tpu.reciprocal %42 {approx = true} : vector<1x512xf32> -> vector<1x512xf32>
    %44 = vector.broadcast %37 : vector<1x512xi32> to vector<64x512xi32>
    %45 = arith.cmpi eq, %35, %44 : vector<64x512xi32>
    %cst_21 = arith.constant 0.000000e+00 : f32
    %46 = vector.shape_cast %43 : vector<1x512xf32> to vector<1x512xf32>
    %47 = vector.broadcast %46 : vector<1x512xf32> to vector<64x512xf32>
    %48 = vector.broadcast %cst_21 : f32 to vector<64x512xf32>
    %49 = arith.select %45, %47, %48 : vector<64x512xi1>, vector<64x512xf32>
    %50 = arith.addf %32, %49 : vector<64x512xf32>
    %51 = arith.addf %33, %43 : vector<1x512xf32>
    %c2147483647_i32_22 = arith.constant 2147483647 : i32
    %52 = vector.broadcast %c2147483647_i32_22 : i32 to vector<64x512xi32>
    %53 = arith.select %45, %52, %35 : vector<64x512xi1>, vector<64x512xi32>
    %cst_23 = arith.constant dense<2147483647> : vector<512xi32>
    %54 = vector.multi_reduction <minsi>, %53, %cst_23 [0] : vector<64x512xi32> to vector<512xi32>
    %55 = vector.shape_cast %54 : vector<512xi32> to vector<1x512xi32>
    %c-64_i32_24 = arith.constant -64 : i32
    %56 = vector.broadcast %c-64_i32_24 : i32 to vector<1x512xi32>
    %57 = arith.andi %55, %56 : vector<1x512xi32>
    %58 = tpu.bitcast %57 : vector<1x512xi32> -> vector<1x512xf32>
    %cst_25 = arith.constant 9.99999993E-9 : f32
    %59 = vector.broadcast %cst_25 : f32 to vector<1x512xf32>
    %60 = arith.addf %58, %59 : vector<1x512xf32>
    %61 = tpu.reciprocal %60 {approx = true} : vector<1x512xf32> -> vector<1x512xf32>
    %62 = vector.broadcast %55 : vector<1x512xi32> to vector<64x512xi32>
    %63 = arith.cmpi eq, %53, %62 : vector<64x512xi32>
    %cst_26 = arith.constant 0.000000e+00 : f32
    %64 = vector.shape_cast %61 : vector<1x512xf32> to vector<1x512xf32>
    %65 = vector.broadcast %64 : vector<1x512xf32> to vector<64x512xf32>
    %66 = vector.broadcast %cst_26 : f32 to vector<64x512xf32>
    %67 = arith.select %63, %65, %66 : vector<64x512xi1>, vector<64x512xf32>
    %68 = arith.addf %50, %67 : vector<64x512xf32>
    %69 = arith.addf %51, %61 : vector<1x512xf32>
    %cst_27 = arith.constant dense<0.000000e+00> : vector<10x512xf32>
    %70 = tpu.matmul %7, %68, %cst_27 {dimension_numbers = #tpu.dot_dimension_numbers<[1], [0], [0], [1], [0, 0, 1, 1], [], []>} : vector<10x64xf32>, vector<64x512xf32>, vector<10x512xf32> -> vector<10x512xf32>
    %71 = tpu.reciprocal %69 {approx = true} : vector<1x512xf32> -> vector<1x512xf32>
    %72 = vector.broadcast %71 : vector<1x512xf32> to vector<10x512xf32>
    %73 = arith.mulf %70, %72 : vector<10x512xf32>
    %c0_28 = arith.constant 0 : index
    %c0_29 = arith.constant 0 : index
    %74 = vector.load %arg6[%c0_28, %c0_29] : memref<32x6xbf16, #tpu.memory_space<vmem>>, vector<32x6xbf16>
    %c0_30 = arith.constant 0 : index
    %c0_31 = arith.constant 0 : index
    %75 = vector.load %arg7[%c0_30, %c0_31] : memref<32x10xbf16, #tpu.memory_space<vmem>>, vector<32x10xbf16>
    %c0_32 = arith.constant 0 : index
    %c0_33 = arith.constant 0 : index
    %76 = vector.load %arg8[%c0_32, %c0_33] : memref<32x1xf32, #tpu.memory_space<vmem>>, vector<32x1xf32>
    %cst_34 = arith.constant dense<0.000000e+00> : vector<32x512xf32>
    %77 = tpu.matmul %74, %5, %cst_34 {dimension_numbers = #tpu.dot_dimension_numbers<[1], [0], [0], [1], [0, 0, 1, 1], [], []>} : vector<32x6xbf16>, vector<6x512xbf16>, vector<32x512xf32> -> vector<32x512xf32>
    %78 = arith.truncf %73 : vector<10x512xf32> to vector<10x512xbf16>
    %cst_35 = arith.constant dense<0.000000e+00> : vector<32x512xf32>
    %79 = tpu.matmul %75, %78, %cst_35 {dimension_numbers = #tpu.dot_dimension_numbers<[1], [0], [0], [1], [0, 0, 1, 1], [], []>} : vector<32x10xbf16>, vector<10x512xbf16>, vector<32x512xf32> -> vector<32x512xf32>
    %80 = arith.addf %77, %79 : vector<32x512xf32>
    %81 = vector.broadcast %76 : vector<32x1xf32> to vector<32x512xf32>
    %82 = arith.addf %80, %81 : vector<32x512xf32>
    %cst_36 = arith.constant 0.000000e+00 : f32
    %83 = vector.broadcast %cst_36 : f32 to vector<32x512xf32>
    %84 = arith.maximumf %82, %83 : vector<32x512xf32>
    %c0_37 = arith.constant 0 : index
    %c0_38 = arith.constant 0 : index
    %85 = vector.load %arg9[%c0_37, %c0_38] : memref<16x32xbf16, #tpu.memory_space<vmem>>, vector<16x32xbf16>
    %c0_39 = arith.constant 0 : index
    %c0_40 = arith.constant 0 : index
    %86 = vector.load %arg10[%c0_39, %c0_40] : memref<16x1xf32, #tpu.memory_space<vmem>>, vector<16x1xf32>
    %87 = arith.truncf %84 : vector<32x512xf32> to vector<32x512xbf16>
    %cst_41 = arith.constant dense<0.000000e+00> : vector<16x512xf32>
    %88 = tpu.matmul %85, %87, %cst_41 {dimension_numbers = #tpu.dot_dimension_numbers<[1], [0], [0], [1], [0, 0, 1, 1], [], []>} : vector<16x32xbf16>, vector<32x512xbf16>, vector<16x512xf32> -> vector<16x512xf32>
    %89 = vector.broadcast %86 : vector<16x1xf32> to vector<16x512xf32>
    %90 = arith.addf %88, %89 : vector<16x512xf32>
    %cst_42 = arith.constant 0.000000e+00 : f32
    %91 = vector.broadcast %cst_42 : f32 to vector<16x512xf32>
    %92 = arith.maximumf %90, %91 : vector<16x512xf32>
    %c0_43 = arith.constant 0 : index
    %c0_44 = arith.constant 0 : index
    %c0_45 = arith.constant 0 : index
    %93 = vector.load %arg11[%c0_43, %c0_44, %c0_45] : memref<1x16x512xf32, #tpu.memory_space<vmem>>, vector<1x16x512xf32>
    %94 = vector.shape_cast %93 : vector<1x16x512xf32> to vector<16x512xf32>
    %95 = vector.shape_cast %92 : vector<16x512xf32> to vector<1x16x512xf32>
    tpu.vector_store %arg11[%c0_43, %c0_44, %c0_45], %95 {strides = array<i32>} : memref<1x16x512xf32, #tpu.memory_space<vmem>>, vector<1x16x512xf32>,
    return
  }
  func.func @transform_0(%arg0: i32, %arg1: i32) -> (i32, i32, i32) {
    %c0_i32 = arith.constant 0 : i32
    %c0_i32_0 = arith.constant 0 : i32
    return %arg0, %c0_i32, %arg1 : i32, i32, i32
  }
  func.func @transform_1(%arg0: i32, %arg1: i32) -> (i32, i32, i32) {
    %c0_i32 = arith.constant 0 : i32
    %c0_i32_0 = arith.constant 0 : i32
    %c0_i32_1 = arith.constant 0 : i32
    return %arg0, %c0_i32, %c0_i32_0 : i32, i32, i32
  }
  func.func @transform_2(%arg0: i32, %arg1: i32) -> (i32, i32, i32) {
    %c0_i32 = arith.constant 0 : i32
    %c0_i32_0 = arith.constant 0 : i32
    return %arg0, %c0_i32, %arg1 : i32, i32, i32
  }
  func.func @transform_3(%arg0: i32, %arg1: i32) -> (i32, i32, i32) {
    %c0_i32 = arith.constant 0 : i32
    %c0_i32_0 = arith.constant 0 : i32
    %c0_i32_1 = arith.constant 0 : i32
    return %arg0, %c0_i32, %c0_i32_0 : i32, i32, i32
  }
  func.func @transform_4(%arg0: i32, %arg1: i32) -> (i32, i32) {
    %c0_i32 = arith.constant 0 : i32
    %c0_i32_0 = arith.constant 0 : i32
    %c0_i32_1 = arith.constant 0 : i32
    return %c0_i32, %c0_i32_0 : i32, i32
  }
  func.func @transform_5(%arg0: i32, %arg1: i32) -> (i32, i32) {
    %c0_i32 = arith.constant 0 : i32
    %c0_i32_0 = arith.constant 0 : i32
    %c0_i32_1 = arith.constant 0 : i32
    return %c0_i32, %c0_i32_0 : i32, i32
  }
  func.func @transform_6(%arg0: i32, %arg1: i32) -> (i32, i32) {
    %c0_i32 = arith.constant 0 : i32
    %c0_i32_0 = arith.constant 0 : i32
    %c0_i32_1 = arith.constant 0 : i32
    return %c0_i32, %c0_i32_0 : i32, i32
  }
  func.func @transform_7(%arg0: i32, %arg1: i32) -> (i32, i32) {
    %c0_i32 = arith.constant 0 : i32
    %c0_i32_0 = arith.constant 0 : i32
    %c0_i32_1 = arith.constant 0 : i32
    return %c0_i32, %c0_i32_0 : i32, i32
  }
  func.func @transform_8(%arg0: i32, %arg1: i32) -> (i32, i32) {
    %c0_i32 = arith.constant 0 : i32
    %c0_i32_0 = arith.constant 0 : i32
    %c0_i32_1 = arith.constant 0 : i32
    return %c0_i32, %c0_i32_0 : i32, i32
  }
  func.func @transform_9(%arg0: i32, %arg1: i32) -> (i32, i32, i32) {
    %c0_i32 = arith.constant 0 : i32
    %c0_i32_0 = arith.constant 0 : i32
    return %arg0, %c0_i32, %arg1 : i32, i32, i32
  }
}

</mosaic_0001>

<llo_original>
// kernel: tpu_custom_call.1
$region0: #{tpu_custom_call.1}
  #allocation0 [shape = 'u32[]', space=smem, size = 0x4, offset = 0x4, fixed_abs, tag = 'smem constant byte address 0x4 - core index']
  #allocation1 [shape = 'u32[144,128]{1,0:T(1,128)}', space=vmem, size = 0x12000, scoped, tag = 'internal scratch']
  %s0 = inlined_call_operand.vmem [shape: f32[2,5,512], index: 0, kind: input, shape index: {}]
  %s1 = inlined_call_operand.vmem [shape: f32[2,5,64], index: 1, kind: input, shape index: {}]
  %s2 = inlined_call_operand.vmem [shape: bf16[2,6,512], index: 2, kind: input, shape index: {}]
  %s3 = inlined_call_operand.vmem [shape: f32[2,10,64], index: 3, kind: input, shape index: {}]
  %s4 = inlined_call_operand.vmem [shape: bf16[32,6], index: 4, kind: input, shape index: {}]
  %s5 = inlined_call_operand.vmem [shape: bf16[32,10], index: 5, kind: input, shape index: {}]
  %s6 = inlined_call_operand.vmem [shape: f32[32,1], index: 6, kind: input, shape index: {}]
  %s7 = inlined_call_operand.vmem [shape: bf16[16,32], index: 7, kind: input, shape index: {}]
  %s8 = inlined_call_operand.vmem [shape: f32[16,1], index: 8, kind: input, shape index: {}]
  %s9 = inlined_call_operand.hbm [shape: f32[2,16,512], index: 9, kind: output, shape index: {}]
  %s10 = sld [smem:[#allocation0]]
  $region69: #{tpu_custom_call.1} parent=0
    _
  %s12 = ssub.s32 1, %s10
  %s13 = scalar_select 0, %s12, %s10
  $region1: #{tpu_custom_call.1} parent=0
    #allocation2 [shape = 'u8[65536]{0}', space=vmem, size = 0x10000, scoped, tag = 'output window, operand 0']
    #allocation3 [shape = 's32[2]{0}', space=sflag, size = 0x8, scoped, tag = 'scoped memory for tpu_custom_call.1']
    %14 = vsyncpa [#allocation3], 0
    %s15 = scalar_lea.sflag [#allocation3], 1
    %16 = vsyncpa %s15, 0
    loop: start=0, step=1, limit=4
    $region2: #{tpu_custom_call.1} parent=1 // loop_pre_header
      _
    $region3: #{tpu_custom_call.1} parent=1 // loop_header
      %s18 = sphi 0, %s22
      %p19 = scmp.ge.s32.totalorder %s18, 4
      %s25 = sphi 0, %s37
      %s26 = sphi 0, %s33
      %s27 = sphi 0, %s25
      %s28 = sphi 0, %s26
      %s29 = sphi 0, %s27
      %s30 = sphi 0, %s28
      %s42 = sphi 0, %s44
      %s45 = sphi 0, %s42
      %s46 = sphi 0, %s45
      %s62 = sphi 0, %s46
      %s68 = sphi 0, %s70
      %s71 = sphi 0, %s68
      %s72 = sphi 0, %s71
      %s88 = sphi 0, %s72
      %s96 = sphi 0, %s98
      %s99 = sphi 0, %s96
      %s100 = sphi 0, %s99
      %s116 = sphi 0, %s100
      %s122 = sphi 0, %s124
      %s125 = sphi 0, %s122
      %s126 = sphi 0, %s125
      %s142 = sphi 0, %s126
      %s146 = sphi 0, %s146
      %s148 = sphi 0, %s146
      %s149 = sphi 0, %s148
      %s163 = sphi 0, %s149
      %s167 = sphi 0, %s167
      %s169 = sphi 0, %s167
      %s170 = sphi 0, %s169
      %s184 = sphi 0, %s170
      %s188 = sphi 0, %s188
      %s190 = sphi 0, %s188
      %s191 = sphi 0, %s190
      %s205 = sphi 0, %s191
      %s209 = sphi 0, %s209
      %s211 = sphi 0, %s209
      %s212 = sphi 0, %s211
      %s226 = sphi 0, %s212
      %s230 = sphi 0, %s230
      %s232 = sphi 0, %s230
      %s233 = sphi 0, %s232
      %s247 = sphi 0, %s233
      %s255 = sphi 0, %s257
      %s258 = sphi 0, %s255
      %s259 = sphi 0, %s258
      %s275 = sphi 0, %s259
    $region4: #{tpu_custom_call.1} parent=1 // loop_header_branch
      %21 = sbr.rel (%p19) target = $region8
    $region5: #{tpu_custom_call.1} parent=1 // loop_body
      %s23 = ssub.s32 %s18, 1
      %s24 = ssub.s32 %s18, 2
      %s31 = sadd.s32 1, %s26
      %p32 = scmp.ge.s32.totalorder %s31, 1
      %s33 = scalar_select %p32, 0, %s31
      %s34 = sadd.s32 1, %s25
      %s35 = scalar_select %p32, %s34, %s25
      %p36 = scmp.ge.s32.totalorder %s35, 2
      %s37 = scalar_select %p36, 0, %s35
      %s38 = ssub.s32 %s25, %s37
      %s39 = ssub.s32 %s26, %s33
      %s40 = sor.u32 %s38, %s39
      %p41 = scmp.eq.s32.totalorder %s40, 0
      %s43 = sadd.s32 %s42, 1
      %s44 = scalar_select %p41, %s42, %s43
      %p47 = pneg %p41
      %p48 = scmp.eq.s32.totalorder %s18, 1
      %p49 = por %p47, %p48
      %p50 = scmp.ne.s32.totalorder %s42, %s45
      %p51 = scmp.eq.s32.totalorder %s18, 0
      %p52 = por %p50, %p51
      %p53 = scmp.ne.s32.totalorder %s42, %s45
      %p54 = scmp.eq.s32.totalorder %s23, 1
      %p55 = por %p53, %p54
      %p56 = scmp.ne.s32.totalorder %s45, %s46
      %p57 = scmp.eq.s32.totalorder %s23, 0
      %p58 = por %p56, %p57
      %p59 = scmp.ne.s32.totalorder %s45, %s46
      %p60 = scmp.eq.s32.totalorder %s24, 1
      %p61 = por %p59, %p60
      %p63 = scmp.ne.s32.totalorder %s46, %s62
      %p64 = scmp.eq.s32.totalorder %s24, 0
      %p65 = por %p63, %p64
      %s66 = ssub.s32 %s25, %s37
      %p67 = scmp.eq.s32.totalorder %s66, 0
      %s69 = sadd.s32 %s68, 1
      %s70 = scalar_select %p67, %s68, %s69
      %p73 = pneg %p67
      %p74 = scmp.eq.s32.totalorder %s18, 1
      %p75 = por %p73, %p74
      %p76 = scmp.ne.s32.totalorder %s68, %s71
      %p77 = scmp.eq.s32.totalorder %s18, 0
      %p78 = por %p76, %p77
      %p79 = scmp.ne.s32.totalorder %s68, %s71
      %p80 = scmp.eq.s32.totalorder %s23, 1
      %p81 = por %p79, %p80
      %p82 = scmp.ne.s32.totalorder %s71, %s72
      %p83 = scmp.eq.s32.totalorder %s23, 0
      %p84 = por %p82, %p83
      %p85 = scmp.ne.s32.totalorder %s71, %s72
      %p86 = scmp.eq.s32.totalorder %s24, 1
      %p87 = por %p85, %p86
      %p89 = scmp.ne.s32.totalorder %s72, %s88
      %p90 = scmp.eq.s32.totalorder %s24, 0
      %p91 = por %p89, %p90
      %s92 = ssub.s32 %s25, %s37
      %s93 = ssub.s32 %s26, %s33
      %s94 = sor.u32 %s92, %s93
      %p95 = scmp.eq.s32.totalorder %s94, 0
      %s97 = sadd.s32 %s96, 1
      %s98 = scalar_select %p95, %s96, %s97
      %p101 = pneg %p95
      %p102 = scmp.eq.s32.totalorder %s18, 1
      %p103 = por %p101, %p102
      %p104 = scmp.ne.s32.totalorder %s96, %s99
      %p105 = scmp.eq.s32.totalorder %s18, 0
      %p106 = por %p104, %p105
      %p107 = scmp.ne.s32.totalorder %s96, %s99
      %p108 = scmp.eq.s32.totalorder %s23, 1
      %p109 = por %p107, %p108
      %p110 = scmp.ne.s32.totalorder %s99, %s100
      %p111 = scmp.eq.s32.totalorder %s23, 0
      %p112 = por %p110, %p111
      %p113 = scmp.ne.s32.totalorder %s99, %s100
      %p114 = scmp.eq.s32.totalorder %s24, 1
      %p115 = por %p113, %p114
      %p117 = scmp.ne.s32.totalorder %s100, %s116
      %p118 = scmp.eq.s32.totalorder %s24, 0
      %p119 = por %p117, %p118
      %s120 = ssub.s32 %s25, %s37
      %p121 = scmp.eq.s32.totalorder %s120, 0
      %s123 = sadd.s32 %s122, 1
      %s124 = scalar_select %p121, %s122, %s123
      %p127 = pneg %p121
      %p128 = scmp.eq.s32.totalorder %s18, 1
      %p129 = por %p127, %p128
      %p130 = scmp.ne.s32.totalorder %s122, %s125
      %p131 = scmp.eq.s32.totalorder %s18, 0
      %p132 = por %p130, %p131
      %p133 = scmp.ne.s32.totalorder %s122, %s125
      %p134 = scmp.eq.s32.totalorder %s23, 1
      %p135 = por %p133, %p134
      %p136 = scmp.ne.s32.totalorder %s125, %s126
      %p137 = scmp.eq.s32.totalorder %s23, 0
      %p138 = por %p136, %p137
      %p139 = scmp.ne.s32.totalorder %s125, %s126
      %p140 = scmp.eq.s32.totalorder %s24, 1
      %p141 = por %p139, %p140
      %p143 = scmp.ne.s32.totalorder %s126, %s142
      %p144 = scmp.eq.s32.totalorder %s24, 0
      %p145 = por %p143, %p144
      %s147 = sadd.s32 %s146, 1
      %p150 = scmp.eq.s32.totalorder %s18, 1
      %p151 = scmp.ne.s32.totalorder %s146, %s148
      %p152 = scmp.eq.s32.totalorder %s18, 0
      %p153 = por %p151, %p152
      %p154 = scmp.ne.s32.totalorder %s146, %s148
      %p155 = scmp.eq.s32.totalorder %s23, 1
      %p156 = por %p154, %p155
      %p157 = scmp.ne.s32.totalorder %s148, %s149
      %p158 = scmp.eq.s32.totalorder %s23, 0
      %p159 = por %p157, %p158
      %p160 = scmp.ne.s32.totalorder %s148, %s149
      %p161 = scmp.eq.s32.totalorder %s24, 1
      %p162 = por %p160, %p161
      %p164 = scmp.ne.s32.totalorder %s149, %s163
      %p165 = scmp.eq.s32.totalorder %s24, 0
      %p166 = por %p164, %p165
      %s168 = sadd.s32 %s167, 1
      %p171 = scmp.eq.s32.totalorder %s18, 1
      %p172 = scmp.ne.s32.totalorder %s167, %s169
      %p173 = scmp.eq.s32.totalorder %s18, 0
      %p174 = por %p172, %p173
      %p175 = scmp.ne.s32.totalorder %s167, %s169
      %p176 = scmp.eq.s32.totalorder %s23, 1
      %p177 = por %p175, %p176
      %p178 = scmp.ne.s32.totalorder %s169, %s170
      %p179 = scmp.eq.s32.totalorder %s23, 0
      %p180 = por %p178, %p179
      %p181 = scmp.ne.s32.totalorder %s169, %s170
      %p182 = scmp.eq.s32.totalorder %s24, 1
      %p183 = por %p181, %p182
      %p185 = scmp.ne.s32.totalorder %s170, %s184
      %p186 = scmp.eq.s32.totalorder %s24, 0
      %p187 = por %p185, %p186
      %s189 = sadd.s32 %s188, 1
      %p192 = scmp.eq.s32.totalorder %s18, 1
      %p193 = scmp.ne.s32.totalorder %s188, %s190
      %p194 = scmp.eq.s32.totalorder %s18, 0
      %p195 = por %p193, %p194
      %p196 = scmp.ne.s32.totalorder %s188, %s190
      %p197 = scmp.eq.s32.totalorder %s23, 1
      %p198 = por %p196, %p197
      %p199 = scmp.ne.s32.totalorder %s190, %s191
      %p200 = scmp.eq.s32.totalorder %s23, 0
      %p201 = por %p199, %p200
      %p202 = scmp.ne.s32.totalorder %s190, %s191
      %p203 = scmp.eq.s32.totalorder %s24, 1
      %p204 = por %p202, %p203
      %p206 = scmp.ne.s32.totalorder %s191, %s205
      %p207 = scmp.eq.s32.totalorder %s24, 0
      %p208 = por %p206, %p207
      %s210 = sadd.s32 %s209, 1
      %p213 = scmp.eq.s32.totalorder %s18, 1
      %p214 = scmp.ne.s32.totalorder %s209, %s211
      %p215 = scmp.eq.s32.totalorder %s18, 0
      %p216 = por %p214, %p215
      %p217 = scmp.ne.s32.totalorder %s209, %s211
      %p218 = scmp.eq.s32.totalorder %s23, 1
      %p219 = por %p217, %p218
      %p220 = scmp.ne.s32.totalorder %s211, %s212
      %p221 = scmp.eq.s32.totalorder %s23, 0
      %p222 = por %p220, %p221
      %p223 = scmp.ne.s32.totalorder %s211, %s212
      %p224 = scmp.eq.s32.totalorder %s24, 1
      %p225 = por %p223, %p224
      %p227 = scmp.ne.s32.totalorder %s212, %s226
      %p228 = scmp.eq.s32.totalorder %s24, 0
      %p229 = por %p227, %p228
      %s231 = sadd.s32 %s230, 1
      %p234 = scmp.eq.s32.totalorder %s18, 1
      %p235 = scmp.ne.s32.totalorder %s230, %s232
      %p236 = scmp.eq.s32.totalorder %s18, 0
      %p237 = por %p235, %p236
      %p238 = scmp.ne.s32.totalorder %s230, %s232
      %p239 = scmp.eq.s32.totalorder %s23, 1
      %p240 = por %p238, %p239
      %p241 = scmp.ne.s32.totalorder %s232, %s233
      %p242 = scmp.eq.s32.totalorder %s23, 0
      %p243 = por %p241, %p242
      %p244 = scmp.ne.s32.totalorder %s232, %s233
      %p245 = scmp.eq.s32.totalorder %s24, 1
      %p246 = por %p244, %p245
      %p248 = scmp.ne.s32.totalorder %s233, %s247
      %p249 = scmp.eq.s32.totalorder %s24, 0
      %p250 = por %p248, %p249
      %s251 = ssub.s32 %s25, %s37
      %s252 = ssub.s32 %s26, %s33
      %s253 = sor.u32 %s251, %s252
      %p254 = scmp.eq.s32.totalorder %s253, 0
      %s256 = sadd.s32 %s255, 1
      %s257 = scalar_select %p254, %s255, %s256
      %p260 = pneg %p254
      %p261 = scmp.eq.s32.totalorder %s18, 1
      %p262 = por %p260, %p261
      %p263 = scmp.ne.s32.totalorder %s255, %s258
      %p264 = scmp.eq.s32.totalorder %s18, 0
      %p265 = por %p263, %p264
      %p266 = scmp.ne.s32.totalorder %s255, %s258
      %p267 = scmp.eq.s32.totalorder %s23, 1
      %p268 = por %p266, %p267
      %p269 = scmp.ne.s32.totalorder %s258, %s259
      %p270 = scmp.eq.s32.totalorder %s23, 0
      %p271 = por %p269, %p270
      %p272 = scmp.ne.s32.totalorder %s258, %s259
      %p273 = scmp.eq.s32.totalorder %s24, 1
      %p274 = por %p272, %p273
      %p276 = scmp.ne.s32.totalorder %s259, %s275
      %p277 = scmp.eq.s32.totalorder %s24, 0
      %p278 = por %p276, %p277
      %p279 = scmp.le.s32.totalorder 1, %s18
      %p280 = scmp.lt.s32.totalorder %s18, 3
      %p281 = pnand %p279, %p280
      %p282 = pneg %p281
      // Predicated region
      $region9: #{tpu_custom_call.1} parent=5 // pred_check
        _
      $region10: #{tpu_custom_call.1} parent=5 // pred_check_branch
        %284 = sbr.rel (%p281) target = $region12
      $region11: #{tpu_custom_call.1} parent=5 // pred_region
        %s285 = ssub.s32 %s18, 1
        // Predicated region
        $region13: #{tpu_custom_call.1} parent=11 // pred_check
          %p286 = pneg %p159
        $region14: #{tpu_custom_call.1} parent=11 // pred_check_branch
          %288 = sbr.rel (%p286) target = $region16
        $region15: #{tpu_custom_call.1} parent=11 // pred_region
          _
        $region16: #{tpu_custom_call.1} parent=11 // pred_fallthru
          _
        // Predicated region
        $region17: #{tpu_custom_call.1} parent=11 // pred_check
          %p289 = pneg %p180
        $region18: #{tpu_custom_call.1} parent=11 // pred_check_branch
          %291 = sbr.rel (%p289) target = $region20
        $region19: #{tpu_custom_call.1} parent=11 // pred_region
          _
        $region20: #{tpu_custom_call.1} parent=11 // pred_fallthru
          _
        // Predicated region
        $region21: #{tpu_custom_call.1} parent=11 // pred_check
          %p292 = pneg %p201
        $region22: #{tpu_custom_call.1} parent=11 // pred_check_branch
          %294 = sbr.rel (%p292) target = $region24
        $region23: #{tpu_custom_call.1} parent=11 // pred_region
          _
        $region24: #{tpu_custom_call.1} parent=11 // pred_fallthru
          _
        // Predicated region
        $region25: #{tpu_custom_call.1} parent=11 // pred_check
          %p295 = pneg %p222
        $region26: #{tpu_custom_call.1} parent=11 // pred_check_branch
          %297 = sbr.rel (%p295) target = $region28
        $region27: #{tpu_custom_call.1} parent=11 // pred_region
          _
        $region28: #{tpu_custom_call.1} parent=11 // pred_fallthru
          _
        // Predicated region
        $region29: #{tpu_custom_call.1} parent=11 // pred_check
          %p298 = pneg %p243
        $region30: #{tpu_custom_call.1} parent=11 // pred_check_branch
          %300 = sbr.rel (%p298) target = $region32
        $region31: #{tpu_custom_call.1} parent=11 // pred_region
          _
        $region32: #{tpu_custom_call.1} parent=11 // pred_fallthru
          _
      $region12: #{tpu_custom_call.1} parent=5 // pred_fallthru
        _
      %p301 = scmp.lt.s32.totalorder %s18, 2
      // Predicated region
      $region33: #{tpu_custom_call.1} parent=5 // pred_check
        %p302 = pneg %p301
      $region34: #{tpu_custom_call.1} parent=5 // pred_check_branch
        %304 = sbr.rel (%p302) target = $region36
      $region35: #{tpu_custom_call.1} parent=5 // pred_region
        // Predicated region
        $region37: #{tpu_custom_call.1} parent=35 // pred_check
          %p305 = pneg %p52
        $region38: #{tpu_custom_call.1} parent=35 // pred_check_branch
          %307 = sbr.rel (%p305) target = $region40
        $region39: #{tpu_custom_call.1} parent=35 // pred_region
          %s308 = smul.u32 4, %s26
          %p309 = scmp.lt.s32.totalorder %s25, 1
          %s310 = scalar_select %p309, %s25, 1
          %p311 = scmp.lt.s32.totalorder %s308, 3
          %s312 = scalar_select %p311, %s308, 3
          %s313 = smul.addr %s310, 4
          %s314 = sadd.s32 %s312, %s313
          %s315 = smul.addr %s314, 8
          %s316 = scalar_lea.vmem %s0, %s315
          %s317 = smul.u32 4, %s26
        $region40: #{tpu_custom_call.1} parent=35 // pred_fallthru
          _
        // Predicated region
        $region41: #{tpu_custom_call.1} parent=35 // pred_check
          %p318 = pneg %p78
        $region42: #{tpu_custom_call.1} parent=35 // pred_check_branch
          %320 = sbr.rel (%p318) target = $region44
        $region43: #{tpu_custom_call.1} parent=35 // pred_region
          %p321 = scmp.lt.s32.totalorder %s25, 1
          %s322 = scalar_select %p321, %s25, 1
          %s323 = smul.addr %s322, 8
          %s324 = scalar_lea.vmem %s1, %s323
        $region44: #{tpu_custom_call.1} parent=35 // pred_fallthru
          _
        // Predicated region
        $region45: #{tpu_custom_call.1} parent=35 // pred_check
          %p325 = pneg %p106
        $region46: #{tpu_custom_call.1} parent=35 // pred_check_branch
          %327 = sbr.rel (%p325) target = $region48
        $region47: #{tpu_custom_call.1} parent=35 // pred_region
          %s328 = smul.u32 4, %s26
          %p329 = scmp.lt.s32.totalorder %s25, 1
          %s330 = scalar_select %p329, %s25, 1
          %p331 = scmp.lt.s32.totalorder %s328, 3
          %s332 = scalar_select %p331, %s328, 3
          %s333 = smul.addr %s330, 4
          %s334 = sadd.s32 %s332, %s333
          %s335 = smul.addr %s334, 4
          %s336 = scalar_lea.vmem %s2, %s335
          %s337 = smul.u32 4, %s26
        $region48: #{tpu_custom_call.1} parent=35 // pred_fallthru
          _
        // Predicated region
        $region49: #{tpu_custom_call.1} parent=35 // pred_check
          %p338 = pneg %p132
        $region50: #{tpu_custom_call.1} parent=35 // pred_check_branch
          %340 = sbr.rel (%p338) target = $region52
        $region51: #{tpu_custom_call.1} parent=35 // pred_region
          %p341 = scmp.lt.s32.totalorder %s25, 1
          %s342 = scalar_select %p341, %s25, 1
          %s343 = smul.addr %s342, 2
          %s344 = smul.addr %s343, 8
          %s345 = scalar_lea.vmem %s3, %s344
        $region52: #{tpu_custom_call.1} parent=35 // pred_fallthru
          _
      $region36: #{tpu_custom_call.1} parent=5 // pred_fallthru
        _
      %p346 = scmp.le.s32.totalorder 1, %s18
      %p347 = scmp.lt.s32.totalorder %s18, 3
      %p348 = pnand %p346, %p347
      %p349 = pneg %p348
      // Predicated region
      $region53: #{tpu_custom_call.1} parent=5 // pred_check
        _
      $region54: #{tpu_custom_call.1} parent=5 // pred_check_branch
        %351 = sbr.rel (%p348) target = $region56
      $region55: #{tpu_custom_call.1} parent=5 // pred_region
        %s352 = ssub.s32 %s18, 1
        %s353 = smul.u32 4, %s28
        %p354 = scmp.lt.s32.totalorder %s27, 1
        %s355 = scalar_select %p354, %s27, 1
        %p356 = scmp.lt.s32.totalorder %s353, 3
        %s357 = scalar_select %p356, %s353, 3
        %s358 = smul.addr %s355, 4
        %s359 = sadd.s32 %s357, %s358
        %s360 = smul.addr %s359, 8
        %s361 = scalar_lea.vmem %s0, %s360
        %p362 = pneg %p58
        %p363 = pneg %p55
        %p364 = scmp.lt.s32.totalorder %s27, 1
        %s365 = scalar_select %p364, %s27, 1
        %s366 = smul.addr %s365, 8
        %s367 = scalar_lea.vmem %s1, %s366
        %p368 = pneg %p84
        %p369 = pneg %p81
        %s370 = smul.u32 4, %s28
        %p371 = scmp.lt.s32.totalorder %s27, 1
        %s372 = scalar_select %p371, %s27, 1
        %p373 = scmp.lt.s32.totalorder %s370, 3
        %s374 = scalar_select %p373, %s370, 3
        %s375 = smul.addr %s372, 4
        %s376 = sadd.s32 %s374, %s375
        %s377 = smul.addr %s376, 4
        %s378 = scalar_lea.vmem %s2, %s377
        %p379 = pneg %p112
        %p380 = pneg %p109
        %p381 = scmp.lt.s32.totalorder %s27, 1
        %s382 = scalar_select %p381, %s27, 1
        %s383 = smul.addr %s382, 2
        %s384 = smul.addr %s383, 8
        %s385 = scalar_lea.vmem %s3, %s384
        %p386 = pneg %p138
        %p387 = pneg %p135
        %p388 = pneg %p159
        %p389 = pneg %p156
        %p390 = pneg %p180
        %p391 = pneg %p177
        %p392 = pneg %p201
        %p393 = pneg %p198
        %p394 = pneg %p222
        %p395 = pneg %p219
        %p396 = pneg %p243
        %p397 = pneg %p240
        %p398 = pneg %p271
        %p399 = pneg %p268
        %s400 = sand.u32 %s258, 1
        %s401 = scalar_lea.sflag [#allocation3], %s400
        %s402 = sand.u32 %s258, 1
        %s403 = smul.addr %s402, 64
        %s404 = scalar_lea.vmem [#allocation2], %s403
        %s405 = smul.u32 4, %s28
        %p406 = scmp.lt.s32.totalorder %s27, 1
        %s407 = scalar_select %p406, %s27, 1
        %p408 = scmp.lt.s32.totalorder %s405, 3
        %s409 = scalar_select %p408, %s405, 3
        %s410 = smul.addr %s407, 4
        %s411 = sadd.s32 %s409, %s410
        %s412 = smul.addr %s411, 8
        %s413 = scalar_lea.vmem %s0, %s412
        %s414 = smul.u32 4, %s28
        %p415 = scmp.lt.s32.totalorder %s27, 1
        %s416 = scalar_select %p415, %s27, 1
        %s417 = smul.addr %s416, 8
        %s418 = scalar_lea.vmem %s1, %s417
        %s419 = smul.u32 4, %s28
        %p420 = scmp.lt.s32.totalorder %s27, 1
        %s421 = scalar_select %p420, %s27, 1
        %p422 = scmp.lt.s32.totalorder %s419, 3
        %s423 = scalar_select %p422, %s419, 3
        %s424 = smul.addr %s421, 4
        %s425 = sadd.s32 %s423, %s424
        %s426 = smul.addr %s425, 4
        %s427 = scalar_lea.vmem %s2, %s426
        %s428 = smul.u32 4, %s28
        %p429 = scmp.lt.s32.totalorder %s27, 1
        %s430 = scalar_select %p429, %s27, 1
        %s431 = smul.addr %s430, 2
        %s432 = smul.addr %s431, 8
        %s433 = scalar_lea.vmem %s3, %s432
        %s434 = smul.u32 4, %s28
        %v436 = vld [vmem:[%s413] sm:$0x1f]
        %v437 = vld [vmem:[%s413 + $0x8] sm:$0x1f]
        %v438 = vld [vmem:[%s413 + $0x10] sm:$0x1f]
        %v439 = vld [vmem:[%s413 + $0x18] sm:$0x1f]
        %v440 = vld [vmem:[%s418] sm:$0x1f]
        %v441 = vld [vmem:[%s427] sm:$0x77]
        %v442 = vld [vmem:[%s427 + $0x8] sm:$0x77]
        %v443 = vld [vmem:[%s433] sm:$0xff]
        %v444 = vld [vmem:[%s433 + $0x8] sm:$0x3]
        %445 = vxpose.xlu0.b32.start [1/16] %v440, 128
        %446 = vxpose.xlu0.b32.cont [2/16] 0.0, 128
        %447 = vxpose.xlu0.b32.cont [3/16] 0.0, 128
        %448 = vxpose.xlu0.b32.cont [4/16] 0.0, 128
        %449 = vxpose.xlu0.b32.cont [5/16] 0.0, 128
        %450 = vxpose.xlu0.b32.cont [6/16] 0.0, 128
        %451 = vxpose.xlu0.b32.cont [7/16] 0.0, 128
        %452 = vxpose.xlu0.b32.cont [8/16] 0.0, 128
        %453 = vxpose.xlu0.b32.cont [9/16] 0.0, 128
        %454 = vxpose.xlu0.b32.cont [10/16] 0.0, 128
        %455 = vxpose.xlu0.b32.cont [11/16] 0.0, 128
        %456 = vxpose.xlu0.b32.cont [12/16] 0.0, 128
        %457 = vxpose.xlu0.b32.cont [13/16] 0.0, 128
        %458 = vxpose.xlu0.b32.cont [14/16] 0.0, 128
        %459 = vxpose.xlu0.b32.cont [15/16] 0.0, 128
        %460 = vxpose.xlu0.b32.end [16/16] 0.0, 128
        %v461 = vpop.trf.xlu0
        %v462 = vpop.trf.xlu0
        %v463 = vpop.trf.xlu0
        %v464 = vpop.trf.xlu0
        %v465 = vpop.trf.xlu0
        %v466 = vpop.trf.xlu0
        %v467 = vpop.trf.xlu0
        %v468 = vpop.trf.xlu0
        %v469 = vpop.trf.xlu0
        %v470 = vpop.trf.xlu0
        %v471 = vpop.trf.xlu0
        %v472 = vpop.trf.xlu0
        %v473 = vpop.trf.xlu0
        %v474 = vpop.trf.xlu0
        %v475 = vpop.trf.xlu0
        %v476 = vpop.trf.xlu0
        %vm477 = vcmask 39936
        %v479 = vsel %vm477, %v461, 0
        %v482 = vsel %vm477, %v462, 0
        %v485 = vsel %vm477, %v463, 0
        %v488 = vsel %vm477, %v464, 0
        %v491 = vsel %vm477, %v465, 0
        %v494 = vsel %vm477, %v466, 0
        %v497 = vsel %vm477, %v467, 0
        %v500 = vsel %vm477, %v468, 0
        %vm502 = vcmask 1044480
        %v504 = vsel %vm502, %v436, 0
        %v507 = vsel %vm502, %v437, 0
        %v510 = vsel %vm502, %v438, 0
        %v513 = vsel %vm502, %v439, 0
        %v515 = vand.u32 %v507, 4294901760
        %516 = vmatprep.subr.mxu0 %v515
        %v517 = vand.u32 %v504, 4294901760
        %518 = vmatpush1.msra.mxu0 %v517
        %519 = vmatprep.subr.mxu0 0.0
        %520 = vmatpush1.msra.mxu0 0.0
        %521 = vmatprep.subr.mxu0 0.0
        %522 = vmatpush1.msra.mxu0 0.0
        %523 = vmatprep.subr.mxu0 0.0
        %524 = vmatpush1.msra.mxu0 0.0
        %525 = vmatprep.subr.mxu0 0.0
        %526 = vmatpush1.msra.mxu0 0.0
        %527 = vmatprep.subr.mxu0 0.0
        %528 = vmatpush1.msra.mxu0 0.0
        %529 = vmatprep.subr.mxu0 0.0
        %530 = vmatpush1.msra.mxu0 0.0
        %531 = vmatprep.subr.mxu0 0.0
        %532 = vmatpush1.msra.mxu0 0.0
        %533 = vmatprep.subr.mxu0 0.0
        %534 = vmatpush1.msra.mxu0 0.0
        %535 = vmatprep.subr.mxu0 0.0
        %536 = vmatpush1.msra.mxu0 0.0
        %537 = vmatprep.subr.mxu0 0.0
        %538 = vmatpush1.msra.mxu0 0.0
        %539 = vmatprep.subr.mxu0 0.0
        %540 = vmatpush1.msra.mxu0 0.0
        %541 = vmatprep.subr.mxu0 0.0
        %542 = vmatpush1.msra.mxu0 0.0
        %543 = vmatprep.subr.mxu0 0.0
        %544 = vmatpush1.msra.mxu0 0.0
        %545 = vmatprep.subr.mxu0 0.0
        %546 = vmatpush1.msra.mxu0 0.0
        %547 = vmatprep.subr.mxu0 0.0
        %548 = vmatpush1.msra.mxu0 0.0
        %549 = vmatprep.subr.mxu0 0.0
        %550 = vmatpush1.msra.mxu0 0.0
        %551 = vmatprep.subr.mxu0 0.0
        %552 = vmatpush1.msra.mxu0 0.0
        %553 = vmatprep.subr.mxu0 0.0
        %554 = vmatpush1.msra.mxu0 0.0
        %555 = vmatprep.subr.mxu0 0.0
        %556 = vmatpush1.msra.mxu0 0.0
        %557 = vmatprep.subr.mxu0 0.0
        %558 = vmatpush1.msra.mxu0 0.0
        %559 = vmatprep.subr.mxu0 0.0
        %560 = vmatpush1.msra.mxu0 0.0
        %561 = vmatprep.subr.mxu0 0.0
        %562 = vmatpush1.msra.mxu0 0.0
        %563 = vmatprep.subr.mxu0 0.0
        %564 = vmatpush1.msra.mxu0 0.0
        %565 = vmatprep.subr.mxu0 0.0
        %566 = vmatpush1.msra.mxu0 0.0
        %567 = vmatprep.subr.mxu0 0.0
        %568 = vmatpush1.msra.mxu0 0.0
        %569 = vmatprep.subr.mxu0 0.0
        %570 = vmatpush1.msra.mxu0 0.0
        %571 = vmatprep.subr.mxu0 0.0
        %572 = vmatpush1.msra.mxu0 0.0
        %573 = vmatprep.subr.mxu0 0.0
        %574 = vmatpush1.msra.mxu0 0.0
        %575 = vmatprep.subr.mxu0 0.0
        %576 = vmatpush1.msra.mxu0 0.0
        %577 = vmatprep.subr.mxu0 0.0
        %578 = vmatpush1.msra.mxu0 0.0
        %579 = vmatprep.subr.mxu0 0.0
        %580 = vmatpush1.msra.mxu0 0.0
        %581 = vmatprep.mubr.f32.mxu0 0.0
        %v582 = vand.u32 %v479, 4294901760
        %v583 = vsub.f32 %v479, %v582
        %v584 = vand.u32 %v583, 4294901760
        %v585 = vsub.f32 %v583, %v584
        %v586 = vand.u32 %v585, 4294901760
        %587 = vmatmul.mubr.f32.gmra.mrb[0].mxu0 %v586
        %v588 = vpop.f32.mrb[0].mxu0
        %v589 = vadd.f32 0.0, %v588
        %v590 = vpop.f32.mrb[0].mxu0
        %v591 = vadd.f32 0.0, %v590
        %592 = vmatprep.mubr.f32.mxu0 0.0
        %v593 = vand.u32 %v482, 4294901760
        %v594 = vsub.f32 %v482, %v593
        %v595 = vand.u32 %v594, 4294901760
        %v596 = vsub.f32 %v594, %v595
        %v597 = vand.u32 %v596, 4294901760
        %598 = vmatmul.mubr.f32.gmra.mrb[0].mxu0 %v597
        %v599 = vpop.f32.mrb[0].mxu0
        %v600 = vadd.f32 0.0, %v599
        %v601 = vpop.f32.mrb[0].mxu0
        %v602 = vadd.f32 0.0, %v601
        %603 = vmatprep.mubr.f32.mxu0 0.0
        %v604 = vand.u32 %v485, 4294901760
        %v605 = vsub.f32 %v485, %v604
        %v606 = vand.u32 %v605, 4294901760
        %v607 = vsub.f32 %v605, %v606
        %v608 = vand.u32 %v607, 4294901760
        %609 = vmatmul.mubr.f32.gmra.mrb[0].mxu0 %v608
        %v610 = vpop.f32.mrb[0].mxu0
        %v611 = vadd.f32 0.0, %v610
        %v612 = vpop.f32.mrb[0].mxu0
        %v613 = vadd.f32 0.0, %v612
        %614 = vmatprep.mubr.f32.mxu0 0.0
        %v615 = vand.u32 %v488, 4294901760
        %v616 = vsub.f32 %v488, %v615
        %v617 = vand.u32 %v616, 4294901760
        %v618 = vsub.f32 %v616, %v617
        %v619 = vand.u32 %v618, 4294901760
        %620 = vmatmul.mubr.f32.gmra.mrb[0].mxu0 %v619
        %v621 = vpop.f32.mrb[0].mxu0
        %v622 = vadd.f32 0.0, %v621
        %v623 = vpop.f32.mrb[0].mxu0
        %v624 = vadd.f32 0.0, %v623
        %625 = vmatprep.mubr.f32.mxu0 0.0
        %v626 = vand.u32 %v491, 4294901760
        %v627 = vsub.f32 %v491, %v626
        %v628 = vand.u32 %v627, 4294901760
        %v629 = vsub.f32 %v627, %v628
        %v630 = vand.u32 %v629, 4294901760
        %631 = vmatmul.mubr.f32.gmra.mrb[0].mxu0 %v630
        %v632 = vpop.f32.mrb[0].mxu0
        %v633 = vadd.f32 0.0, %v632
        %v634 = vpop.f32.mrb[0].mxu0
        %v635 = vadd.f32 0.0, %v634
        %636 = vmatprep.mubr.f32.mxu0 0.0
        %v637 = vand.u32 %v494, 4294901760
        %v638 = vsub.f32 %v494, %v637
        %v639 = vand.u32 %v638, 4294901760
        %v640 = vsub.f32 %v638, %v639
        %v641 = vand.u32 %v640, 4294901760
        %642 = vmatmul.mubr.f32.gmra.mrb[0].mxu0 %v641
        %v643 = vpop.f32.mrb[0].mxu0
        %v644 = vadd.f32 0.0, %v643
        %v645 = vpop.f32.mrb[0].mxu0
        %v646 = vadd.f32 0.0, %v645
        %647 = vmatprep.mubr.f32.mxu0 0.0
        %v648 = vand.u32 %v497, 4294901760
        %v649 = vsub.f32 %v497, %v648
        %v650 = vand.u32 %v649, 4294901760
        %v651 = vsub.f32 %v649, %v650
        %v652 = vand.u32 %v651, 4294901760
        %653 = vmatmul.mubr.f32.gmra.mrb[0].mxu0 %v652
        %v654 = vpop.f32.mrb[0].mxu0
        %v655 = vadd.f32 0.0, %v654
        %v656 = vpop.f32.mrb[0].mxu0
        %v657 = vadd.f32 0.0, %v656
        %658 = vmatprep.mubr.f32.mxu0 0.0
        %v659 = vand.u32 %v500, 4294901760
        %v660 = vsub.f32 %v500, %v659
        %v661 = vand.u32 %v660, 4294901760
        %v662 = vsub.f32 %v660, %v661
        %v663 = vand.u32 %v662, 4294901760
        %664 = vmatmul.mubr.f32.gmra.mrb[0].mxu0 %v663
        %v665 = vpop.f32.mrb[0].mxu0
        %v666 = vadd.f32 0.0, %v665
        %v667 = vpop.f32.mrb[0].mxu0
        %v668 = vadd.f32 0.0, %v667
        %669 = vdwg.mxu0
        %v670 = vand.u32 %v507, 4294901760
        %v671 = vsub.f32 %v507, %v670
        %v672 = vand.u32 %v671, 4294901760
        %v673 = vsub.f32 %v671, %v672
        %v674 = vand.u32 %v673, 4294901760
        %675 = vmatprep.subr.mxu0 %v674
        %v676 = vand.u32 %v504, 4294901760
        %v677 = vsub.f32 %v504, %v676
        %v678 = vand.u32 %v677, 4294901760
        %v679 = vsub.f32 %v677, %v678
        %v680 = vand.u32 %v679, 4294901760
        %681 = vmatpush1.msra.mxu0 %v680
        %682 = vmatprep.subr.mxu0 0.0
        %683 = vmatpush1.msra.mxu0 0.0
        %684 = vmatprep.subr.mxu0 0.0
        %685 = vmatpush1.msra.mxu0 0.0
        %686 = vmatprep.subr.mxu0 0.0
        %687 = vmatpush1.msra.mxu0 0.0
        %688 = vmatprep.subr.mxu0 0.0
        %689 = vmatpush1.msra.mxu0 0.0
        %690 = vmatprep.subr.mxu0 0.0
        %691 = vmatpush1.msra.mxu0 0.0
        %692 = vmatprep.subr.mxu0 0.0
        %693 = vmatpush1.msra.mxu0 0.0
        %694 = vmatprep.subr.mxu0 0.0
        %695 = vmatpush1.msra.mxu0 0.0
        %696 = vmatprep.subr.mxu0 0.0
        %697 = vmatpush1.msra.mxu0 0.0
        %698 = vmatprep.subr.mxu0 0.0
        %699 = vmatpush1.msra.mxu0 0.0
        %700 = vmatprep.subr.mxu0 0.0
        %701 = vmatpush1.msra.mxu0 0.0
        %702 = vmatprep.subr.mxu0 0.0
        %703 = vmatpush1.msra.mxu0 0.0
        %704 = vmatprep.subr.mxu0 0.0
        %705 = vmatpush1.msra.mxu0 0.0
        %706 = vmatprep.subr.mxu0 0.0
        %707 = vmatpush1.msra.mxu0 0.0
        %708 = vmatprep.subr.mxu0 0.0
        %709 = vmatpush1.msra.mxu0 0.0
        %710 = vmatprep.subr.mxu0 0.0
        %711 = vmatpush1.msra.mxu0 0.0
        %712 = vmatprep.subr.mxu0 0.0
        %713 = vmatpush1.msra.mxu0 0.0
        %714 = vmatprep.subr.mxu0 0.0
        %715 = vmatpush1.msra.mxu0 0.0
        %716 = vmatprep.subr.mxu0 0.0
        %717 = vmatpush1.msra.mxu0 0.0
        %718 = vmatprep.subr.mxu0 0.0
        %719 = vmatpush1.msra.mxu0 0.0
        %720 = vmatprep.subr.mxu0 0.0
        %721 = vmatpush1.msra.mxu0 0.0
        %722 = vmatprep.subr.mxu0 0.0
        %723 = vmatpush1.msra.mxu0 0.0
        %724 = vmatprep.subr.mxu0 0.0
        %725 = vmatpush1.msra.mxu0 0.0
        %726 = vmatprep.subr.mxu0 0.0
        %727 = vmatpush1.msra.mxu0 0.0
        %728 = vmatprep.subr.mxu0 0.0
        %729 = vmatpush1.msra.mxu0 0.0
        %730 = vmatprep.subr.mxu0 0.0
        %731 = vmatpush1.msra.mxu0 0.0
        %732 = vmatprep.subr.mxu0 0.0
        %733 = vmatpush1.msra.mxu0 0.0
        %734 = vmatprep.subr.mxu0 0.0
        %735 = vmatpush1.msra.mxu0 0.0
        %736 = vmatprep.subr.mxu0 0.0
        %737 = vmatpush1.msra.mxu0 0.0
        %738 = vmatprep.subr.mxu0 0.0
        %739 = vmatpush1.msra.mxu0 0.0
        %740 = vmatprep.subr.mxu0 0.0
        %741 = vmatpush1.msra.mxu0 0.0
        %742 = vmatprep.subr.mxu0 0.0
        %743 = vmatpush1.msra.mxu0 0.0
        %744 = vmatprep.mubr.f32.mxu0 0.0
        %v745 = vand.u32 %v479, 4294901760
        %746 = vmatmul.mubr.f32.gmra.mrb[0].mxu0 %v745
        %v747 = vpop.f32.mrb[0].mxu0
        %v748 = vadd.f32 %v589, %v747
        %v749 = vpop.f32.mrb[0].mxu0
        %v750 = vadd.f32 %v591, %v749
        %751 = vmatprep.mubr.f32.mxu0 0.0
        %v752 = vand.u32 %v482, 4294901760
        %753 = vmatmul.mubr.f32.gmra.mrb[0].mxu0 %v752
        %v754 = vpop.f32.mrb[0].mxu0
        %v755 = vadd.f32 %v600, %v754
        %v756 = vpop.f32.mrb[0].mxu0
        %v757 = vadd.f32 %v602, %v756
        %758 = vmatprep.mubr.f32.mxu0 0.0
        %v759 = vand.u32 %v485, 4294901760
        %760 = vmatmul.mubr.f32.gmra.mrb[0].mxu0 %v759
        %v761 = vpop.f32.mrb[0].mxu0
        %v762 = vadd.f32 %v611, %v761
        %v763 = vpop.f32.mrb[0].mxu0
        %v764 = vadd.f32 %v613, %v763
        %765 = vmatprep.mubr.f32.mxu0 0.0
        %v766 = vand.u32 %v488, 4294901760
        %767 = vmatmul.mubr.f32.gmra.mrb[0].mxu0 %v766
        %v768 = vpop.f32.mrb[0].mxu0
        %v769 = vadd.f32 %v622, %v768
        %v770 = vpop.f32.mrb[0].mxu0
        %v771 = vadd.f32 %v624, %v770
        %772 = vmatprep.mubr.f32.mxu0 0.0
        %v773 = vand.u32 %v491, 4294901760
        %774 = vmatmul.mubr.f32.gmra.mrb[0].mxu0 %v773
        %v775 = vpop.f32.mrb[0].mxu0
        %v776 = vadd.f32 %v633, %v775
        %v777 = vpop.f32.mrb[0].mxu0
        %v778 = vadd.f32 %v635, %v777
        %779 = vmatprep.mubr.f32.mxu0 0.0
        %v780 = vand.u32 %v494, 4294901760
        %781 = vmatmul.mubr.f32.gmra.mrb[0].mxu0 %v780
        %v782 = vpop.f32.mrb[0].mxu0
        %v783 = vadd.f32 %v644, %v782
        %v784 = vpop.f32.mrb[0].mxu0
        %v785 = vadd.f32 %v646, %v784
        %786 = vmatprep.mubr.f32.mxu0 0.0
        %v787 = vand.u32 %v497, 4294901760
        %788 = vmatmul.mubr.f32.gmra.mrb[0].mxu0 %v787
        %v789 = vpop.f32.mrb[0].mxu0
        %v790 = vadd.f32 %v655, %v789
        %v791 = vpop.f32.mrb[0].mxu0
        %v792 = vadd.f32 %v657, %v791
        %793 = vmatprep.mubr.f32.mxu0 0.0
        %v794 = vand.u32 %v500, 4294901760
        %795 = vmatmul.mubr.f32.gmra.mrb[0].mxu0 %v794
        %v796 = vpop.f32.mrb[0].mxu0
        %v797 = vadd.f32 %v666, %v796
        %v798 = vpop.f32.mrb[0].mxu0
        %v799 = vadd.f32 %v668, %v798
        %800 = vdwg.mxu0
        %v801 = vand.u32 %v507, 4294901760
        %v802 = vsub.f32 %v507, %v801
        %803 = vmatprep.subr.mxu0 %v802
        %v804 = vand.u32 %v504, 4294901760
        %v805 = vsub.f32 %v504, %v804
        %806 = vmatpush1.msra.mxu0 %v805
        %807 = vmatprep.subr.mxu0 0.0
        %808 = vmatpush1.msra.mxu0 0.0
        %809 = vmatprep.subr.mxu0 0.0
        %810 = vmatpush1.msra.mxu0 0.0
        %811 = vmatprep.subr.mxu0 0.0
        %812 = vmatpush1.msra.mxu0 0.0
        %813 = vmatprep.subr.mxu0 0.0
        %814 = vmatpush1.msra.mxu0 0.0
        %815 = vmatprep.subr.mxu0 0.0
        %816 = vmatpush1.msra.mxu0 0.0
        %817 = vmatprep.subr.mxu0 0.0
        %818 = vmatpush1.msra.mxu0 0.0
        %819 = vmatprep.subr.mxu0 0.0
        %820 = vmatpush1.msra.mxu0 0.0
        %821 = vmatprep.subr.mxu0 0.0
        %822 = vmatpush1.msra.mxu0 0.0
        %823 = vmatprep.subr.mxu0 0.0
        %824 = vmatpush1.msra.mxu0 0.0
        %825 = vmatprep.subr.mxu0 0.0
        %826 = vmatpush1.msra.mxu0 0.0
        %827 = vmatprep.subr.mxu0 0.0
        %828 = vmatpush1.msra.mxu0 0.0
        %829 = vmatprep.subr.mxu0 0.0
        %830 = vmatpush1.msra.mxu0 0.0
        %831 = vmatprep.subr.mxu0 0.0
        %832 = vmatpush1.msra.mxu0 0.0
        %833 = vmatprep.subr.mxu0 0.0
        %834 = vmatpush1.msra.mxu0 0.0
        %835 = vmatprep.subr.mxu0 0.0
        %836 = vmatpush1.msra.mxu0 0.0
        %837 = vmatprep.subr.mxu0 0.0
        %838 = vmatpush1.msra.mxu0 0.0
        %839 = vmatprep.subr.mxu0 0.0
        %840 = vmatpush1.msra.mxu0 0.0
        %841 = vmatprep.subr.mxu0 0.0
        %842 = vmatpush1.msra.mxu0 0.0
        %843 = vmatprep.subr.mxu0 0.0
        %844 = vmatpush1.msra.mxu0 0.0
        %845 = vmatprep.subr.mxu0 0.0
        %846 = vmatpush1.msra.mxu0 0.0
        %847 = vmatprep.subr.mxu0 0.0
        %848 = vmatpush1.msra.mxu0 0.0
        %849 = vmatprep.subr.mxu0 0.0
        %850 = vmatpush1.msra.mxu0 0.0
        %851 = vmatprep.subr.mxu0 0.0
        %852 = vmatpush1.msra.mxu0 0.0
        %853 = vmatprep.subr.mxu0 0.0
        %854 = vmatpush1.msra.mxu0 0.0
        %855 = vmatprep.subr.mxu0 0.0
        %856 = vmatpush1.msra.mxu0 0.0
        %857 = vmatprep.subr.mxu0 0.0
        %858 = vmatpush1.msra.mxu0 0.0
        %859 = vmatprep.subr.mxu0 0.0
        %860 = vmatpush1.msra.mxu0 0.0
        %861 = vmatprep.subr.mxu0 0.0
        %862 = vmatpush1.msra.mxu0 0.0
        %863 = vmatprep.subr.mxu0 0.0
        %864 = vmatpush1.msra.mxu0 0.0
        %865 = vmatprep.subr.mxu0 0.0
        %866 = vmatpush1.msra.mxu0 0.0
        %867 = vmatprep.subr.mxu0 0.0
        %868 = vmatpush1.msra.mxu0 0.0
        %869 = vmatprep.mubr.f32.mxu0 0.0
        %v870 = vand.u32 %v479, 4294901760
        %v871 = vsub.f32 %v479, %v870
        %872 = vmatmul.mubr.f32.gmra.mrb[0].mxu0 %v871
        %v873 = vpop.f32.mrb[0].mxu0
        %v874 = vadd.f32 %v748, %v873
        %v875 = vpop.f32.mrb[0].mxu0
        %v876 = vadd.f32 %v750, %v875
        %877 = vmatprep.mubr.f32.mxu0 0.0
        %v878 = vand.u32 %v482, 4294901760
        %v879 = vsub.f32 %v482, %v878
        %880 = vmatmul.mubr.f32.gmra.mrb[0].mxu0 %v879
        %v881 = vpop.f32.mrb[0].mxu0
        %v882 = vadd.f32 %v755, %v881
        %v883 = vpop.f32.mrb[0].mxu0
        %v884 = vadd.f32 %v757, %v883
        %885 = vmatprep.mubr.f32.mxu0 0.0
        %v886 = vand.u32 %v485, 4294901760
        %v887 = vsub.f32 %v485, %v886
        %888 = vmatmul.mubr.f32.gmra.mrb[0].mxu0 %v887
        %v889 = vpop.f32.mrb[0].mxu0
        %v890 = vadd.f32 %v762, %v889
        %v891 = vpop.f32.mrb[0].mxu0
        %v892 = vadd.f32 %v764, %v891
        %893 = vmatprep.mubr.f32.mxu0 0.0
        %v894 = vand.u32 %v488, 4294901760
        %v895 = vsub.f32 %v488, %v894
        %896 = vmatmul.mubr.f32.gmra.mrb[0].mxu0 %v895
        %v897 = vpop.f32.mrb[0].mxu0
        %v898 = vadd.f32 %v769, %v897
        %v899 = vpop.f32.mrb[0].mxu0
        %v900 = vadd.f32 %v771, %v899
        %901 = vmatprep.mubr.f32.mxu0 0.0
        %v902 = vand.u32 %v491, 4294901760
        %v903 = vsub.f32 %v491, %v902
        %904 = vmatmul.mubr.f32.gmra.mrb[0].mxu0 %v903
        %v905 = vpop.f32.mrb[0].mxu0
        %v906 = vadd.f32 %v776, %v905
        %v907 = vpop.f32.mrb[0].mxu0
        %v908 = vadd.f32 %v778, %v907
        %909 = vmatprep.mubr.f32.mxu0 0.0
        %v910 = vand.u32 %v494, 4294901760
        %v911 = vsub.f32 %v494, %v910
        %912 = vmatmul.mubr.f32.gmra.mrb[0].mxu0 %v911
        %v913 = vpop.f32.mrb[0].mxu0
        %v914 = vadd.f32 %v783, %v913
        %v915 = vpop.f32.mrb[0].mxu0
        %v916 = vadd.f32 %v785, %v915
        %917 = vmatprep.mubr.f32.mxu0 0.0
        %v918 = vand.u32 %v497, 4294901760
        %v919 = vsub.f32 %v497, %v918
        %920 = vmatmul.mubr.f32.gmra.mrb[0].mxu0 %v919
        %v921 = vpop.f32.mrb[0].mxu0
        %v922 = vadd.f32 %v790, %v921
        %v923 = vpop.f32.mrb[0].mxu0
        %v924 = vadd.f32 %v792, %v923
        %925 = vmatprep.mubr.f32.mxu0 0.0
        %v926 = vand.u32 %v500, 4294901760
        %v927 = vsub.f32 %v500, %v926
        %928 = vmatmul.mubr.f32.gmra.mrb[0].mxu0 %v927
        %v929 = vpop.f32.mrb[0].mxu0
        %v930 = vadd.f32 %v797, %v929
        %v931 = vpop.f32.mrb[0].mxu0
        %v932 = vadd.f32 %v799, %v931
        %933 = vdwg.mxu0
        %v934 = vand.u32 %v507, 4294901760
        %935 = vmatprep.subr.mxu0 %v934
        %v936 = vand.u32 %v504, 4294901760
        %937 = vmatpush1.msra.mxu0 %v936
        %938 = vmatprep.subr.mxu0 0.0
        %939 = vmatpush1.msra.mxu0 0.0
        %940 = vmatprep.subr.mxu0 0.0
        %941 = vmatpush1.msra.mxu0 0.0
        %942 = vmatprep.subr.mxu0 0.0
        %943 = vmatpush1.msra.mxu0 0.0
        %944 = vmatprep.subr.mxu0 0.0
        %945 = vmatpush1.msra.mxu0 0.0
        %946 = vmatprep.subr.mxu0 0.0
        %947 = vmatpush1.msra.mxu0 0.0
        %948 = vmatprep.subr.mxu0 0.0
        %949 = vmatpush1.msra.mxu0 0.0
        %950 = vmatprep.subr.mxu0 0.0
        %951 = vmatpush1.msra.mxu0 0.0
        %952 = vmatprep.subr.mxu0 0.0
        %953 = vmatpush1.msra.mxu0 0.0
        %954 = vmatprep.subr.mxu0 0.0
        %955 = vmatpush1.msra.mxu0 0.0
        %956 = vmatprep.subr.mxu0 0.0
        %957 = vmatpush1.msra.mxu0 0.0
        %958 = vmatprep.subr.mxu0 0.0
        %959 = vmatpush1.msra.mxu0 0.0
        %960 = vmatprep.subr.mxu0 0.0
        %961 = vmatpush1.msra.mxu0 0.0
        %962 = vmatprep.subr.mxu0 0.0
        %963 = vmatpush1.msra.mxu0 0.0
        %964 = vmatprep.subr.mxu0 0.0
        %965 = vmatpush1.msra.mxu0 0.0
        %966 = vmatprep.subr.mxu0 0.0
        %967 = vmatpush1.msra.mxu0 0.0
        %968 = vmatprep.subr.mxu0 0.0
        %969 = vmatpush1.msra.mxu0 0.0
        %970 = vmatprep.subr.mxu0 0.0
        %971 = vmatpush1.msra.mxu0 0.0
        %972 = vmatprep.subr.mxu0 0.0
        %973 = vmatpush1.msra.mxu0 0.0
        %974 = vmatprep.subr.mxu0 0.0
        %975 = vmatpush1.msra.mxu0 0.0
        %976 = vmatprep.subr.mxu0 0.0
        %977 = vmatpush1.msra.mxu0 0.0
        %978 = vmatprep.subr.mxu0 0.0
        %979 = vmatpush1.msra.mxu0 0.0
        %980 = vmatprep.subr.mxu0 0.0
        %981 = vmatpush1.msra.mxu0 0.0
        %982 = vmatprep.subr.mxu0 0.0
        %983 = vmatpush1.msra.mxu0 0.0
        %984 = vmatprep.subr.mxu0 0.0
        %985 = vmatpush1.msra.mxu0 0.0
        %986 = vmatprep.subr.mxu0 0.0
        %987 = vmatpush1.msra.mxu0 0.0
        %988 = vmatprep.subr.mxu0 0.0
        %989 = vmatpush1.msra.mxu0 0.0
        %990 = vmatprep.subr.mxu0 0.0
        %991 = vmatpush1.msra.mxu0 0.0
        %992 = vmatprep.subr.mxu0 0.0
        %993 = vmatpush1.msra.mxu0 0.0
        %994 = vmatprep.subr.mxu0 0.0
        %995 = vmatpush1.msra.mxu0 0.0
        %996 = vmatprep.subr.mxu0 0.0
        %997 = vmatpush1.msra.mxu0 0.0
        %998 = vmatprep.subr.mxu0 0.0
        %999 = vmatpush1.msra.mxu0 0.0
        %1000 = vmatprep.mubr.f32.mxu0 0.0
        %v1001 = vand.u32 %v479, 4294901760
        %v1002 = vsub.f32 %v479, %v1001
        %v1003 = vand.u32 %v1002, 4294901760
        %1004 = vmatmul.mubr.f32.gmra.mrb[0].mxu0 %v1003
        %v1005 = vpop.f32.mrb[0].mxu0
        %v1006 = vadd.f32 %v874, %v1005
        %v1007 = vpop.f32.mrb[0].mxu0
        %v1008 = vadd.f32 %v876, %v1007
        %1009 = vmatprep.mubr.f32.mxu0 0.0
        %v1010 = vand.u32 %v482, 4294901760
        %v1011 = vsub.f32 %v482, %v1010
        %v1012 = vand.u32 %v1011, 4294901760
        %1013 = vmatmul.mubr.f32.gmra.mrb[0].mxu0 %v1012
        %v1014 = vpop.f32.mrb[0].mxu0
        %v1015 = vadd.f32 %v882, %v1014
        %v1016 = vpop.f32.mrb[0].mxu0
        %v1017 = vadd.f32 %v884, %v1016
        %1018 = vmatprep.mubr.f32.mxu0 0.0
        %v1019 = vand.u32 %v485, 4294901760
        %v1020 = vsub.f32 %v485, %v1019
        %v1021 = vand.u32 %v1020, 4294901760
        %1022 = vmatmul.mubr.f32.gmra.mrb[0].mxu0 %v1021
        %v1023 = vpop.f32.mrb[0].mxu0
        %v1024 = vadd.f32 %v890, %v1023
        %v1025 = vpop.f32.mrb[0].mxu0
        %v1026 = vadd.f32 %v892, %v1025
        %1027 = vmatprep.mubr.f32.mxu0 0.0
        %v1028 = vand.u32 %v488, 4294901760
        %v1029 = vsub.f32 %v488, %v1028
        %v1030 = vand.u32 %v1029, 4294901760
        %1031 = vmatmul.mubr.f32.gmra.mrb[0].mxu0 %v1030
        %v1032 = vpop.f32.mrb[0].mxu0
        %v1033 = vadd.f32 %v898, %v1032
        %v1034 = vpop.f32.mrb[0].mxu0
        %v1035 = vadd.f32 %v900, %v1034
        %1036 = vmatprep.mubr.f32.mxu0 0.0
        %v1037 = vand.u32 %v491, 4294901760
        %v1038 = vsub.f32 %v491, %v1037
        %v1039 = vand.u32 %v1038, 4294901760
        %1040 = vmatmul.mubr.f32.gmra.mrb[0].mxu0 %v1039
        %v1041 = vpop.f32.mrb[0].mxu0
        %v1042 = vadd.f32 %v906, %v1041
        %v1043 = vpop.f32.mrb[0].mxu0
        %v1044 = vadd.f32 %v908, %v1043
        %1045 = vmatprep.mubr.f32.mxu0 0.0
        %v1046 = vand.u32 %v494, 4294901760
        %v1047 = vsub.f32 %v494, %v1046
        %v1048 = vand.u32 %v1047, 4294901760
        %1049 = vmatmul.mubr.f32.gmra.mrb[0].mxu0 %v1048
        %v1050 = vpop.f32.mrb[0].mxu0
        %v1051 = vadd.f32 %v914, %v1050
        %v1052 = vpop.f32.mrb[0].mxu0
        %v1053 = vadd.f32 %v916, %v1052
        %1054 = vmatprep.mubr.f32.mxu0 0.0
        %v1055 = vand.u32 %v497, 4294901760
        %v1056 = vsub.f32 %v497, %v1055
        %v1057 = vand.u32 %v1056, 4294901760
        %1058 = vmatmul.mubr.f32.gmra.mrb[0].mxu0 %v1057
        %v1059 = vpop.f32.mrb[0].mxu0
        %v1060 = vadd.f32 %v922, %v1059
        %v1061 = vpop.f32.mrb[0].mxu0
        %v1062 = vadd.f32 %v924, %v1061
        %1063 = vmatprep.mubr.f32.mxu0 0.0
        %v1064 = vand.u32 %v500, 4294901760
        %v1065 = vsub.f32 %v500, %v1064
        %v1066 = vand.u32 %v1065, 4294901760
        %1067 = vmatmul.mubr.f32.gmra.mrb[0].mxu0 %v1066
        %v1068 = vpop.f32.mrb[0].mxu0
        %v1069 = vadd.f32 %v930, %v1068
        %v1070 = vpop.f32.mrb[0].mxu0
        %v1071 = vadd.f32 %v932, %v1070
        %1072 = vdwg.mxu0
        %v1073 = vand.u32 %v507, 4294901760
        %v1074 = vsub.f32 %v507, %v1073
        %v1075 = vand.u32 %v1074, 4294901760
        %1076 = vmatprep.subr.mxu0 %v1075
        %v1077 = vand.u32 %v504, 4294901760
        %v1078 = vsub.f32 %v504, %v1077
        %v1079 = vand.u32 %v1078, 4294901760
        %1080 = vmatpush1.msra.mxu0 %v1079
        %1081 = vmatprep.subr.mxu0 0.0
        %1082 = vmatpush1.msra.mxu0 0.0
        %1083 = vmatprep.subr.mxu0 0.0
        %1084 = vmatpush1.msra.mxu0 0.0
        %1085 = vmatprep.subr.mxu0 0.0
        %1086 = vmatpush1.msra.mxu0 0.0
        %1087 = vmatprep.subr.mxu0 0.0
        %1088 = vmatpush1.msra.mxu0 0.0
        %1089 = vmatprep.subr.mxu0 0.0
        %1090 = vmatpush1.msra.mxu0 0.0
        %1091 = vmatprep.subr.mxu0 0.0
        %1092 = vmatpush1.msra.mxu0 0.0
        %1093 = vmatprep.subr.mxu0 0.0
        %1094 = vmatpush1.msra.mxu0 0.0
        %1095 = vmatprep.subr.mxu0 0.0
        %1096 = vmatpush1.msra.mxu0 0.0
        %1097 = vmatprep.subr.mxu0 0.0
        %1098 = vmatpush1.msra.mxu0 0.0
        %1099 = vmatprep.subr.mxu0 0.0
        %1100 = vmatpush1.msra.mxu0 0.0
        %1101 = vmatprep.subr.mxu0 0.0
        %1102 = vmatpush1.msra.mxu0 0.0
        %1103 = vmatprep.subr.mxu0 0.0
        %1104 = vmatpush1.msra.mxu0 0.0
        %1105 = vmatprep.subr.mxu0 0.0
        %1106 = vmatpush1.msra.mxu0 0.0
        %1107 = vmatprep.subr.mxu0 0.0
        %1108 = vmatpush1.msra.mxu0 0.0
        %1109 = vmatprep.subr.mxu0 0.0
        %1110 = vmatpush1.msra.mxu0 0.0
        %1111 = vmatprep.subr.mxu0 0.0
        %1112 = vmatpush1.msra.mxu0 0.0
        %1113 = vmatprep.subr.mxu0 0.0
        %1114 = vmatpush1.msra.mxu0 0.0
        %1115 = vmatprep.subr.mxu0 0.0
        %1116 = vmatpush1.msra.mxu0 0.0
        %1117 = vmatprep.subr.mxu0 0.0
        %1118 = vmatpush1.msra.mxu0 0.0
        %1119 = vmatprep.subr.mxu0 0.0
        %1120 = vmatpush1.msra.mxu0 0.0
        %1121 = vmatprep.subr.mxu0 0.0
        %1122 = vmatpush1.msra.mxu0 0.0
        %1123 = vmatprep.subr.mxu0 0.0
        %1124 = vmatpush1.msra.mxu0 0.0
        %1125 = vmatprep.subr.mxu0 0.0
        %1126 = vmatpush1.msra.mxu0 0.0
        %1127 = vmatprep.subr.mxu0 0.0
        %1128 = vmatpush1.msra.mxu0 0.0
        %1129 = vmatprep.subr.mxu0 0.0
        %1130 = vmatpush1.msra.mxu0 0.0
        %1131 = vmatprep.subr.mxu0 0.0
        %1132 = vmatpush1.msra.mxu0 0.0
        %1133 = vmatprep.subr.mxu0 0.0
        %1134 = vmatpush1.msra.mxu0 0.0
        %1135 = vmatprep.subr.mxu0 0.0
        %1136 = vmatpush1.msra.mxu0 0.0
        %1137 = vmatprep.subr.mxu0 0.0
        %1138 = vmatpush1.msra.mxu0 0.0
        %1139 = vmatprep.subr.mxu0 0.0
        %1140 = vmatpush1.msra.mxu0 0.0
        %1141 = vmatprep.subr.mxu0 0.0
        %1142 = vmatpush1.msra.mxu0 0.0
        %1143 = vmatprep.mubr.f32.mxu0 0.0
        %v1144 = vand.u32 %v479, 4294901760
        %1145 = vmatmul.mubr.f32.gmra.mrb[0].mxu0 %v1144
        %v1146 = vpop.f32.mrb[0].mxu0
        %v1147 = vadd.f32 %v1006, %v1146
        %v1148 = vpop.f32.mrb[0].mxu0
        %v1149 = vadd.f32 %v1008, %v1148
        %1150 = vmatprep.mubr.f32.mxu0 0.0
        %v1151 = vand.u32 %v482, 4294901760
        %1152 = vmatmul.mubr.f32.gmra.mrb[0].mxu0 %v1151
        %v1153 = vpop.f32.mrb[0].mxu0
        %v1154 = vadd.f32 %v1015, %v1153
        %v1155 = vpop.f32.mrb[0].mxu0
        %v1156 = vadd.f32 %v1017, %v1155
        %1157 = vmatprep.mubr.f32.mxu0 0.0
        %v1158 = vand.u32 %v485, 4294901760
        %1159 = vmatmul.mubr.f32.gmra.mrb[0].mxu0 %v1158
        %v1160 = vpop.f32.mrb[0].mxu0
        %v1161 = vadd.f32 %v1024, %v1160
        %v1162 = vpop.f32.mrb[0].mxu0
        %v1163 = vadd.f32 %v1026, %v1162
        %1164 = vmatprep.mubr.f32.mxu0 0.0
        %v1165 = vand.u32 %v488, 4294901760
        %1166 = vmatmul.mubr.f32.gmra.mrb[0].mxu0 %v1165
        %v1167 = vpop.f32.mrb[0].mxu0
        %v1168 = vadd.f32 %v1033, %v1167
        %v1169 = vpop.f32.mrb[0].mxu0
        %v1170 = vadd.f32 %v1035, %v1169
        %1171 = vmatprep.mubr.f32.mxu0 0.0
        %v1172 = vand.u32 %v491, 4294901760
        %1173 = vmatmul.mubr.f32.gmra.mrb[0].mxu0 %v1172
        %v1174 = vpop.f32.mrb[0].mxu0
        %v1175 = vadd.f32 %v1042, %v1174
        %v1176 = vpop.f32.mrb[0].mxu0
        %v1177 = vadd.f32 %v1044, %v1176
        %1178 = vmatprep.mubr.f32.mxu0 0.0
        %v1179 = vand.u32 %v494, 4294901760
        %1180 = vmatmul.mubr.f32.gmra.mrb[0].mxu0 %v1179
        %v1181 = vpop.f32.mrb[0].mxu0
        %v1182 = vadd.f32 %v1051, %v1181
        %v1183 = vpop.f32.mrb[0].mxu0
        %v1184 = vadd.f32 %v1053, %v1183
        %1185 = vmatprep.mubr.f32.mxu0 0.0
        %v1186 = vand.u32 %v497, 4294901760
        %1187 = vmatmul.mubr.f32.gmra.mrb[0].mxu0 %v1186
        %v1188 = vpop.f32.mrb[0].mxu0
        %v1189 = vadd.f32 %v1060, %v1188
        %v1190 = vpop.f32.mrb[0].mxu0
        %v1191 = vadd.f32 %v1062, %v1190
        %1192 = vmatprep.mubr.f32.mxu0 0.0
        %v1193 = vand.u32 %v500, 4294901760
        %1194 = vmatmul.mubr.f32.gmra.mrb[0].mxu0 %v1193
        %v1195 = vpop.f32.mrb[0].mxu0
        %v1196 = vadd.f32 %v1069, %v1195
        %v1197 = vpop.f32.mrb[0].mxu0
        %v1198 = vadd.f32 %v1071, %v1197
        %1199 = vdwg.mxu0
        %v1200 = vand.u32 %v507, 4294901760
        %1201 = vmatprep.subr.mxu0 %v1200
        %v1202 = vand.u32 %v504, 4294901760
        %1203 = vmatpush1.msra.mxu0 %v1202
        %1204 = vmatprep.subr.mxu0 0.0
        %1205 = vmatpush1.msra.mxu0 0.0
        %1206 = vmatprep.subr.mxu0 0.0
        %1207 = vmatpush1.msra.mxu0 0.0
        %1208 = vmatprep.subr.mxu0 0.0
        %1209 = vmatpush1.msra.mxu0 0.0
        %1210 = vmatprep.subr.mxu0 0.0
        %1211 = vmatpush1.msra.mxu0 0.0
        %1212 = vmatprep.subr.mxu0 0.0
        %1213 = vmatpush1.msra.mxu0 0.0
        %1214 = vmatprep.subr.mxu0 0.0
        %1215 = vmatpush1.msra.mxu0 0.0
        %1216 = vmatprep.subr.mxu0 0.0
        %1217 = vmatpush1.msra.mxu0 0.0
        %1218 = vmatprep.subr.mxu0 0.0
        %1219 = vmatpush1.msra.mxu0 0.0
        %1220 = vmatprep.subr.mxu0 0.0
        %1221 = vmatpush1.msra.mxu0 0.0
        %1222 = vmatprep.subr.mxu0 0.0
        %1223 = vmatpush1.msra.mxu0 0.0
        %1224 = vmatprep.subr.mxu0 0.0
        %1225 = vmatpush1.msra.mxu0 0.0
        %1226 = vmatprep.subr.mxu0 0.0
        %1227 = vmatpush1.msra.mxu0 0.0
        %1228 = vmatprep.subr.mxu0 0.0
        %1229 = vmatpush1.msra.mxu0 0.0
        %1230 = vmatprep.subr.mxu0 0.0
        %1231 = vmatpush1.msra.mxu0 0.0
        %1232 = vmatprep.subr.mxu0 0.0
        %1233 = vmatpush1.msra.mxu0 0.0
        %1234 = vmatprep.subr.mxu0 0.0
        %1235 = vmatpush1.msra.mxu0 0.0
        %1236 = vmatprep.subr.mxu0 0.0
        %1237 = vmatpush1.msra.mxu0 0.0
        %1238 = vmatprep.subr.mxu0 0.0
        %1239 = vmatpush1.msra.mxu0 0.0
        %1240 = vmatprep.subr.mxu0 0.0
        %1241 = vmatpush1.msra.mxu0 0.0
        %1242 = vmatprep.subr.mxu0 0.0
        %1243 = vmatpush1.msra.mxu0 0.0
        %1244 = vmatprep.subr.mxu0 0.0
        %1245 = vmatpush1.msra.mxu0 0.0
        %1246 = vmatprep.subr.mxu0 0.0
        %1247 = vmatpush1.msra.mxu0 0.0
        %1248 = vmatprep.subr.mxu0 0.0
        %1249 = vmatpush1.msra.mxu0 0.0
        %1250 = vmatprep.subr.mxu0 0.0
        %1251 = vmatpush1.msra.mxu0 0.0
        %1252 = vmatprep.subr.mxu0 0.0
        %1253 = vmatpush1.msra.mxu0 0.0
        %1254 = vmatprep.subr.mxu0 0.0
        %1255 = vmatpush1.msra.mxu0 0.0
        %1256 = vmatprep.subr.mxu0 0.0
        %1257 = vmatpush1.msra.mxu0 0.0
        %1258 = vmatprep.subr.mxu0 0.0
        %1259 = vmatpush1.msra.mxu0 0.0
        %1260 = vmatprep.subr.mxu0 0.0
        %1261 = vmatpush1.msra.mxu0 0.0
        %1262 = vmatprep.subr.mxu0 0.0
        %1263 = vmatpush1.msra.mxu0 0.0
        %1264 = vmatprep.subr.mxu0 0.0
        %1265 = vmatpush1.msra.mxu0 0.0
        %1266 = vmatprep.mubr.f32.mxu0 0.0
        %v1267 = vand.u32 %v479, 4294901760
        %1268 = vmatmul.mubr.f32.gmra.mrb[0].mxu0 %v1267
        %v1269 = vpop.f32.mrb[0].mxu0
        %v1270 = vadd.f32 %v1147, %v1269
        %v1271 = vpop.f32.mrb[0].mxu0
        %v1272 = vadd.f32 %v1149, %v1271
        %1273 = vmatprep.mubr.f32.mxu0 0.0
        %v1274 = vand.u32 %v482, 4294901760
        %1275 = vmatmul.mubr.f32.gmra.mrb[0].mxu0 %v1274
        %v1276 = vpop.f32.mrb[0].mxu0
        %v1277 = vadd.f32 %v1154, %v1276
        %v1278 = vpop.f32.mrb[0].mxu0
        %v1279 = vadd.f32 %v1156, %v1278
        %1280 = vmatprep.mubr.f32.mxu0 0.0
        %v1281 = vand.u32 %v485, 4294901760
        %1282 = vmatmul.mubr.f32.gmra.mrb[0].mxu0 %v1281
        %v1283 = vpop.f32.mrb[0].mxu0
        %v1284 = vadd.f32 %v1161, %v1283
        %v1285 = vpop.f32.mrb[0].mxu0
        %v1286 = vadd.f32 %v1163, %v1285
        %1287 = vmatprep.mubr.f32.mxu0 0.0
        %v1288 = vand.u32 %v488, 4294901760
        %1289 = vmatmul.mubr.f32.gmra.mrb[0].mxu0 %v1288
        %v1290 = vpop.f32.mrb[0].mxu0
        %v1291 = vadd.f32 %v1168, %v1290
        %v1292 = vpop.f32.mrb[0].mxu0
        %v1293 = vadd.f32 %v1170, %v1292
        %1294 = vmatprep.mubr.f32.mxu0 0.0
        %v1295 = vand.u32 %v491, 4294901760
        %1296 = vmatmul.mubr.f32.gmra.mrb[0].mxu0 %v1295
        %v1297 = vpop.f32.mrb[0].mxu0
        %v1298 = vadd.f32 %v1175, %v1297
        %v1299 = vpop.f32.mrb[0].mxu0
        %v1300 = vadd.f32 %v1177, %v1299
        %1301 = vmatprep.mubr.f32.mxu0 0.0
        %v1302 = vand.u32 %v494, 4294901760
        %1303 = vmatmul.mubr.f32.gmra.mrb[0].mxu0 %v1302
        %v1304 = vpop.f32.mrb[0].mxu0
        %v1305 = vadd.f32 %v1182, %v1304
        %v1306 = vpop.f32.mrb[0].mxu0
        %v1307 = vadd.f32 %v1184, %v1306
        %1308 = vmatprep.mubr.f32.mxu0 0.0
        %v1309 = vand.u32 %v497, 4294901760
        %1310 = vmatmul.mubr.f32.gmra.mrb[0].mxu0 %v1309
        %v1311 = vpop.f32.mrb[0].mxu0
        %v1312 = vadd.f32 %v1189, %v1311
        %v1313 = vpop.f32.mrb[0].mxu0
        %v1314 = vadd.f32 %v1191, %v1313
        %1315 = vmatprep.mubr.f32.mxu0 0.0
        %v1316 = vand.u32 %v500, 4294901760
        %1317 = vmatmul.mubr.f32.gmra.mrb[0].mxu0 %v1316
        %v1318 = vpop.f32.mrb[0].mxu0
        %v1319 = vadd.f32 %v1196, %v1318
        %v1320 = vpop.f32.mrb[0].mxu0
        %v1321 = vadd.f32 %v1198, %v1320
        %1322 = vdwg.mxu0
        %v1323 = vand.u32 %v513, 4294901760
        %1324 = vmatprep.subr.mxu0 %v1323
        %v1325 = vand.u32 %v510, 4294901760
        %1326 = vmatpush1.msra.mxu0 %v1325
        %1327 = vmatprep.subr.mxu0 0.0
        %1328 = vmatpush1.msra.mxu0 0.0
        %1329 = vmatprep.subr.mxu0 0.0
        %1330 = vmatpush1.msra.mxu0 0.0
        %1331 = vmatprep.subr.mxu0 0.0
        %1332 = vmatpush1.msra.mxu0 0.0
        %1333 = vmatprep.subr.mxu0 0.0
        %1334 = vmatpush1.msra.mxu0 0.0
        %1335 = vmatprep.subr.mxu0 0.0
        %1336 = vmatpush1.msra.mxu0 0.0
        %1337 = vmatprep.subr.mxu0 0.0
        %1338 = vmatpush1.msra.mxu0 0.0
        %1339 = vmatprep.subr.mxu0 0.0
        %1340 = vmatpush1.msra.mxu0 0.0
        %1341 = vmatprep.subr.mxu0 0.0
        %1342 = vmatpush1.msra.mxu0 0.0
        %1343 = vmatprep.subr.mxu0 0.0
        %1344 = vmatpush1.msra.mxu0 0.0
        %1345 = vmatprep.subr.mxu0 0.0
        %1346 = vmatpush1.msra.mxu0 0.0
        %1347 = vmatprep.subr.mxu0 0.0
        %1348 = vmatpush1.msra.mxu0 0.0
        %1349 = vmatprep.subr.mxu0 0.0
        %1350 = vmatpush1.msra.mxu0 0.0
        %1351 = vmatprep.subr.mxu0 0.0
        %1352 = vmatpush1.msra.mxu0 0.0
        %1353 = vmatprep.subr.mxu0 0.0
        %1354 = vmatpush1.msra.mxu0 0.0
        %1355 = vmatprep.subr.mxu0 0.0
        %1356 = vmatpush1.msra.mxu0 0.0
        %1357 = vmatprep.subr.mxu0 0.0
        %1358 = vmatpush1.msra.mxu0 0.0
        %1359 = vmatprep.subr.mxu0 0.0
        %1360 = vmatpush1.msra.mxu0 0.0
        %1361 = vmatprep.subr.mxu0 0.0
        %1362 = vmatpush1.msra.mxu0 0.0
        %1363 = vmatprep.subr.mxu0 0.0
        %1364 = vmatpush1.msra.mxu0 0.0
        %1365 = vmatprep.subr.mxu0 0.0
        %1366 = vmatpush1.msra.mxu0 0.0
        %1367 = vmatprep.subr.mxu0 0.0
        %1368 = vmatpush1.msra.mxu0 0.0
        %1369 = vmatprep.subr.mxu0 0.0
        %1370 = vmatpush1.msra.mxu0 0.0
        %1371 = vmatprep.subr.mxu0 0.0
        %1372 = vmatpush1.msra.mxu0 0.0
        %1373 = vmatprep.subr.mxu0 0.0
        %1374 = vmatpush1.msra.mxu0 0.0
        %1375 = vmatprep.subr.mxu0 0.0
        %1376 = vmatpush1.msra.mxu0 0.0
        %1377 = vmatprep.subr.mxu0 0.0
        %1378 = vmatpush1.msra.mxu0 0.0
        %1379 = vmatprep.subr.mxu0 0.0
        %1380 = vmatpush1.msra.mxu0 0.0
        %1381 = vmatprep.subr.mxu0 0.0
        %1382 = vmatpush1.msra.mxu0 0.0
        %1383 = vmatprep.subr.mxu0 0.0
        %1384 = vmatpush1.msra.mxu0 0.0
        %1385 = vmatprep.subr.mxu0 0.0
        %1386 = vmatpush1.msra.mxu0 0.0
        %1387 = vmatprep.subr.mxu0 0.0
        %1388 = vmatpush1.msra.mxu0 0.0
        %1389 = vmatprep.mubr.f32.mxu0 0.0
        %v1390 = vand.u32 %v479, 4294901760
        %v1391 = vsub.f32 %v479, %v1390
        %v1392 = vand.u32 %v1391, 4294901760
        %v1393 = vsub.f32 %v1391, %v1392
        %v1394 = vand.u32 %v1393, 4294901760
        %1395 = vmatmul.mubr.f32.gmra.mrb[0].mxu0 %v1394
        %v1396 = vpop.f32.mrb[0].mxu0
        %v1397 = vadd.f32 0.0, %v1396
        %v1398 = vpop.f32.mrb[0].mxu0
        %v1399 = vadd.f32 0.0, %v1398
        %1400 = vmatprep.mubr.f32.mxu0 0.0
        %v1401 = vand.u32 %v482, 4294901760
        %v1402 = vsub.f32 %v482, %v1401
        %v1403 = vand.u32 %v1402, 4294901760
        %v1404 = vsub.f32 %v1402, %v1403
        %v1405 = vand.u32 %v1404, 4294901760
        %1406 = vmatmul.mubr.f32.gmra.mrb[0].mxu0 %v1405
        %v1407 = vpop.f32.mrb[0].mxu0
        %v1408 = vadd.f32 0.0, %v1407
        %v1409 = vpop.f32.mrb[0].mxu0
        %v1410 = vadd.f32 0.0, %v1409
        %1411 = vmatprep.mubr.f32.mxu0 0.0
        %v1412 = vand.u32 %v485, 4294901760
        %v1413 = vsub.f32 %v485, %v1412
        %v1414 = vand.u32 %v1413, 4294901760
        %v1415 = vsub.f32 %v1413, %v1414
        %v1416 = vand.u32 %v1415, 4294901760
        %1417 = vmatmul.mubr.f32.gmra.mrb[0].mxu0 %v1416
        %v1418 = vpop.f32.mrb[0].mxu0
        %v1419 = vadd.f32 0.0, %v1418
        %v1420 = vpop.f32.mrb[0].mxu0
        %v1421 = vadd.f32 0.0, %v1420
        %1422 = vmatprep.mubr.f32.mxu0 0.0
        %v1423 = vand.u32 %v488, 4294901760
        %v1424 = vsub.f32 %v488, %v1423
        %v1425 = vand.u32 %v1424, 4294901760
        %v1426 = vsub.f32 %v1424, %v1425
        %v1427 = vand.u32 %v1426, 4294901760
        %1428 = vmatmul.mubr.f32.gmra.mrb[0].mxu0 %v1427
        %v1429 = vpop.f32.mrb[0].mxu0
        %v1430 = vadd.f32 0.0, %v1429
        %v1431 = vpop.f32.mrb[0].mxu0
        %v1432 = vadd.f32 0.0, %v1431
        %1433 = vmatprep.mubr.f32.mxu0 0.0
        %v1434 = vand.u32 %v491, 4294901760
        %v1435 = vsub.f32 %v491, %v1434
        %v1436 = vand.u32 %v1435, 4294901760
        %v1437 = vsub.f32 %v1435, %v1436
        %v1438 = vand.u32 %v1437, 4294901760
        %1439 = vmatmul.mubr.f32.gmra.mrb[0].mxu0 %v1438
        %v1440 = vpop.f32.mrb[0].mxu0
        %v1441 = vadd.f32 0.0, %v1440
        %v1442 = vpop.f32.mrb[0].mxu0
        %v1443 = vadd.f32 0.0, %v1442
        %1444 = vmatprep.mubr.f32.mxu0 0.0
        %v1445 = vand.u32 %v494, 4294901760
        %v1446 = vsub.f32 %v494, %v1445
        %v1447 = vand.u32 %v1446, 4294901760
        %v1448 = vsub.f32 %v1446, %v1447
        %v1449 = vand.u32 %v1448, 4294901760
        %1450 = vmatmul.mubr.f32.gmra.mrb[0].mxu0 %v1449
        %v1451 = vpop.f32.mrb[0].mxu0
        %v1452 = vadd.f32 0.0, %v1451
        %v1453 = vpop.f32.mrb[0].mxu0
        %v1454 = vadd.f32 0.0, %v1453
        %1455 = vmatprep.mubr.f32.mxu0 0.0
        %v1456 = vand.u32 %v497, 4294901760
        %v1457 = vsub.f32 %v497, %v1456
        %v1458 = vand.u32 %v1457, 4294901760
        %v1459 = vsub.f32 %v1457, %v1458
        %v1460 = vand.u32 %v1459, 4294901760
        %1461 = vmatmul.mubr.f32.gmra.mrb[0].mxu0 %v1460
        %v1462 = vpop.f32.mrb[0].mxu0
        %v1463 = vadd.f32 0.0, %v1462
        %v1464 = vpop.f32.mrb[0].mxu0
        %v1465 = vadd.f32 0.0, %v1464
        %1466 = vmatprep.mubr.f32.mxu0 0.0
        %v1467 = vand.u32 %v500, 4294901760
        %v1468 = vsub.f32 %v500, %v1467
        %v1469 = vand.u32 %v1468, 4294901760
        %v1470 = vsub.f32 %v1468, %v1469
        %v1471 = vand.u32 %v1470, 4294901760
        %1472 = vmatmul.mubr.f32.gmra.mrb[0].mxu0 %v1471
        %v1473 = vpop.f32.mrb[0].mxu0
        %v1474 = vadd.f32 0.0, %v1473
        %v1475 = vpop.f32.mrb[0].mxu0
        %v1476 = vadd.f32 0.0, %v1475
        %1477 = vdwg.mxu0
        %v1478 = vand.u32 %v513, 4294901760
        %v1479 = vsub.f32 %v513, %v1478
        %v1480 = vand.u32 %v1479, 4294901760
        %v1481 = vsub.f32 %v1479, %v1480
        %v1482 = vand.u32 %v1481, 4294901760
        %1483 = vmatprep.subr.mxu0 %v1482
        %v1484 = vand.u32 %v510, 4294901760
        %v1485 = vsub.f32 %v510, %v1484
        %v1486 = vand.u32 %v1485, 4294901760
        %v1487 = vsub.f32 %v1485, %v1486
        %v1488 = vand.u32 %v1487, 4294901760
        %1489 = vmatpush1.msra.mxu0 %v1488
        %1490 = vmatprep.subr.mxu0 0.0
        %1491 = vmatpush1.msra.mxu0 0.0
        %1492 = vmatprep.subr.mxu0 0.0
        %1493 = vmatpush1.msra.mxu0 0.0
        %1494 = vmatprep.subr.mxu0 0.0
        %1495 = vmatpush1.msra.mxu0 0.0
        %1496 = vmatprep.subr.mxu0 0.0
        %1497 = vmatpush1.msra.mxu0 0.0
        %1498 = vmatprep.subr.mxu0 0.0
        %1499 = vmatpush1.msra.mxu0 0.0
        %1500 = vmatprep.subr.mxu0 0.0
        %1501 = vmatpush1.msra.mxu0 0.0
        %1502 = vmatprep.subr.mxu0 0.0
        %1503 = vmatpush1.msra.mxu0 0.0
        %1504 = vmatprep.subr.mxu0 0.0
        %1505 = vmatpush1.msra.mxu0 0.0
        %1506 = vmatprep.subr.mxu0 0.0
        %1507 = vmatpush1.msra.mxu0 0.0
        %1508 = vmatprep.subr.mxu0 0.0
        %1509 = vmatpush1.msra.mxu0 0.0
        %1510 = vmatprep.subr.mxu0 0.0
        %1511 = vmatpush1.msra.mxu0 0.0
        %1512 = vmatprep.subr.mxu0 0.0
        %1513 = vmatpush1.msra.mxu0 0.0
        %1514 = vmatprep.subr.mxu0 0.0
        %1515 = vmatpush1.msra.mxu0 0.0
        %1516 = vmatprep.subr.mxu0 0.0
        %1517 = vmatpush1.msra.mxu0 0.0
        %1518 = vmatprep.subr.mxu0 0.0
        %1519 = vmatpush1.msra.mxu0 0.0
        %1520 = vmatprep.subr.mxu0 0.0
        %1521 = vmatpush1.msra.mxu0 0.0
        %1522 = vmatprep.subr.mxu0 0.0
        %1523 = vmatpush1.msra.mxu0 0.0
        %1524 = vmatprep.subr.mxu0 0.0
        %1525 = vmatpush1.msra.mxu0 0.0
        %1526 = vmatprep.subr.mxu0 0.0
        %1527 = vmatpush1.msra.mxu0 0.0
        %1528 = vmatprep.subr.mxu0 0.0
        %1529 = vmatpush1.msra.mxu0 0.0
        %1530 = vmatprep.subr.mxu0 0.0
        %1531 = vmatpush1.msra.mxu0 0.0
        %1532 = vmatprep.subr.mxu0 0.0
        %1533 = vmatpush1.msra.mxu0 0.0
        %1534 = vmatprep.subr.mxu0 0.0
        %1535 = vmatpush1.msra.mxu0 0.0
        %1536 = vmatprep.subr.mxu0 0.0
        %1537 = vmatpush1.msra.mxu0 0.0
        %1538 = vmatprep.subr.mxu0 0.0
        %1539 = vmatpush1.msra.mxu0 0.0
        %1540 = vmatprep.subr.mxu0 0.0
        %1541 = vmatpush1.msra.mxu0 0.0
        %1542 = vmatprep.subr.mxu0 0.0
        %1543 = vmatpush1.msra.mxu0 0.0
        %1544 = vmatprep.subr.mxu0 0.0
        %1545 = vmatpush1.msra.mxu0 0.0
        %1546 = vmatprep.subr.mxu0 0.0
        %1547 = vmatpush1.msra.mxu0 0.0
        %1548 = vmatprep.subr.mxu0 0.0
        %1549 = vmatpush1.msra.mxu0 0.0
        %1550 = vmatprep.subr.mxu0 0.0
        %1551 = vmatpush1.msra.mxu0 0.0
        %1552 = vmatprep.mubr.f32.mxu0 0.0
        %v1553 = vand.u32 %v479, 4294901760
        %1554 = vmatmul.mubr.f32.gmra.mrb[0].mxu0 %v1553
        %v1555 = vpop.f32.mrb[0].mxu0
        %v1556 = vadd.f32 %v1397, %v1555
        %v1557 = vpop.f32.mrb[0].mxu0
        %v1558 = vadd.f32 %v1399, %v1557
        %1559 = vmatprep.mubr.f32.mxu0 0.0
        %v1560 = vand.u32 %v482, 4294901760
        %1561 = vmatmul.mubr.f32.gmra.mrb[0].mxu0 %v1560
        %v1562 = vpop.f32.mrb[0].mxu0
        %v1563 = vadd.f32 %v1408, %v1562
        %v1564 = vpop.f32.mrb[0].mxu0
        %v1565 = vadd.f32 %v1410, %v1564
        %1566 = vmatprep.mubr.f32.mxu0 0.0
        %v1567 = vand.u32 %v485, 4294901760
        %1568 = vmatmul.mubr.f32.gmra.mrb[0].mxu0 %v1567
        %v1569 = vpop.f32.mrb[0].mxu0
        %v1570 = vadd.f32 %v1419, %v1569
        %v1571 = vpop.f32.mrb[0].mxu0
        %v1572 = vadd.f32 %v1421, %v1571
        %1573 = vmatprep.mubr.f32.mxu0 0.0
        %v1574 = vand.u32 %v488, 4294901760
        %1575 = vmatmul.mubr.f32.gmra.mrb[0].mxu0 %v1574
        %v1576 = vpop.f32.mrb[0].mxu0
        %v1577 = vadd.f32 %v1430, %v1576
        %v1578 = vpop.f32.mrb[0].mxu0
        %v1579 = vadd.f32 %v1432, %v1578
        %1580 = vmatprep.mubr.f32.mxu0 0.0
        %v1581 = vand.u32 %v491, 4294901760
        %1582 = vmatmul.mubr.f32.gmra.mrb[0].mxu0 %v1581
        %v1583 = vpop.f32.mrb[0].mxu0
        %v1584 = vadd.f32 %v1441, %v1583
        %v1585 = vpop.f32.mrb[0].mxu0
        %v1586 = vadd.f32 %v1443, %v1585
        %1587 = vmatprep.mubr.f32.mxu0 0.0
        %v1588 = vand.u32 %v494, 4294901760
        %1589 = vmatmul.mubr.f32.gmra.mrb[0].mxu0 %v1588
        %v1590 = vpop.f32.mrb[0].mxu0
        %v1591 = vadd.f32 %v1452, %v1590
        %v1592 = vpop.f32.mrb[0].mxu0
        %v1593 = vadd.f32 %v1454, %v1592
        %1594 = vmatprep.mubr.f32.mxu0 0.0
        %v1595 = vand.u32 %v497, 4294901760
        %1596 = vmatmul.mubr.f32.gmra.mrb[0].mxu0 %v1595
        %v1597 = vpop.f32.mrb[0].mxu0
        %v1598 = vadd.f32 %v1463, %v1597
        %v1599 = vpop.f32.mrb[0].mxu0
        %v1600 = vadd.f32 %v1465, %v1599
        %1601 = vmatprep.mubr.f32.mxu0 0.0
        %v1602 = vand.u32 %v500, 4294901760
        %1603 = vmatmul.mubr.f32.gmra.mrb[0].mxu0 %v1602
        %v1604 = vpop.f32.mrb[0].mxu0
        %v1605 = vadd.f32 %v1474, %v1604
        %v1606 = vpop.f32.mrb[0].mxu0
        %v1607 = vadd.f32 %v1476, %v1606
        %1608 = vdwg.mxu0
        %v1609 = vand.u32 %v513, 4294901760
        %v1610 = vsub.f32 %v513, %v1609
        %1611 = vmatprep.subr.mxu0 %v1610
        %v1612 = vand.u32 %v510, 4294901760
        %v1613 = vsub.f32 %v510, %v1612
        %1614 = vmatpush1.msra.mxu0 %v1613
        %1615 = vmatprep.subr.mxu0 0.0
        %1616 = vmatpush1.msra.mxu0 0.0
        %1617 = vmatprep.subr.mxu0 0.0
        %1618 = vmatpush1.msra.mxu0 0.0
        %1619 = vmatprep.subr.mxu0 0.0
        %1620 = vmatpush1.msra.mxu0 0.0
        %1621 = vmatprep.subr.mxu0 0.0
        %1622 = vmatpush1.msra.mxu0 0.0
        %1623 = vmatprep.subr.mxu0 0.0
        %1624 = vmatpush1.msra.mxu0 0.0
        %1625 = vmatprep.subr.mxu0 0.0
        %1626 = vmatpush1.msra.mxu0 0.0
        %1627 = vmatprep.subr.mxu0 0.0
        %1628 = vmatpush1.msra.mxu0 0.0
        %1629 = vmatprep.subr.mxu0 0.0
        %1630 = vmatpush1.msra.mxu0 0.0
        %1631 = vmatprep.subr.mxu0 0.0
        %1632 = vmatpush1.msra.mxu0 0.0
        %1633 = vmatprep.subr.mxu0 0.0
        %1634 = vmatpush1.msra.mxu0 0.0
        %1635 = vmatprep.subr.mxu0 0.0
        %1636 = vmatpush1.msra.mxu0 0.0
        %1637 = vmatprep.subr.mxu0 0.0
        %1638 = vmatpush1.msra.mxu0 0.0
        %1639 = vmatprep.subr.mxu0 0.0
        %1640 = vmatpush1.msra.mxu0 0.0
        %1641 = vmatprep.subr.mxu0 0.0
        %1642 = vmatpush1.msra.mxu0 0.0
        %1643 = vmatprep.subr.mxu0 0.0
        %1644 = vmatpush1.msra.mxu0 0.0
        %1645 = vmatprep.subr.mxu0 0.0
        %1646 = vmatpush1.msra.mxu0 0.0
        %1647 = vmatprep.subr.mxu0 0.0
        %1648 = vmatpush1.msra.mxu0 0.0
        %1649 = vmatprep.subr.mxu0 0.0
        %1650 = vmatpush1.msra.mxu0 0.0
        %1651 = vmatprep.subr.mxu0 0.0
        %1652 = vmatpush1.msra.mxu0 0.0
        %1653 = vmatprep.subr.mxu0 0.0
        %1654 = vmatpush1.msra.mxu0 0.0
        %1655 = vmatprep.subr.mxu0 0.0
        %1656 = vmatpush1.msra.mxu0 0.0
        %1657 = vmatprep.subr.mxu0 0.0
        %1658 = vmatpush1.msra.mxu0 0.0
        %1659 = vmatprep.subr.mxu0 0.0
        %1660 = vmatpush1.msra.mxu0 0.0
        %1661 = vmatprep.subr.mxu0 0.0
        %1662 = vmatpush1.msra.mxu0 0.0
        %1663 = vmatprep.subr.mxu0 0.0
        %1664 = vmatpush1.msra.mxu0 0.0
        %1665 = vmatprep.subr.mxu0 0.0
        %1666 = vmatpush1.msra.mxu0 0.0
        %1667 = vmatprep.subr.mxu0 0.0
        %1668 = vmatpush1.msra.mxu0 0.0
        %1669 = vmatprep.subr.mxu0 0.0
        %1670 = vmatpush1.msra.mxu0 0.0
        %1671 = vmatprep.subr.mxu0 0.0
        %1672 = vmatpush1.msra.mxu0 0.0
        %1673 = vmatprep.subr.mxu0 0.0
        %1674 = vmatpush1.msra.mxu0 0.0
        %1675 = vmatprep.subr.mxu0 0.0
        %1676 = vmatpush1.msra.mxu0 0.0
        %1677 = vmatprep.mubr.f32.mxu0 0.0
        %v1678 = vand.u32 %v479, 4294901760
        %v1679 = vsub.f32 %v479, %v1678
        %1680 = vmatmul.mubr.f32.gmra.mrb[0].mxu0 %v1679
        %v1681 = vpop.f32.mrb[0].mxu0
        %v1682 = vadd.f32 %v1556, %v1681
        %v1683 = vpop.f32.mrb[0].mxu0
        %v1684 = vadd.f32 %v1558, %v1683
        %1685 = vmatprep.mubr.f32.mxu0 0.0
        %v1686 = vand.u32 %v482, 4294901760
        %v1687 = vsub.f32 %v482, %v1686
        %1688 = vmatmul.mubr.f32.gmra.mrb[0].mxu0 %v1687
        %v1689 = vpop.f32.mrb[0].mxu0
        %v1690 = vadd.f32 %v1563, %v1689
        %v1691 = vpop.f32.mrb[0].mxu0
        %v1692 = vadd.f32 %v1565, %v1691
        %1693 = vmatprep.mubr.f32.mxu0 0.0
        %v1694 = vand.u32 %v485, 4294901760
        %v1695 = vsub.f32 %v485, %v1694
        %1696 = vmatmul.mubr.f32.gmra.mrb[0].mxu0 %v1695
        %v1697 = vpop.f32.mrb[0].mxu0
        %v1698 = vadd.f32 %v1570, %v1697
        %v1699 = vpop.f32.mrb[0].mxu0
        %v1700 = vadd.f32 %v1572, %v1699
        %1701 = vmatprep.mubr.f32.mxu0 0.0
        %v1702 = vand.u32 %v488, 4294901760
        %v1703 = vsub.f32 %v488, %v1702
        %1704 = vmatmul.mubr.f32.gmra.mrb[0].mxu0 %v1703
        %v1705 = vpop.f32.mrb[0].mxu0
        %v1706 = vadd.f32 %v1577, %v1705
        %v1707 = vpop.f32.mrb[0].mxu0
        %v1708 = vadd.f32 %v1579, %v1707
        %1709 = vmatprep.mubr.f32.mxu0 0.0
        %v1710 = vand.u32 %v491, 4294901760
        %v1711 = vsub.f32 %v491, %v1710
        %1712 = vmatmul.mubr.f32.gmra.mrb[0].mxu0 %v1711
        %v1713 = vpop.f32.mrb[0].mxu0
        %v1714 = vadd.f32 %v1584, %v1713
        %v1715 = vpop.f32.mrb[0].mxu0
        %v1716 = vadd.f32 %v1586, %v1715
        %1717 = vmatprep.mubr.f32.mxu0 0.0
        %v1718 = vand.u32 %v494, 4294901760
        %v1719 = vsub.f32 %v494, %v1718
        %1720 = vmatmul.mubr.f32.gmra.mrb[0].mxu0 %v1719
        %v1721 = vpop.f32.mrb[0].mxu0
        %v1722 = vadd.f32 %v1591, %v1721
        %v1723 = vpop.f32.mrb[0].mxu0
        %v1724 = vadd.f32 %v1593, %v1723
        %1725 = vmatprep.mubr.f32.mxu0 0.0
        %v1726 = vand.u32 %v497, 4294901760
        %v1727 = vsub.f32 %v497, %v1726
        %1728 = vmatmul.mubr.f32.gmra.mrb[0].mxu0 %v1727
        %v1729 = vpop.f32.mrb[0].mxu0
        %v1730 = vadd.f32 %v1598, %v1729
        %v1731 = vpop.f32.mrb[0].mxu0
        %v1732 = vadd.f32 %v1600, %v1731
        %1733 = vmatprep.mubr.f32.mxu0 0.0
        %v1734 = vand.u32 %v500, 4294901760
        %v1735 = vsub.f32 %v500, %v1734
        %1736 = vmatmul.mubr.f32.gmra.mrb[0].mxu0 %v1735
        %v1737 = vpop.f32.mrb[0].mxu0
        %v1738 = vadd.f32 %v1605, %v1737
        %v1739 = vpop.f32.mrb[0].mxu0
        %v1740 = vadd.f32 %v1607, %v1739
        %1741 = vdwg.mxu0
        %v1742 = vand.u32 %v513, 4294901760
        %1743 = vmatprep.subr.mxu0 %v1742
        %v1744 = vand.u32 %v510, 4294901760
        %1745 = vmatpush1.msra.mxu0 %v1744
        %1746 = vmatprep.subr.mxu0 0.0
        %1747 = vmatpush1.msra.mxu0 0.0
        %1748 = vmatprep.subr.mxu0 0.0
        %1749 = vmatpush1.msra.mxu0 0.0
        %1750 = vmatprep.subr.mxu0 0.0
        %1751 = vmatpush1.msra.mxu0 0.0
        %1752 = vmatprep.subr.mxu0 0.0
        %1753 = vmatpush1.msra.mxu0 0.0
        %1754 = vmatprep.subr.mxu0 0.0
        %1755 = vmatpush1.msra.mxu0 0.0
        %1756 = vmatprep.subr.mxu0 0.0
        %1757 = vmatpush1.msra.mxu0 0.0
        %1758 = vmatprep.subr.mxu0 0.0
        %1759 = vmatpush1.msra.mxu0 0.0
        %1760 = vmatprep.subr.mxu0 0.0
        %1761 = vmatpush1.msra.mxu0 0.0
        %1762 = vmatprep.subr.mxu0 0.0
        %1763 = vmatpush1.msra.mxu0 0.0
        %1764 = vmatprep.subr.mxu0 0.0
        %1765 = vmatpush1.msra.mxu0 0.0
        %1766 = vmatprep.subr.mxu0 0.0
        %1767 = vmatpush1.msra.mxu0 0.0
        %1768 = vmatprep.subr.mxu0 0.0
        %1769 = vmatpush1.msra.mxu0 0.0
        %1770 = vmatprep.subr.mxu0 0.0
        %1771 = vmatpush1.msra.mxu0 0.0
        %1772 = vmatprep.subr.mxu0 0.0
        %1773 = vmatpush1.msra.mxu0 0.0
        %1774 = vmatprep.subr.mxu0 0.0
        %1775 = vmatpush1.msra.mxu0 0.0
        %1776 = vmatprep.subr.mxu0 0.0
        %1777 = vmatpush1.msra.mxu0 0.0
        %1778 = vmatprep.subr.mxu0 0.0
        %1779 = vmatpush1.msra.mxu0 0.0
        %1780 = vmatprep.subr.mxu0 0.0
        %1781 = vmatpush1.msra.mxu0 0.0
        %1782 = vmatprep.subr.mxu0 0.0
        %1783 = vmatpush1.msra.mxu0 0.0
        %1784 = vmatprep.subr.mxu0 0.0
        %1785 = vmatpush1.msra.mxu0 0.0
        %1786 = vmatprep.subr.mxu0 0.0
        %1787 = vmatpush1.msra.mxu0 0.0
        %1788 = vmatprep.subr.mxu0 0.0
        %1789 = vmatpush1.msra.mxu0 0.0
        %1790 = vmatprep.subr.mxu0 0.0
        %1791 = vmatpush1.msra.mxu0 0.0
        %1792 = vmatprep.subr.mxu0 0.0
        %1793 = vmatpush1.msra.mxu0 0.0
        %1794 = vmatprep.subr.mxu0 0.0
        %1795 = vmatpush1.msra.mxu0 0.0
        %1796 = vmatprep.subr.mxu0 0.0
        %1797 = vmatpush1.msra.mxu0 0.0
        %1798 = vmatprep.subr.mxu0 0.0
        %1799 = vmatpush1.msra.mxu0 0.0
        %1800 = vmatprep.subr.mxu0 0.0
        %1801 = vmatpush1.msra.mxu0 0.0
        %1802 = vmatprep.subr.mxu0 0.0
        %1803 = vmatpush1.msra.mxu0 0.0
        %1804 = vmatprep.subr.mxu0 0.0
        %1805 = vmatpush1.msra.mxu0 0.0
        %1806 = vmatprep.subr.mxu0 0.0
        %1807 = vmatpush1.msra.mxu0 0.0
        %1808 = vmatprep.mubr.f32.mxu0 0.0
        %v1809 = vand.u32 %v479, 4294901760
        %v1810 = vsub.f32 %v479, %v1809
        %v1811 = vand.u32 %v1810, 4294901760
        %1812 = vmatmul.mubr.f32.gmra.mrb[0].mxu0 %v1811
        %v1813 = vpop.f32.mrb[0].mxu0
        %v1814 = vadd.f32 %v1682, %v1813
        %v1815 = vpop.f32.mrb[0].mxu0
        %v1816 = vadd.f32 %v1684, %v1815
        %1817 = vmatprep.mubr.f32.mxu0 0.0
        %v1818 = vand.u32 %v482, 4294901760
        %v1819 = vsub.f32 %v482, %v1818
        %v1820 = vand.u32 %v1819, 4294901760
        %1821 = vmatmul.mubr.f32.gmra.mrb[0].mxu0 %v1820
        %v1822 = vpop.f32.mrb[0].mxu0
        %v1823 = vadd.f32 %v1690, %v1822
        %v1824 = vpop.f32.mrb[0].mxu0
        %v1825 = vadd.f32 %v1692, %v1824
        %1826 = vmatprep.mubr.f32.mxu0 0.0
        %v1827 = vand.u32 %v485, 4294901760
        %v1828 = vsub.f32 %v485, %v1827
        %v1829 = vand.u32 %v1828, 4294901760
        %1830 = vmatmul.mubr.f32.gmra.mrb[0].mxu0 %v1829
        %v1831 = vpop.f32.mrb[0].mxu0
        %v1832 = vadd.f32 %v1698, %v1831
        %v1833 = vpop.f32.mrb[0].mxu0
        %v1834 = vadd.f32 %v1700, %v1833
        %1835 = vmatprep.mubr.f32.mxu0 0.0
        %v1836 = vand.u32 %v488, 4294901760
        %v1837 = vsub.f32 %v488, %v1836
        %v1838 = vand.u32 %v1837, 4294901760
        %1839 = vmatmul.mubr.f32.gmra.mrb[0].mxu0 %v1838
        %v1840 = vpop.f32.mrb[0].mxu0
        %v1841 = vadd.f32 %v1706, %v1840
        %v1842 = vpop.f32.mrb[0].mxu0
        %v1843 = vadd.f32 %v1708, %v1842
        %1844 = vmatprep.mubr.f32.mxu0 0.0
        %v1845 = vand.u32 %v491, 4294901760
        %v1846 = vsub.f32 %v491, %v1845
        %v1847 = vand.u32 %v1846, 4294901760
        %1848 = vmatmul.mubr.f32.gmra.mrb[0].mxu0 %v1847
        %v1849 = vpop.f32.mrb[0].mxu0
        %v1850 = vadd.f32 %v1714, %v1849
        %v1851 = vpop.f32.mrb[0].mxu0
        %v1852 = vadd.f32 %v1716, %v1851
        %1853 = vmatprep.mubr.f32.mxu0 0.0
        %v1854 = vand.u32 %v494, 4294901760
        %v1855 = vsub.f32 %v494, %v1854
        %v1856 = vand.u32 %v1855, 4294901760
        %1857 = vmatmul.mubr.f32.gmra.mrb[0].mxu0 %v1856
        %v1858 = vpop.f32.mrb[0].mxu0
        %v1859 = vadd.f32 %v1722, %v1858
        %v1860 = vpop.f32.mrb[0].mxu0
        %v1861 = vadd.f32 %v1724, %v1860
        %1862 = vmatprep.mubr.f32.mxu0 0.0
        %v1863 = vand.u32 %v497, 4294901760
        %v1864 = vsub.f32 %v497, %v1863
        %v1865 = vand.u32 %v1864, 4294901760
        %1866 = vmatmul.mubr.f32.gmra.mrb[0].mxu0 %v1865
        %v1867 = vpop.f32.mrb[0].mxu0
        %v1868 = vadd.f32 %v1730, %v1867
        %v1869 = vpop.f32.mrb[0].mxu0
        %v1870 = vadd.f32 %v1732, %v1869
        %1871 = vmatprep.mubr.f32.mxu0 0.0
        %v1872 = vand.u32 %v500, 4294901760
        %v1873 = vsub.f32 %v500, %v1872
        %v1874 = vand.u32 %v1873, 4294901760
        %1875 = vmatmul.mubr.f32.gmra.mrb[0].mxu0 %v1874
        %v1876 = vpop.f32.mrb[0].mxu0
        %v1877 = vadd.f32 %v1738, %v1876
        %v1878 = vpop.f32.mrb[0].mxu0
        %v1879 = vadd.f32 %v1740, %v1878
        %1880 = vdwg.mxu0
        %v1881 = vand.u32 %v513, 4294901760
        %v1882 = vsub.f32 %v513, %v1881
        %v1883 = vand.u32 %v1882, 4294901760
        %1884 = vmatprep.subr.mxu0 %v1883
        %v1885 = vand.u32 %v510, 4294901760
        %v1886 = vsub.f32 %v510, %v1885
        %v1887 = vand.u32 %v1886, 4294901760
        %1888 = vmatpush1.msra.mxu0 %v1887
        %1889 = vmatprep.subr.mxu0 0.0
        %1890 = vmatpush1.msra.mxu0 0.0
        %1891 = vmatprep.subr.mxu0 0.0
        %1892 = vmatpush1.msra.mxu0 0.0
        %1893 = vmatprep.subr.mxu0 0.0
        %1894 = vmatpush1.msra.mxu0 0.0
        %1895 = vmatprep.subr.mxu0 0.0
        %1896 = vmatpush1.msra.mxu0 0.0
        %1897 = vmatprep.subr.mxu0 0.0
        %1898 = vmatpush1.msra.mxu0 0.0
        %1899 = vmatprep.subr.mxu0 0.0
        %1900 = vmatpush1.msra.mxu0 0.0
        %1901 = vmatprep.subr.mxu0 0.0
        %1902 = vmatpush1.msra.mxu0 0.0
        %1903 = vmatprep.subr.mxu0 0.0
        %1904 = vmatpush1.msra.mxu0 0.0
        %1905 = vmatprep.subr.mxu0 0.0
        %1906 = vmatpush1.msra.mxu0 0.0
        %1907 = vmatprep.subr.mxu0 0.0
        %1908 = vmatpush1.msra.mxu0 0.0
        %1909 = vmatprep.subr.mxu0 0.0
        %1910 = vmatpush1.msra.mxu0 0.0
        %1911 = vmatprep.subr.mxu0 0.0
        %1912 = vmatpush1.msra.mxu0 0.0
        %1913 = vmatprep.subr.mxu0 0.0
        %1914 = vmatpush1.msra.mxu0 0.0
        %1915 = vmatprep.subr.mxu0 0.0
        %1916 = vmatpush1.msra.mxu0 0.0
        %1917 = vmatprep.subr.mxu0 0.0
        %1918 = vmatpush1.msra.mxu0 0.0
        %1919 = vmatprep.subr.mxu0 0.0
        %1920 = vmatpush1.msra.mxu0 0.0
        %1921 = vmatprep.subr.mxu0 0.0
        %1922 = vmatpush1.msra.mxu0 0.0
        %1923 = vmatprep.subr.mxu0 0.0
        %1924 = vmatpush1.msra.mxu0 0.0
        %1925 = vmatprep.subr.mxu0 0.0
        %1926 = vmatpush1.msra.mxu0 0.0
        %1927 = vmatprep.subr.mxu0 0.0
        %1928 = vmatpush1.msra.mxu0 0.0
        %1929 = vmatprep.subr.mxu0 0.0
        %1930 = vmatpush1.msra.mxu0 0.0
        %1931 = vmatprep.subr.mxu0 0.0
        %1932 = vmatpush1.msra.mxu0 0.0
        %1933 = vmatprep.subr.mxu0 0.0
        %1934 = vmatpush1.msra.mxu0 0.0
        %1935 = vmatprep.subr.mxu0 0.0
        %1936 = vmatpush1.msra.mxu0 0.0
        %1937 = vmatprep.subr.mxu0 0.0
        %1938 = vmatpush1.msra.mxu0 0.0
        %1939 = vmatprep.subr.mxu0 0.0
        %1940 = vmatpush1.msra.mxu0 0.0
        %1941 = vmatprep.subr.mxu0 0.0
        %1942 = vmatpush1.msra.mxu0 0.0
        %1943 = vmatprep.subr.mxu0 0.0
        %1944 = vmatpush1.msra.mxu0 0.0
        %1945 = vmatprep.subr.mxu0 0.0
        %1946 = vmatpush1.msra.mxu0 0.0
        %1947 = vmatprep.subr.mxu0 0.0
        %1948 = vmatpush1.msra.mxu0 0.0
        %1949 = vmatprep.subr.mxu0 0.0
        %1950 = vmatpush1.msra.mxu0 0.0
        %1951 = vmatprep.mubr.f32.mxu0 0.0
        %v1952 = vand.u32 %v479, 4294901760
        %1953 = vmatmul.mubr.f32.gmra.mrb[0].mxu0 %v1952
        %v1954 = vpop.f32.mrb[0].mxu0
        %v1955 = vadd.f32 %v1814, %v1954
        %v1956 = vpop.f32.mrb[0].mxu0
        %v1957 = vadd.f32 %v1816, %v1956
        %1958 = vmatprep.mubr.f32.mxu0 0.0
        %v1959 = vand.u32 %v482, 4294901760
        %1960 = vmatmul.mubr.f32.gmra.mrb[0].mxu0 %v1959
        %v1961 = vpop.f32.mrb[0].mxu0
        %v1962 = vadd.f32 %v1823, %v1961
        %v1963 = vpop.f32.mrb[0].mxu0
        %v1964 = vadd.f32 %v1825, %v1963
        %1965 = vmatprep.mubr.f32.mxu0 0.0
        %v1966 = vand.u32 %v485, 4294901760
        %1967 = vmatmul.mubr.f32.gmra.mrb[0].mxu0 %v1966
        %v1968 = vpop.f32.mrb[0].mxu0
        %v1969 = vadd.f32 %v1832, %v1968
        %v1970 = vpop.f32.mrb[0].mxu0
        %v1971 = vadd.f32 %v1834, %v1970
        %1972 = vmatprep.mubr.f32.mxu0 0.0
        %v1973 = vand.u32 %v488, 4294901760
        %1974 = vmatmul.mubr.f32.gmra.mrb[0].mxu0 %v1973
        %v1975 = vpop.f32.mrb[0].mxu0
        %v1976 = vadd.f32 %v1841, %v1975
        %v1977 = vpop.f32.mrb[0].mxu0
        %v1978 = vadd.f32 %v1843, %v1977
        %1979 = vmatprep.mubr.f32.mxu0 0.0
        %v1980 = vand.u32 %v491, 4294901760
        %1981 = vmatmul.mubr.f32.gmra.mrb[0].mxu0 %v1980
        %v1982 = vpop.f32.mrb[0].mxu0
        %v1983 = vadd.f32 %v1850, %v1982
        %v1984 = vpop.f32.mrb[0].mxu0
        %v1985 = vadd.f32 %v1852, %v1984
        %1986 = vmatprep.mubr.f32.mxu0 0.0
        %v1987 = vand.u32 %v494, 4294901760
        %1988 = vmatmul.mubr.f32.gmra.mrb[0].mxu0 %v1987
        %v1989 = vpop.f32.mrb[0].mxu0
        %v1990 = vadd.f32 %v1859, %v1989
        %v1991 = vpop.f32.mrb[0].mxu0
        %v1992 = vadd.f32 %v1861, %v1991
        %1993 = vmatprep.mubr.f32.mxu0 0.0
        %v1994 = vand.u32 %v497, 4294901760
        %1995 = vmatmul.mubr.f32.gmra.mrb[0].mxu0 %v1994
        %v1996 = vpop.f32.mrb[0].mxu0
        %v1997 = vadd.f32 %v1868, %v1996
        %v1998 = vpop.f32.mrb[0].mxu0
        %v1999 = vadd.f32 %v1870, %v1998
        %2000 = vmatprep.mubr.f32.mxu0 0.0
        %v2001 = vand.u32 %v500, 4294901760
        %2002 = vmatmul.mubr.f32.gmra.mrb[0].mxu0 %v2001
        %v2003 = vpop.f32.mrb[0].mxu0
        %v2004 = vadd.f32 %v1877, %v2003
        %v2005 = vpop.f32.mrb[0].mxu0
        %v2006 = vadd.f32 %v1879, %v2005
        %2007 = vdwg.mxu0
        %v2008 = vand.u32 %v513, 4294901760
        %2009 = vmatprep.subr.mxu0 %v2008
        %v2010 = vand.u32 %v510, 4294901760
        %2011 = vmatpush1.msra.mxu0 %v2010
        %2012 = vmatprep.subr.mxu0 0.0
        %2013 = vmatpush1.msra.mxu0 0.0
        %2014 = vmatprep.subr.mxu0 0.0
        %2015 = vmatpush1.msra.mxu0 0.0
        %2016 = vmatprep.subr.mxu0 0.0
        %2017 = vmatpush1.msra.mxu0 0.0
        %2018 = vmatprep.subr.mxu0 0.0
        %2019 = vmatpush1.msra.mxu0 0.0
        %2020 = vmatprep.subr.mxu0 0.0
        %2021 = vmatpush1.msra.mxu0 0.0
        %2022 = vmatprep.subr.mxu0 0.0
        %2023 = vmatpush1.msra.mxu0 0.0
        %2024 = vmatprep.subr.mxu0 0.0
        %2025 = vmatpush1.msra.mxu0 0.0
        %2026 = vmatprep.subr.mxu0 0.0
        %2027 = vmatpush1.msra.mxu0 0.0
        %2028 = vmatprep.subr.mxu0 0.0
        %2029 = vmatpush1.msra.mxu0 0.0
        %2030 = vmatprep.subr.mxu0 0.0
        %2031 = vmatpush1.msra.mxu0 0.0
        %2032 = vmatprep.subr.mxu0 0.0
        %2033 = vmatpush1.msra.mxu0 0.0
        %2034 = vmatprep.subr.mxu0 0.0
        %2035 = vmatpush1.msra.mxu0 0.0
        %2036 = vmatprep.subr.mxu0 0.0
        %2037 = vmatpush1.msra.mxu0 0.0
        %2038 = vmatprep.subr.mxu0 0.0
        %2039 = vmatpush1.msra.mxu0 0.0
        %2040 = vmatprep.subr.mxu0 0.0
        %2041 = vmatpush1.msra.mxu0 0.0
        %2042 = vmatprep.subr.mxu0 0.0
        %2043 = vmatpush1.msra.mxu0 0.0
        %2044 = vmatprep.subr.mxu0 0.0
        %2045 = vmatpush1.msra.mxu0 0.0
        %2046 = vmatprep.subr.mxu0 0.0
        %2047 = vmatpush1.msra.mxu0 0.0
        %2048 = vmatprep.subr.mxu0 0.0
        %2049 = vmatpush1.msra.mxu0 0.0
        %2050 = vmatprep.subr.mxu0 0.0
        %2051 = vmatpush1.msra.mxu0 0.0
        %2052 = vmatprep.subr.mxu0 0.0
        %2053 = vmatpush1.msra.mxu0 0.0
        %2054 = vmatprep.subr.mxu0 0.0
        %2055 = vmatpush1.msra.mxu0 0.0
        %2056 = vmatprep.subr.mxu0 0.0
        %2057 = vmatpush1.msra.mxu0 0.0
        %2058 = vmatprep.subr.mxu0 0.0
        %2059 = vmatpush1.msra.mxu0 0.0
        %2060 = vmatprep.subr.mxu0 0.0
        %2061 = vmatpush1.msra.mxu0 0.0
        %2062 = vmatprep.subr.mxu0 0.0
        %2063 = vmatpush1.msra.mxu0 0.0
        %2064 = vmatprep.subr.mxu0 0.0
        %2065 = vmatpush1.msra.mxu0 0.0
        %2066 = vmatprep.subr.mxu0 0.0
        %2067 = vmatpush1.msra.mxu0 0.0
        %2068 = vmatprep.subr.mxu0 0.0
        %2069 = vmatpush1.msra.mxu0 0.0
        %2070 = vmatprep.subr.mxu0 0.0
        %2071 = vmatpush1.msra.mxu0 0.0
        %2072 = vmatprep.subr.mxu0 0.0
        %2073 = vmatpush1.msra.mxu0 0.0
        %2074 = vmatprep.mubr.f32.mxu0 0.0
        %v2075 = vand.u32 %v479, 4294901760
        %2076 = vmatmul.mubr.f32.gmra.mrb[0].mxu0 %v2075
        %v2077 = vpop.f32.mrb[0].mxu0
        %v2078 = vadd.f32 %v1955, %v2077
        %v2079 = vpop.f32.mrb[0].mxu0
        %v2080 = vadd.f32 %v1957, %v2079
        %2081 = vmatprep.mubr.f32.mxu0 0.0
        %v2082 = vand.u32 %v482, 4294901760
        %2083 = vmatmul.mubr.f32.gmra.mrb[0].mxu0 %v2082
        %v2084 = vpop.f32.mrb[0].mxu0
        %v2085 = vadd.f32 %v1962, %v2084
        %v2086 = vpop.f32.mrb[0].mxu0
        %v2087 = vadd.f32 %v1964, %v2086
        %2088 = vmatprep.mubr.f32.mxu0 0.0
        %v2089 = vand.u32 %v485, 4294901760
        %2090 = vmatmul.mubr.f32.gmra.mrb[0].mxu0 %v2089
        %v2091 = vpop.f32.mrb[0].mxu0
        %v2092 = vadd.f32 %v1969, %v2091
        %v2093 = vpop.f32.mrb[0].mxu0
        %v2094 = vadd.f32 %v1971, %v2093
        %2095 = vmatprep.mubr.f32.mxu0 0.0
        %v2096 = vand.u32 %v488, 4294901760
        %2097 = vmatmul.mubr.f32.gmra.mrb[0].mxu0 %v2096
        %v2098 = vpop.f32.mrb[0].mxu0
        %v2099 = vadd.f32 %v1976, %v2098
        %v2100 = vpop.f32.mrb[0].mxu0
        %v2101 = vadd.f32 %v1978, %v2100
        %2102 = vmatprep.mubr.f32.mxu0 0.0
        %v2103 = vand.u32 %v491, 4294901760
        %2104 = vmatmul.mubr.f32.gmra.mrb[0].mxu0 %v2103
        %v2105 = vpop.f32.mrb[0].mxu0
        %v2106 = vadd.f32 %v1983, %v2105
        %v2107 = vpop.f32.mrb[0].mxu0
        %v2108 = vadd.f32 %v1985, %v2107
        %2109 = vmatprep.mubr.f32.mxu0 0.0
        %v2110 = vand.u32 %v494, 4294901760
        %2111 = vmatmul.mubr.f32.gmra.mrb[0].mxu0 %v2110
        %v2112 = vpop.f32.mrb[0].mxu0
        %v2113 = vadd.f32 %v1990, %v2112
        %v2114 = vpop.f32.mrb[0].mxu0
        %v2115 = vadd.f32 %v1992, %v2114
        %2116 = vmatprep.mubr.f32.mxu0 0.0
        %v2117 = vand.u32 %v497, 4294901760
        %2118 = vmatmul.mubr.f32.gmra.mrb[0].mxu0 %v2117
        %v2119 = vpop.f32.mrb[0].mxu0
        %v2120 = vadd.f32 %v1997, %v2119
        %v2121 = vpop.f32.mrb[0].mxu0
        %v2122 = vadd.f32 %v1999, %v2121
        %2123 = vmatprep.mubr.f32.mxu0 0.0
        %v2124 = vand.u32 %v500, 4294901760
        %2125 = vmatmul.mubr.f32.gmra.mrb[0].mxu0 %v2124
        %v2126 = vpop.f32.mrb[0].mxu0
        %v2127 = vadd.f32 %v2004, %v2126
        %v2128 = vpop.f32.mrb[0].mxu0
        %v2129 = vadd.f32 %v2006, %v2128
        %2130 = vdwg.mxu0
        %v2131 = vmax.f32 %v1270, 0.0
        %v2132 = vmax.f32 %v1272, 0.0
        %v2133 = vmax.f32 %v2078, 0.0
        %v2134 = vmax.f32 %v2080, 0.0
        %v2135 = vmax.f32 %v1277, 0.0
        %v2136 = vmax.f32 %v1279, 0.0
        %v2137 = vmax.f32 %v2085, 0.0
        %v2138 = vmax.f32 %v2087, 0.0
        %v2139 = vmax.f32 %v1284, 0.0
        %v2140 = vmax.f32 %v1286, 0.0
        %v2141 = vmax.f32 %v2092, 0.0
        %v2142 = vmax.f32 %v2094, 0.0
        %v2143 = vmax.f32 %v1291, 0.0
        %v2144 = vmax.f32 %v1293, 0.0
        %v2145 = vmax.f32 %v2099, 0.0
        %v2146 = vmax.f32 %v2101, 0.0
        %v2147 = vmax.f32 %v1298, 0.0
        %v2148 = vmax.f32 %v1300, 0.0
        %v2149 = vmax.f32 %v2106, 0.0
        %v2150 = vmax.f32 %v2108, 0.0
        %v2151 = vmax.f32 %v1305, 0.0
        %v2152 = vmax.f32 %v1307, 0.0
        %v2153 = vmax.f32 %v2113, 0.0
        %v2154 = vmax.f32 %v2115, 0.0
        %v2155 = vmax.f32 %v1312, 0.0
        %v2156 = vmax.f32 %v1314, 0.0
        %v2157 = vmax.f32 %v2120, 0.0
        %v2158 = vmax.f32 %v2122, 0.0
        %v2159 = vmax.f32 %v1319, 0.0
        %v2160 = vmax.f32 %v1321, 0.0
        %v2161 = vmax.f32 %v2127, 0.0
        %v2162 = vmax.f32 %v2129, 0.0
        %v2163 = vlaneseq
        %v2164 = vshrl.u32 %v2163, 7
        %v2165 = vadd.s32 %v2164, 8
        %v2166 = vadd.s32 %v2164, 16
        %v2167 = vadd.s32 %v2164, 24
        %v2168 = vadd.s32 %v2164, 32
        %v2169 = vadd.s32 %v2164, 40
        %v2170 = vadd.s32 %v2164, 48
        %v2171 = vadd.s32 %v2164, 56
        %v2204 = vand.u32 %v2131, 4294967232
        %v2205 = vand.u32 %v2132, 4294967232
        %v2206 = vand.u32 %v2133, 4294967232
        %v2207 = vand.u32 %v2134, 4294967232
        %v2208 = vand.u32 %v2135, 4294967232
        %v2209 = vand.u32 %v2136, 4294967232
        %v2210 = vand.u32 %v2137, 4294967232
        %v2211 = vand.u32 %v2138, 4294967232
        %v2212 = vand.u32 %v2139, 4294967232
        %v2213 = vand.u32 %v2140, 4294967232
        %v2214 = vand.u32 %v2141, 4294967232
        %v2215 = vand.u32 %v2142, 4294967232
        %v2216 = vand.u32 %v2143, 4294967232
        %v2217 = vand.u32 %v2144, 4294967232
        %v2218 = vand.u32 %v2145, 4294967232
        %v2219 = vand.u32 %v2146, 4294967232
        %v2220 = vand.u32 %v2147, 4294967232
        %v2221 = vand.u32 %v2148, 4294967232
        %v2222 = vand.u32 %v2149, 4294967232
        %v2223 = vand.u32 %v2150, 4294967232
        %v2224 = vand.u32 %v2151, 4294967232
        %v2225 = vand.u32 %v2152, 4294967232
        %v2226 = vand.u32 %v2153, 4294967232
        %v2227 = vand.u32 %v2154, 4294967232
        %v2228 = vand.u32 %v2155, 4294967232
        %v2229 = vand.u32 %v2156, 4294967232
        %v2230 = vand.u32 %v2157, 4294967232
        %v2231 = vand.u32 %v2158, 4294967232
        %v2232 = vand.u32 %v2159, 4294967232
        %v2233 = vand.u32 %v2160, 4294967232
        %v2234 = vand.u32 %v2161, 4294967232
        %v2235 = vand.u32 %v2162, 4294967232
        %v2236 = vor.u32 %v2204, %v2164
        %v2237 = vor.u32 %v2205, %v2164
        %v2238 = vor.u32 %v2206, %v2164
        %v2239 = vor.u32 %v2207, %v2164
        %v2240 = vor.u32 %v2208, %v2165
        %v2241 = vor.u32 %v2209, %v2165
        %v2242 = vor.u32 %v2210, %v2165
        %v2243 = vor.u32 %v2211, %v2165
        %v2244 = vor.u32 %v2212, %v2166
        %v2245 = vor.u32 %v2213, %v2166
        %v2246 = vor.u32 %v2214, %v2166
        %v2247 = vor.u32 %v2215, %v2166
        %v2248 = vor.u32 %v2216, %v2167
        %v2249 = vor.u32 %v2217, %v2167
        %v2250 = vor.u32 %v2218, %v2167
        %v2251 = vor.u32 %v2219, %v2167
        %v2252 = vor.u32 %v2220, %v2168
        %v2253 = vor.u32 %v2221, %v2168
        %v2254 = vor.u32 %v2222, %v2168
        %v2255 = vor.u32 %v2223, %v2168
        %v2256 = vor.u32 %v2224, %v2169
        %v2257 = vor.u32 %v2225, %v2169
        %v2258 = vor.u32 %v2226, %v2169
        %v2259 = vor.u32 %v2227, %v2169
        %v2260 = vor.u32 %v2228, %v2170
        %v2261 = vor.u32 %v2229, %v2170
        %v2262 = vor.u32 %v2230, %v2170
        %v2263 = vor.u32 %v2231, %v2170
        %v2264 = vor.u32 %v2232, %v2171
        %v2265 = vor.u32 %v2233, %v2171
        %v2266 = vor.u32 %v2234, %v2171
        %v2267 = vor.u32 %v2235, %v2171
        %vm2268 = vcmp.lt.s32.totalorder %v2236, %v2240
        %v2269 = vsel %vm2268, %v2236, %v2240
        %vm2270 = vcmp.lt.s32.totalorder %v2269, %v2244
        %v2271 = vsel %vm2270, %v2269, %v2244
        %vm2272 = vcmp.lt.s32.totalorder %v2271, %v2248
        %v2273 = vsel %vm2272, %v2271, %v2248
        %vm2274 = vcmp.lt.s32.totalorder %v2273, %v2252
        %v2275 = vsel %vm2274, %v2273, %v2252
        %vm2276 = vcmp.lt.s32.totalorder %v2275, %v2256
        %v2277 = vsel %vm2276, %v2275, %v2256
        %vm2278 = vcmp.lt.s32.totalorder %v2277, %v2260
        %v2279 = vsel %vm2278, %v2277, %v2260
        %vm2280 = vcmp.lt.s32.totalorder %v2279, %v2264
        %v2281 = vsel %vm2280, %v2279, %v2264
        %v2282 = vrot.slane %v2281, 4
        %vm2283 = vcmp.lt.s32.totalorder %v2281, %v2282
        %v2284 = vsel %vm2283, %v2281, %v2282
        %v2285 = vrot.slane %v2284, 2
        %vm2286 = vcmp.lt.s32.totalorder %v2284, %v2285
        %v2287 = vsel %vm2286, %v2284, %v2285
        %v2288 = vrot.slane %v2287, 1
        %vm2289 = vcmp.lt.s32.totalorder %v2287, %v2288
        %v2290 = vsel %vm2289, %v2287, %v2288
        %vm2291 = vcmp.lt.s32.totalorder %v2237, %v2241
        %v2292 = vsel %vm2291, %v2237, %v2241
        %vm2293 = vcmp.lt.s32.totalorder %v2292, %v2245
        %v2294 = vsel %vm2293, %v2292, %v2245
        %vm2295 = vcmp.lt.s32.totalorder %v2294, %v2249
        %v2296 = vsel %vm2295, %v2294, %v2249
        %vm2297 = vcmp.lt.s32.totalorder %v2296, %v2253
        %v2298 = vsel %vm2297, %v2296, %v2253
        %vm2299 = vcmp.lt.s32.totalorder %v2298, %v2257
        %v2300 = vsel %vm2299, %v2298, %v2257
        %vm2301 = vcmp.lt.s32.totalorder %v2300, %v2261
        %v2302 = vsel %vm2301, %v2300, %v2261
        %vm2303 = vcmp.lt.s32.totalorder %v2302, %v2265
        %v2304 = vsel %vm2303, %v2302, %v2265
        %v2305 = vrot.slane %v2304, 4
        %vm2306 = vcmp.lt.s32.totalorder %v2304, %v2305
        %v2307 = vsel %vm2306, %v2304, %v2305
        %v2308 = vrot.slane %v2307, 2
        %vm2309 = vcmp.lt.s32.totalorder %v2307, %v2308
        %v2310 = vsel %vm2309, %v2307, %v2308
        %v2311 = vrot.slane %v2310, 1
        %vm2312 = vcmp.lt.s32.totalorder %v2310, %v2311
        %v2313 = vsel %vm2312, %v2310, %v2311
        %vm2314 = vcmp.lt.s32.totalorder %v2238, %v2242
        %v2315 = vsel %vm2314, %v2238, %v2242
        %vm2316 = vcmp.lt.s32.totalorder %v2315, %v2246
        %v2317 = vsel %vm2316, %v2315, %v2246
        %vm2318 = vcmp.lt.s32.totalorder %v2317, %v2250
        %v2319 = vsel %vm2318, %v2317, %v2250
        %vm2320 = vcmp.lt.s32.totalorder %v2319, %v2254
        %v2321 = vsel %vm2320, %v2319, %v2254
        %vm2322 = vcmp.lt.s32.totalorder %v2321, %v2258
        %v2323 = vsel %vm2322, %v2321, %v2258
        %vm2324 = vcmp.lt.s32.totalorder %v2323, %v2262
        %v2325 = vsel %vm2324, %v2323, %v2262
        %vm2326 = vcmp.lt.s32.totalorder %v2325, %v2266
        %v2327 = vsel %vm2326, %v2325, %v2266
        %v2328 = vrot.slane %v2327, 4
        %vm2329 = vcmp.lt.s32.totalorder %v2327, %v2328
        %v2330 = vsel %vm2329, %v2327, %v2328
        %v2331 = vrot.slane %v2330, 2
        %vm2332 = vcmp.lt.s32.totalorder %v2330, %v2331
        %v2333 = vsel %vm2332, %v2330, %v2331
        %v2334 = vrot.slane %v2333, 1
        %vm2335 = vcmp.lt.s32.totalorder %v2333, %v2334
        %v2336 = vsel %vm2335, %v2333, %v2334
        %vm2337 = vcmp.lt.s32.totalorder %v2239, %v2243
        %v2338 = vsel %vm2337, %v2239, %v2243
        %vm2339 = vcmp.lt.s32.totalorder %v2338, %v2247
        %v2340 = vsel %vm2339, %v2338, %v2247
        %vm2341 = vcmp.lt.s32.totalorder %v2340, %v2251
        %v2342 = vsel %vm2341, %v2340, %v2251
        %vm2343 = vcmp.lt.s32.totalorder %v2342, %v2255
        %v2344 = vsel %vm2343, %v2342, %v2255
        %vm2345 = vcmp.lt.s32.totalorder %v2344, %v2259
        %v2346 = vsel %vm2345, %v2344, %v2259
        %vm2347 = vcmp.lt.s32.totalorder %v2346, %v2263
        %v2348 = vsel %vm2347, %v2346, %v2263
        %vm2349 = vcmp.lt.s32.totalorder %v2348, %v2267
        %v2350 = vsel %vm2349, %v2348, %v2267
        %v2351 = vrot.slane %v2350, 4
        %vm2352 = vcmp.lt.s32.totalorder %v2350, %v2351
        %v2353 = vsel %vm2352, %v2350, %v2351
        %v2354 = vrot.slane %v2353, 2
        %vm2355 = vcmp.lt.s32.totalorder %v2353, %v2354
        %v2356 = vsel %vm2355, %v2353, %v2354
        %v2357 = vrot.slane %v2356, 1
        %vm2358 = vcmp.lt.s32.totalorder %v2356, %v2357
        %v2359 = vsel %vm2358, %v2356, %v2357
        %v2360 = vand.u32 %v2290, 4294967232
        %v2361 = vand.u32 %v2313, 4294967232
        %v2362 = vand.u32 %v2336, 4294967232
        %v2363 = vand.u32 %v2359, 4294967232
        %v2368 = vadd.f32 %v2360, 1e-08
        %v2369 = vadd.f32 %v2361, 1e-08
        %v2370 = vadd.f32 %v2362, 1e-08
        %v2371 = vadd.f32 %v2363, 1e-08
        %v2372 = vrcp.pop %v2368
        %v2373 = vrcp.pop %v2369
        %v2374 = vrcp.pop %v2370
        %v2375 = vrcp.pop %v2371
        %vm2376 = vcmp.eq.s32.totalorder %v2236, %v2290
        %vm2377 = vcmp.eq.s32.totalorder %v2237, %v2313
        %vm2378 = vcmp.eq.s32.totalorder %v2238, %v2336
        %vm2379 = vcmp.eq.s32.totalorder %v2239, %v2359
        %vm2380 = vcmp.eq.s32.totalorder %v2240, %v2290
        %vm2381 = vcmp.eq.s32.totalorder %v2241, %v2313
        %vm2382 = vcmp.eq.s32.totalorder %v2242, %v2336
        %vm2383 = vcmp.eq.s32.totalorder %v2243, %v2359
        %vm2384 = vcmp.eq.s32.totalorder %v2244, %v2290
        %vm2385 = vcmp.eq.s32.totalorder %v2245, %v2313
        %vm2386 = vcmp.eq.s32.totalorder %v2246, %v2336
        %vm2387 = vcmp.eq.s32.totalorder %v2247, %v2359
        %vm2388 = vcmp.eq.s32.totalorder %v2248, %v2290
        %vm2389 = vcmp.eq.s32.totalorder %v2249, %v2313
        %vm2390 = vcmp.eq.s32.totalorder %v2250, %v2336
        %vm2391 = vcmp.eq.s32.totalorder %v2251, %v2359
        %vm2392 = vcmp.eq.s32.totalorder %v2252, %v2290
        %vm2393 = vcmp.eq.s32.totalorder %v2253, %v2313
        %vm2394 = vcmp.eq.s32.totalorder %v2254, %v2336
        %vm2395 = vcmp.eq.s32.totalorder %v2255, %v2359
        %vm2396 = vcmp.eq.s32.totalorder %v2256, %v2290
        %vm2397 = vcmp.eq.s32.totalorder %v2257, %v2313
        %vm2398 = vcmp.eq.s32.totalorder %v2258, %v2336
        %vm2399 = vcmp.eq.s32.totalorder %v2259, %v2359
        %vm2400 = vcmp.eq.s32.totalorder %v2260, %v2290
        %vm2401 = vcmp.eq.s32.totalorder %v2261, %v2313
        %vm2402 = vcmp.eq.s32.totalorder %v2262, %v2336
        %vm2403 = vcmp.eq.s32.totalorder %v2263, %v2359
        %vm2404 = vcmp.eq.s32.totalorder %v2264, %v2290
        %vm2405 = vcmp.eq.s32.totalorder %v2265, %v2313
        %vm2406 = vcmp.eq.s32.totalorder %v2266, %v2336
        %vm2407 = vcmp.eq.s32.totalorder %v2267, %v2359
        %v2408 = vsel %vm2376, %v2372, 0.0
        %v2409 = vsel %vm2377, %v2373, 0.0
        %v2410 = vsel %vm2378, %v2374, 0.0
        %v2411 = vsel %vm2379, %v2375, 0.0
        %v2412 = vsel %vm2380, %v2372, 0.0
        %v2413 = vsel %vm2381, %v2373, 0.0
        %v2414 = vsel %vm2382, %v2374, 0.0
        %v2415 = vsel %vm2383, %v2375, 0.0
        %v2416 = vsel %vm2384, %v2372, 0.0
        %v2417 = vsel %vm2385, %v2373, 0.0
        %v2418 = vsel %vm2386, %v2374, 0.0
        %v2419 = vsel %vm2387, %v2375, 0.0
        %v2420 = vsel %vm2388, %v2372, 0.0
        %v2421 = vsel %vm2389, %v2373, 0.0
        %v2422 = vsel %vm2390, %v2374, 0.0
        %v2423 = vsel %vm2391, %v2375, 0.0
        %v2424 = vsel %vm2392, %v2372, 0.0
        %v2425 = vsel %vm2393, %v2373, 0.0
        %v2426 = vsel %vm2394, %v2374, 0.0
        %v2427 = vsel %vm2395, %v2375, 0.0
        %v2428 = vsel %vm2396, %v2372, 0.0
        %v2429 = vsel %vm2397, %v2373, 0.0
        %v2430 = vsel %vm2398, %v2374, 0.0
        %v2431 = vsel %vm2399, %v2375, 0.0
        %v2432 = vsel %vm2400, %v2372, 0.0
        %v2433 = vsel %vm2401, %v2373, 0.0
        %v2434 = vsel %vm2402, %v2374, 0.0
        %v2435 = vsel %vm2403, %v2375, 0.0
        %v2436 = vsel %vm2404, %v2372, 0.0
        %v2437 = vsel %vm2405, %v2373, 0.0
        %v2438 = vsel %vm2406, %v2374, 0.0
        %v2439 = vsel %vm2407, %v2375, 0.0
        %v2440 = vadd.f32 %v2408, 0.0
        %v2441 = vadd.f32 %v2409, 0.0
        %v2442 = vadd.f32 %v2410, 0.0
        %v2443 = vadd.f32 %v2411, 0.0
        %v2444 = vadd.f32 %v2412, 0.0
        %v2445 = vadd.f32 %v2413, 0.0
        %v2446 = vadd.f32 %v2414, 0.0
        %v2447 = vadd.f32 %v2415, 0.0
        %v2448 = vadd.f32 %v2416, 0.0
        %v2449 = vadd.f32 %v2417, 0.0
        %v2450 = vadd.f32 %v2418, 0.0
        %v2451 = vadd.f32 %v2419, 0.0
        %v2452 = vadd.f32 %v2420, 0.0
        %v2453 = vadd.f32 %v2421, 0.0
        %v2454 = vadd.f32 %v2422, 0.0
        %v2455 = vadd.f32 %v2423, 0.0
        %v2456 = vadd.f32 %v2424, 0.0
        %v2457 = vadd.f32 %v2425, 0.0
        %v2458 = vadd.f32 %v2426, 0.0
        %v2459 = vadd.f32 %v2427, 0.0
        %v2460 = vadd.f32 %v2428, 0.0
        %v2461 = vadd.f32 %v2429, 0.0
        %v2462 = vadd.f32 %v2430, 0.0
        %v2463 = vadd.f32 %v2431, 0.0
        %v2464 = vadd.f32 %v2432, 0.0
        %v2465 = vadd.f32 %v2433, 0.0
        %v2466 = vadd.f32 %v2434, 0.0
        %v2467 = vadd.f32 %v2435, 0.0
        %v2468 = vadd.f32 %v2436, 0.0
        %v2469 = vadd.f32 %v2437, 0.0
        %v2470 = vadd.f32 %v2438, 0.0
        %v2471 = vadd.f32 %v2439, 0.0
        %v2472 = vadd.f32 %v2372, 0.0
        %v2473 = vadd.f32 %v2373, 0.0
        %v2474 = vadd.f32 %v2374, 0.0
        %v2475 = vadd.f32 %v2375, 0.0
        %v2476 = vsel %vm2376, 2147483647, %v2236
        %v2477 = vsel %vm2377, 2147483647, %v2237
        %v2478 = vsel %vm2378, 2147483647, %v2238
        %v2479 = vsel %vm2379, 2147483647, %v2239
        %v2480 = vsel %vm2380, 2147483647, %v2240
        %v2481 = vsel %vm2381, 2147483647, %v2241
        %v2482 = vsel %vm2382, 2147483647, %v2242
        %v2483 = vsel %vm2383, 2147483647, %v2243
        %v2484 = vsel %vm2384, 2147483647, %v2244
        %v2485 = vsel %vm2385, 2147483647, %v2245
        %v2486 = vsel %vm2386, 2147483647, %v2246
        %v2487 = vsel %vm2387, 2147483647, %v2247
        %v2488 = vsel %vm2388, 2147483647, %v2248
        %v2489 = vsel %vm2389, 2147483647, %v2249
        %v2490 = vsel %vm2390, 2147483647, %v2250
        %v2491 = vsel %vm2391, 2147483647, %v2251
        %v2492 = vsel %vm2392, 2147483647, %v2252
        %v2493 = vsel %vm2393, 2147483647, %v2253
        %v2494 = vsel %vm2394, 2147483647, %v2254
        %v2495 = vsel %vm2395, 2147483647, %v2255
        %v2496 = vsel %vm2396, 2147483647, %v2256
        %v2497 = vsel %vm2397, 2147483647, %v2257
        %v2498 = vsel %vm2398, 2147483647, %v2258
        %v2499 = vsel %vm2399, 2147483647, %v2259
        %v2500 = vsel %vm2400, 2147483647, %v2260
        %v2501 = vsel %vm2401, 2147483647, %v2261
        %v2502 = vsel %vm2402, 2147483647, %v2262
        %v2503 = vsel %vm2403, 2147483647, %v2263
        %v2504 = vsel %vm2404, 2147483647, %v2264
        %v2505 = vsel %vm2405, 2147483647, %v2265
        %v2506 = vsel %vm2406, 2147483647, %v2266
        %v2507 = vsel %vm2407, 2147483647, %v2267
        %vm2508 = vcmp.lt.s32.totalorder %v2476, %v2480
        %v2509 = vsel %vm2508, %v2476, %v2480
        %vm2510 = vcmp.lt.s32.totalorder %v2509, %v2484
        %v2511 = vsel %vm2510, %v2509, %v2484
        %vm2512 = vcmp.lt.s32.totalorder %v2511, %v2488
        %v2513 = vsel %vm2512, %v2511, %v2488
        %vm2514 = vcmp.lt.s32.totalorder %v2513, %v2492
        %v2515 = vsel %vm2514, %v2513, %v2492
        %vm2516 = vcmp.lt.s32.totalorder %v2515, %v2496
        %v2517 = vsel %vm2516, %v2515, %v2496
        %vm2518 = vcmp.lt.s32.totalorder %v2517, %v2500
        %v2519 = vsel %vm2518, %v2517, %v2500
        %vm2520 = vcmp.lt.s32.totalorder %v2519, %v2504
        %v2521 = vsel %vm2520, %v2519, %v2504
        %v2522 = vrot.slane %v2521, 4
        %vm2523 = vcmp.lt.s32.totalorder %v2521, %v2522
        %v2524 = vsel %vm2523, %v2521, %v2522
        %v2525 = vrot.slane %v2524, 2
        %vm2526 = vcmp.lt.s32.totalorder %v2524, %v2525
        %v2527 = vsel %vm2526, %v2524, %v2525
        %v2528 = vrot.slane %v2527, 1
        %vm2529 = vcmp.lt.s32.totalorder %v2527, %v2528
        %v2530 = vsel %vm2529, %v2527, %v2528
        %vm2531 = vcmp.lt.s32.totalorder %v2477, %v2481
        %v2532 = vsel %vm2531, %v2477, %v2481
        %vm2533 = vcmp.lt.s32.totalorder %v2532, %v2485
        %v2534 = vsel %vm2533, %v2532, %v2485
        %vm2535 = vcmp.lt.s32.totalorder %v2534, %v2489
        %v2536 = vsel %vm2535, %v2534, %v2489
        %vm2537 = vcmp.lt.s32.totalorder %v2536, %v2493
        %v2538 = vsel %vm2537, %v2536, %v2493
        %vm2539 = vcmp.lt.s32.totalorder %v2538, %v2497
        %v2540 = vsel %vm2539, %v2538, %v2497
        %vm2541 = vcmp.lt.s32.totalorder %v2540, %v2501
        %v2542 = vsel %vm2541, %v2540, %v2501
        %vm2543 = vcmp.lt.s32.totalorder %v2542, %v2505
        %v2544 = vsel %vm2543, %v2542, %v2505
        %v2545 = vrot.slane %v2544, 4
        %vm2546 = vcmp.lt.s32.totalorder %v2544, %v2545
        %v2547 = vsel %vm2546, %v2544, %v2545
        %v2548 = vrot.slane %v2547, 2
        %vm2549 = vcmp.lt.s32.totalorder %v2547, %v2548
        %v2550 = vsel %vm2549, %v2547, %v2548
        %v2551 = vrot.slane %v2550, 1
        %vm2552 = vcmp.lt.s32.totalorder %v2550, %v2551
        %v2553 = vsel %vm2552, %v2550, %v2551
        %vm2554 = vcmp.lt.s32.totalorder %v2478, %v2482
        %v2555 = vsel %vm2554, %v2478, %v2482
        %vm2556 = vcmp.lt.s32.totalorder %v2555, %v2486
        %v2557 = vsel %vm2556, %v2555, %v2486
        %vm2558 = vcmp.lt.s32.totalorder %v2557, %v2490
        %v2559 = vsel %vm2558, %v2557, %v2490
        %vm2560 = vcmp.lt.s32.totalorder %v2559, %v2494
        %v2561 = vsel %vm2560, %v2559, %v2494
        %vm2562 = vcmp.lt.s32.totalorder %v2561, %v2498
        %v2563 = vsel %vm2562, %v2561, %v2498
        %vm2564 = vcmp.lt.s32.totalorder %v2563, %v2502
        %v2565 = vsel %vm2564, %v2563, %v2502
        %vm2566 = vcmp.lt.s32.totalorder %v2565, %v2506
        %v2567 = vsel %vm2566, %v2565, %v2506
        %v2568 = vrot.slane %v2567, 4
        %vm2569 = vcmp.lt.s32.totalorder %v2567, %v2568
        %v2570 = vsel %vm2569, %v2567, %v2568
        %v2571 = vrot.slane %v2570, 2
        %vm2572 = vcmp.lt.s32.totalorder %v2570, %v2571
        %v2573 = vsel %vm2572, %v2570, %v2571
        %v2574 = vrot.slane %v2573, 1
        %vm2575 = vcmp.lt.s32.totalorder %v2573, %v2574
        %v2576 = vsel %vm2575, %v2573, %v2574
        %vm2577 = vcmp.lt.s32.totalorder %v2479, %v2483
        %v2578 = vsel %vm2577, %v2479, %v2483
        %vm2579 = vcmp.lt.s32.totalorder %v2578, %v2487
        %v2580 = vsel %vm2579, %v2578, %v2487
        %vm2581 = vcmp.lt.s32.totalorder %v2580, %v2491
        %v2582 = vsel %vm2581, %v2580, %v2491
        %vm2583 = vcmp.lt.s32.totalorder %v2582, %v2495
        %v2584 = vsel %vm2583, %v2582, %v2495
        %vm2585 = vcmp.lt.s32.totalorder %v2584, %v2499
        %v2586 = vsel %vm2585, %v2584, %v2499
        %vm2587 = vcmp.lt.s32.totalorder %v2586, %v2503
        %v2588 = vsel %vm2587, %v2586, %v2503
        %vm2589 = vcmp.lt.s32.totalorder %v2588, %v2507
        %v2590 = vsel %vm2589, %v2588, %v2507
        %v2591 = vrot.slane %v2590, 4
        %vm2592 = vcmp.lt.s32.totalorder %v2590, %v2591
        %v2593 = vsel %vm2592, %v2590, %v2591
        %v2594 = vrot.slane %v2593, 2
        %vm2595 = vcmp.lt.s32.totalorder %v2593, %v2594
        %v2596 = vsel %vm2595, %v2593, %v2594
        %v2597 = vrot.slane %v2596, 1
        %vm2598 = vcmp.lt.s32.totalorder %v2596, %v2597
        %v2599 = vsel %vm2598, %v2596, %v2597
        %v2600 = vand.u32 %v2530, 4294967232
        %v2601 = vand.u32 %v2553, 4294967232
        %v2602 = vand.u32 %v2576, 4294967232
        %v2603 = vand.u32 %v2599, 4294967232
        %v2608 = vadd.f32 %v2600, 1e-08
        %v2609 = vadd.f32 %v2601, 1e-08
        %v2610 = vadd.f32 %v2602, 1e-08
        %v2611 = vadd.f32 %v2603, 1e-08
        %v2612 = vrcp.pop %v2608
        %v2613 = vrcp.pop %v2609
        %v2614 = vrcp.pop %v2610
        %v2615 = vrcp.pop %v2611
        %vm2616 = vcmp.eq.s32.totalorder %v2476, %v2530
        %vm2617 = vcmp.eq.s32.totalorder %v2477, %v2553
        %vm2618 = vcmp.eq.s32.totalorder %v2478, %v2576
        %vm2619 = vcmp.eq.s32.totalorder %v2479, %v2599
        %vm2620 = vcmp.eq.s32.totalorder %v2480, %v2530
        %vm2621 = vcmp.eq.s32.totalorder %v2481, %v2553
        %vm2622 = vcmp.eq.s32.totalorder %v2482, %v2576
        %vm2623 = vcmp.eq.s32.totalorder %v2483, %v2599
        %vm2624 = vcmp.eq.s32.totalorder %v2484, %v2530
        %vm2625 = vcmp.eq.s32.totalorder %v2485, %v2553
        %vm2626 = vcmp.eq.s32.totalorder %v2486, %v2576
        %vm2627 = vcmp.eq.s32.totalorder %v2487, %v2599
        %vm2628 = vcmp.eq.s32.totalorder %v2488, %v2530
        %vm2629 = vcmp.eq.s32.totalorder %v2489, %v2553
        %vm2630 = vcmp.eq.s32.totalorder %v2490, %v2576
        %vm2631 = vcmp.eq.s32.totalorder %v2491, %v2599
        %vm2632 = vcmp.eq.s32.totalorder %v2492, %v2530
        %vm2633 = vcmp.eq.s32.totalorder %v2493, %v2553
        %vm2634 = vcmp.eq.s32.totalorder %v2494, %v2576
        %vm2635 = vcmp.eq.s32.totalorder %v2495, %v2599
        %vm2636 = vcmp.eq.s32.totalorder %v2496, %v2530
        %vm2637 = vcmp.eq.s32.totalorder %v2497, %v2553
        %vm2638 = vcmp.eq.s32.totalorder %v2498, %v2576
        %vm2639 = vcmp.eq.s32.totalorder %v2499, %v2599
        %vm2640 = vcmp.eq.s32.totalorder %v2500, %v2530
        %vm2641 = vcmp.eq.s32.totalorder %v2501, %v2553
        %vm2642 = vcmp.eq.s32.totalorder %v2502, %v2576
        %vm2643 = vcmp.eq.s32.totalorder %v2503, %v2599
        %vm2644 = vcmp.eq.s32.totalorder %v2504, %v2530
        %vm2645 = vcmp.eq.s32.totalorder %v2505, %v2553
        %vm2646 = vcmp.eq.s32.totalorder %v2506, %v2576
        %vm2647 = vcmp.eq.s32.totalorder %v2507, %v2599
        %v2648 = vsel %vm2616, %v2612, 0.0
        %v2649 = vsel %vm2617, %v2613, 0.0
        %v2650 = vsel %vm2618, %v2614, 0.0
        %v2651 = vsel %vm2619, %v2615, 0.0
        %v2652 = vsel %vm2620, %v2612, 0.0
        %v2653 = vsel %vm2621, %v2613, 0.0
        %v2654 = vsel %vm2622, %v2614, 0.0
        %v2655 = vsel %vm2623, %v2615, 0.0
        %v2656 = vsel %vm2624, %v2612, 0.0
        %v2657 = vsel %vm2625, %v2613, 0.0
        %v2658 = vsel %vm2626, %v2614, 0.0
        %v2659 = vsel %vm2627, %v2615, 0.0
        %v2660 = vsel %vm2628, %v2612, 0.0
        %v2661 = vsel %vm2629, %v2613, 0.0
        %v2662 = vsel %vm2630, %v2614, 0.0
        %v2663 = vsel %vm2631, %v2615, 0.0
        %v2664 = vsel %vm2632, %v2612, 0.0
        %v2665 = vsel %vm2633, %v2613, 0.0
        %v2666 = vsel %vm2634, %v2614, 0.0
        %v2667 = vsel %vm2635, %v2615, 0.0
        %v2668 = vsel %vm2636, %v2612, 0.0
        %v2669 = vsel %vm2637, %v2613, 0.0
        %v2670 = vsel %vm2638, %v2614, 0.0
        %v2671 = vsel %vm2639, %v2615, 0.0
        %v2672 = vsel %vm2640, %v2612, 0.0
        %v2673 = vsel %vm2641, %v2613, 0.0
        %v2674 = vsel %vm2642, %v2614, 0.0
        %v2675 = vsel %vm2643, %v2615, 0.0
        %v2676 = vsel %vm2644, %v2612, 0.0
        %v2677 = vsel %vm2645, %v2613, 0.0
        %v2678 = vsel %vm2646, %v2614, 0.0
        %v2679 = vsel %vm2647, %v2615, 0.0
        %v2680 = vadd.f32 %v2440, %v2648
        %v2681 = vadd.f32 %v2441, %v2649
        %v2682 = vadd.f32 %v2442, %v2650
        %v2683 = vadd.f32 %v2443, %v2651
        %v2684 = vadd.f32 %v2444, %v2652
        %v2685 = vadd.f32 %v2445, %v2653
        %v2686 = vadd.f32 %v2446, %v2654
        %v2687 = vadd.f32 %v2447, %v2655
        %v2688 = vadd.f32 %v2448, %v2656
        %v2689 = vadd.f32 %v2449, %v2657
        %v2690 = vadd.f32 %v2450, %v2658
        %v2691 = vadd.f32 %v2451, %v2659
        %v2692 = vadd.f32 %v2452, %v2660
        %v2693 = vadd.f32 %v2453, %v2661
        %v2694 = vadd.f32 %v2454, %v2662
        %v2695 = vadd.f32 %v2455, %v2663
        %v2696 = vadd.f32 %v2456, %v2664
        %v2697 = vadd.f32 %v2457, %v2665
        %v2698 = vadd.f32 %v2458, %v2666
        %v2699 = vadd.f32 %v2459, %v2667
        %v2700 = vadd.f32 %v2460, %v2668
        %v2701 = vadd.f32 %v2461, %v2669
        %v2702 = vadd.f32 %v2462, %v2670
        %v2703 = vadd.f32 %v2463, %v2671
        %v2704 = vadd.f32 %v2464, %v2672
        %v2705 = vadd.f32 %v2465, %v2673
        %v2706 = vadd.f32 %v2466, %v2674
        %v2707 = vadd.f32 %v2467, %v2675
        %v2708 = vadd.f32 %v2468, %v2676
        %v2709 = vadd.f32 %v2469, %v2677
        %v2710 = vadd.f32 %v2470, %v2678
        %v2711 = vadd.f32 %v2471, %v2679
        %v2712 = vadd.f32 %v2472, %v2612
        %v2713 = vadd.f32 %v2473, %v2613
        %v2714 = vadd.f32 %v2474, %v2614
        %v2715 = vadd.f32 %v2475, %v2615
        %v2716 = vsel %vm2616, 2147483647, %v2476
        %v2717 = vsel %vm2617, 2147483647, %v2477
        %v2718 = vsel %vm2618, 2147483647, %v2478
        %v2719 = vsel %vm2619, 2147483647, %v2479
        %v2720 = vsel %vm2620, 2147483647, %v2480
        %v2721 = vsel %vm2621, 2147483647, %v2481
        %v2722 = vsel %vm2622, 2147483647, %v2482
        %v2723 = vsel %vm2623, 2147483647, %v2483
        %v2724 = vsel %vm2624, 2147483647, %v2484
        %v2725 = vsel %vm2625, 2147483647, %v2485
        %v2726 = vsel %vm2626, 2147483647, %v2486
        %v2727 = vsel %vm2627, 2147483647, %v2487
        %v2728 = vsel %vm2628, 2147483647, %v2488
        %v2729 = vsel %vm2629, 2147483647, %v2489
        %v2730 = vsel %vm2630, 2147483647, %v2490
        %v2731 = vsel %vm2631, 2147483647, %v2491
        %v2732 = vsel %vm2632, 2147483647, %v2492
        %v2733 = vsel %vm2633, 2147483647, %v2493
        %v2734 = vsel %vm2634, 2147483647, %v2494
        %v2735 = vsel %vm2635, 2147483647, %v2495
        %v2736 = vsel %vm2636, 2147483647, %v2496
        %v2737 = vsel %vm2637, 2147483647, %v2497
        %v2738 = vsel %vm2638, 2147483647, %v2498
        %v2739 = vsel %vm2639, 2147483647, %v2499
        %v2740 = vsel %vm2640, 2147483647, %v2500
        %v2741 = vsel %vm2641, 2147483647, %v2501
        %v2742 = vsel %vm2642, 2147483647, %v2502
        %v2743 = vsel %vm2643, 2147483647, %v2503
        %v2744 = vsel %vm2644, 2147483647, %v2504
        %v2745 = vsel %vm2645, 2147483647, %v2505
        %v2746 = vsel %vm2646, 2147483647, %v2506
        %v2747 = vsel %vm2647, 2147483647, %v2507
        %vm2748 = vcmp.lt.s32.totalorder %v2716, %v2720
        %v2749 = vsel %vm2748, %v2716, %v2720
        %vm2750 = vcmp.lt.s32.totalorder %v2749, %v2724
        %v2751 = vsel %vm2750, %v2749, %v2724
        %vm2752 = vcmp.lt.s32.totalorder %v2751, %v2728
        %v2753 = vsel %vm2752, %v2751, %v2728
        %vm2754 = vcmp.lt.s32.totalorder %v2753, %v2732
        %v2755 = vsel %vm2754, %v2753, %v2732
        %vm2756 = vcmp.lt.s32.totalorder %v2755, %v2736
        %v2757 = vsel %vm2756, %v2755, %v2736
        %vm2758 = vcmp.lt.s32.totalorder %v2757, %v2740
        %v2759 = vsel %vm2758, %v2757, %v2740
        %vm2760 = vcmp.lt.s32.totalorder %v2759, %v2744
        %v2761 = vsel %vm2760, %v2759, %v2744
        %v2762 = vrot.slane %v2761, 4
        %vm2763 = vcmp.lt.s32.totalorder %v2761, %v2762
        %v2764 = vsel %vm2763, %v2761, %v2762
        %v2765 = vrot.slane %v2764, 2
        %vm2766 = vcmp.lt.s32.totalorder %v2764, %v2765
        %v2767 = vsel %vm2766, %v2764, %v2765
        %v2768 = vrot.slane %v2767, 1
        %vm2769 = vcmp.lt.s32.totalorder %v2767, %v2768
        %v2770 = vsel %vm2769, %v2767, %v2768
        %vm2771 = vcmp.lt.s32.totalorder %v2717, %v2721
        %v2772 = vsel %vm2771, %v2717, %v2721
        %vm2773 = vcmp.lt.s32.totalorder %v2772, %v2725
        %v2774 = vsel %vm2773, %v2772, %v2725
        %vm2775 = vcmp.lt.s32.totalorder %v2774, %v2729
        %v2776 = vsel %vm2775, %v2774, %v2729
        %vm2777 = vcmp.lt.s32.totalorder %v2776, %v2733
        %v2778 = vsel %vm2777, %v2776, %v2733
        %vm2779 = vcmp.lt.s32.totalorder %v2778, %v2737
        %v2780 = vsel %vm2779, %v2778, %v2737
        %vm2781 = vcmp.lt.s32.totalorder %v2780, %v2741
        %v2782 = vsel %vm2781, %v2780, %v2741
        %vm2783 = vcmp.lt.s32.totalorder %v2782, %v2745
        %v2784 = vsel %vm2783, %v2782, %v2745
        %v2785 = vrot.slane %v2784, 4
        %vm2786 = vcmp.lt.s32.totalorder %v2784, %v2785
        %v2787 = vsel %vm2786, %v2784, %v2785
        %v2788 = vrot.slane %v2787, 2
        %vm2789 = vcmp.lt.s32.totalorder %v2787, %v2788
        %v2790 = vsel %vm2789, %v2787, %v2788
        %v2791 = vrot.slane %v2790, 1
        %vm2792 = vcmp.lt.s32.totalorder %v2790, %v2791
        %v2793 = vsel %vm2792, %v2790, %v2791
        %vm2794 = vcmp.lt.s32.totalorder %v2718, %v2722
        %v2795 = vsel %vm2794, %v2718, %v2722
        %vm2796 = vcmp.lt.s32.totalorder %v2795, %v2726
        %v2797 = vsel %vm2796, %v2795, %v2726
        %vm2798 = vcmp.lt.s32.totalorder %v2797, %v2730
        %v2799 = vsel %vm2798, %v2797, %v2730
        %vm2800 = vcmp.lt.s32.totalorder %v2799, %v2734
        %v2801 = vsel %vm2800, %v2799, %v2734
        %vm2802 = vcmp.lt.s32.totalorder %v2801, %v2738
        %v2803 = vsel %vm2802, %v2801, %v2738
        %vm2804 = vcmp.lt.s32.totalorder %v2803, %v2742
        %v2805 = vsel %vm2804, %v2803, %v2742
        %vm2806 = vcmp.lt.s32.totalorder %v2805, %v2746
        %v2807 = vsel %vm2806, %v2805, %v2746
        %v2808 = vrot.slane %v2807, 4
        %vm2809 = vcmp.lt.s32.totalorder %v2807, %v2808
        %v2810 = vsel %vm2809, %v2807, %v2808
        %v2811 = vrot.slane %v2810, 2
        %vm2812 = vcmp.lt.s32.totalorder %v2810, %v2811
        %v2813 = vsel %vm2812, %v2810, %v2811
        %v2814 = vrot.slane %v2813, 1
        %vm2815 = vcmp.lt.s32.totalorder %v2813, %v2814
        %v2816 = vsel %vm2815, %v2813, %v2814
        %vm2817 = vcmp.lt.s32.totalorder %v2719, %v2723
        %v2818 = vsel %vm2817, %v2719, %v2723
        %vm2819 = vcmp.lt.s32.totalorder %v2818, %v2727
        %v2820 = vsel %vm2819, %v2818, %v2727
        %vm2821 = vcmp.lt.s32.totalorder %v2820, %v2731
        %v2822 = vsel %vm2821, %v2820, %v2731
        %vm2823 = vcmp.lt.s32.totalorder %v2822, %v2735
        %v2824 = vsel %vm2823, %v2822, %v2735
        %vm2825 = vcmp.lt.s32.totalorder %v2824, %v2739
        %v2826 = vsel %vm2825, %v2824, %v2739
        %vm2827 = vcmp.lt.s32.totalorder %v2826, %v2743
        %v2828 = vsel %vm2827, %v2826, %v2743
        %vm2829 = vcmp.lt.s32.totalorder %v2828, %v2747
        %v2830 = vsel %vm2829, %v2828, %v2747
        %v2831 = vrot.slane %v2830, 4
        %vm2832 = vcmp.lt.s32.totalorder %v2830, %v2831
        %v2833 = vsel %vm2832, %v2830, %v2831
        %v2834 = vrot.slane %v2833, 2
        %vm2835 = vcmp.lt.s32.totalorder %v2833, %v2834
        %v2836 = vsel %vm2835, %v2833, %v2834
        %v2837 = vrot.slane %v2836, 1
        %vm2838 = vcmp.lt.s32.totalorder %v2836, %v2837
        %v2839 = vsel %vm2838, %v2836, %v2837
        %v2840 = vand.u32 %v2770, 4294967232
        %v2841 = vand.u32 %v2793, 4294967232
        %v2842 = vand.u32 %v2816, 4294967232
        %v2843 = vand.u32 %v2839, 4294967232
        %v2848 = vadd.f32 %v2840, 1e-08
        %v2849 = vadd.f32 %v2841, 1e-08
        %v2850 = vadd.f32 %v2842, 1e-08
        %v2851 = vadd.f32 %v2843, 1e-08
        %v2852 = vrcp.pop %v2848
        %v2853 = vrcp.pop %v2849
        %v2854 = vrcp.pop %v2850
        %v2855 = vrcp.pop %v2851
        %vm2856 = vcmp.eq.s32.totalorder %v2716, %v2770
        %vm2857 = vcmp.eq.s32.totalorder %v2717, %v2793
        %vm2858 = vcmp.eq.s32.totalorder %v2718, %v2816
        %vm2859 = vcmp.eq.s32.totalorder %v2719, %v2839
        %vm2860 = vcmp.eq.s32.totalorder %v2720, %v2770
        %vm2861 = vcmp.eq.s32.totalorder %v2721, %v2793
        %vm2862 = vcmp.eq.s32.totalorder %v2722, %v2816
        %vm2863 = vcmp.eq.s32.totalorder %v2723, %v2839
        %vm2864 = vcmp.eq.s32.totalorder %v2724, %v2770
        %vm2865 = vcmp.eq.s32.totalorder %v2725, %v2793
        %vm2866 = vcmp.eq.s32.totalorder %v2726, %v2816
        %vm2867 = vcmp.eq.s32.totalorder %v2727, %v2839
        %vm2868 = vcmp.eq.s32.totalorder %v2728, %v2770
        %vm2869 = vcmp.eq.s32.totalorder %v2729, %v2793
        %vm2870 = vcmp.eq.s32.totalorder %v2730, %v2816
        %vm2871 = vcmp.eq.s32.totalorder %v2731, %v2839
        %vm2872 = vcmp.eq.s32.totalorder %v2732, %v2770
        %vm2873 = vcmp.eq.s32.totalorder %v2733, %v2793
        %vm2874 = vcmp.eq.s32.totalorder %v2734, %v2816
        %vm2875 = vcmp.eq.s32.totalorder %v2735, %v2839
        %vm2876 = vcmp.eq.s32.totalorder %v2736, %v2770
        %vm2877 = vcmp.eq.s32.totalorder %v2737, %v2793
        %vm2878 = vcmp.eq.s32.totalorder %v2738, %v2816
        %vm2879 = vcmp.eq.s32.totalorder %v2739, %v2839
        %vm2880 = vcmp.eq.s32.totalorder %v2740, %v2770
        %vm2881 = vcmp.eq.s32.totalorder %v2741, %v2793
        %vm2882 = vcmp.eq.s32.totalorder %v2742, %v2816
        %vm2883 = vcmp.eq.s32.totalorder %v2743, %v2839
        %vm2884 = vcmp.eq.s32.totalorder %v2744, %v2770
        %vm2885 = vcmp.eq.s32.totalorder %v2745, %v2793
        %vm2886 = vcmp.eq.s32.totalorder %v2746, %v2816
        %vm2887 = vcmp.eq.s32.totalorder %v2747, %v2839
        %v2888 = vsel %vm2856, %v2852, 0.0
        %v2889 = vsel %vm2857, %v2853, 0.0
        %v2890 = vsel %vm2858, %v2854, 0.0
        %v2891 = vsel %vm2859, %v2855, 0.0
        %v2892 = vsel %vm2860, %v2852, 0.0
        %v2893 = vsel %vm2861, %v2853, 0.0
        %v2894 = vsel %vm2862, %v2854, 0.0
        %v2895 = vsel %vm2863, %v2855, 0.0
        %v2896 = vsel %vm2864, %v2852, 0.0
        %v2897 = vsel %vm2865, %v2853, 0.0
        %v2898 = vsel %vm2866, %v2854, 0.0
        %v2899 = vsel %vm2867, %v2855, 0.0
        %v2900 = vsel %vm2868, %v2852, 0.0
        %v2901 = vsel %vm2869, %v2853, 0.0
        %v2902 = vsel %vm2870, %v2854, 0.0
        %v2903 = vsel %vm2871, %v2855, 0.0
        %v2904 = vsel %vm2872, %v2852, 0.0
        %v2905 = vsel %vm2873, %v2853, 0.0
        %v2906 = vsel %vm2874, %v2854, 0.0
        %v2907 = vsel %vm2875, %v2855, 0.0
        %v2908 = vsel %vm2876, %v2852, 0.0
        %v2909 = vsel %vm2877, %v2853, 0.0
        %v2910 = vsel %vm2878, %v2854, 0.0
        %v2911 = vsel %vm2879, %v2855, 0.0
        %v2912 = vsel %vm2880, %v2852, 0.0
        %v2913 = vsel %vm2881, %v2853, 0.0
        %v2914 = vsel %vm2882, %v2854, 0.0
        %v2915 = vsel %vm2883, %v2855, 0.0
        %v2916 = vsel %vm2884, %v2852, 0.0
        %v2917 = vsel %vm2885, %v2853, 0.0
        %v2918 = vsel %vm2886, %v2854, 0.0
        %v2919 = vsel %vm2887, %v2855, 0.0
        %v2920 = vadd.f32 %v2680, %v2888
        %v2921 = vadd.f32 %v2681, %v2889
        %v2922 = vadd.f32 %v2682, %v2890
        %v2923 = vadd.f32 %v2683, %v2891
        %v2924 = vadd.f32 %v2684, %v2892
        %v2925 = vadd.f32 %v2685, %v2893
        %v2926 = vadd.f32 %v2686, %v2894
        %v2927 = vadd.f32 %v2687, %v2895
        %v2928 = vadd.f32 %v2688, %v2896
        %v2929 = vadd.f32 %v2689, %v2897
        %v2930 = vadd.f32 %v2690, %v2898
        %v2931 = vadd.f32 %v2691, %v2899
        %v2932 = vadd.f32 %v2692, %v2900
        %v2933 = vadd.f32 %v2693, %v2901
        %v2934 = vadd.f32 %v2694, %v2902
        %v2935 = vadd.f32 %v2695, %v2903
        %v2936 = vadd.f32 %v2696, %v2904
        %v2937 = vadd.f32 %v2697, %v2905
        %v2938 = vadd.f32 %v2698, %v2906
        %v2939 = vadd.f32 %v2699, %v2907
        %v2940 = vadd.f32 %v2700, %v2908
        %v2941 = vadd.f32 %v2701, %v2909
        %v2942 = vadd.f32 %v2702, %v2910
        %v2943 = vadd.f32 %v2703, %v2911
        %v2944 = vadd.f32 %v2704, %v2912
        %v2945 = vadd.f32 %v2705, %v2913
        %v2946 = vadd.f32 %v2706, %v2914
        %v2947 = vadd.f32 %v2707, %v2915
        %v2948 = vadd.f32 %v2708, %v2916
        %v2949 = vadd.f32 %v2709, %v2917
        %v2950 = vadd.f32 %v2710, %v2918
        %v2951 = vadd.f32 %v2711, %v2919
        %v2952 = vadd.f32 %v2712, %v2852
        %v2953 = vadd.f32 %v2713, %v2853
        %v2954 = vadd.f32 %v2714, %v2854
        %v2955 = vadd.f32 %v2715, %v2855
        %vm2956 = vcmask 523264
        %v2958 = vsel %vm2956, %v443, 0
        %v2961 = vsel %vm2956, %v444, 0
        %2963 = vmatprep.subr.mxu0 %v2921
        %2964 = vmatpush1.msra.mxu0 %v2920
        %2965 = vmatprep.subr.mxu0 %v2925
        %2966 = vmatpush1.msra.mxu0 %v2924
        %2967 = vmatprep.subr.mxu0 %v2929
        %2968 = vmatpush1.msra.mxu0 %v2928
        %2969 = vmatprep.subr.mxu0 %v2933
        %2970 = vmatpush1.msra.mxu0 %v2932
        %2971 = vmatprep.subr.mxu0 %v2937
        %2972 = vmatpush1.msra.mxu0 %v2936
        %2973 = vmatprep.subr.mxu0 %v2941
        %2974 = vmatpush1.msra.mxu0 %v2940
        %2975 = vmatprep.subr.mxu0 %v2945
        %2976 = vmatpush1.msra.mxu0 %v2944
        %2977 = vmatprep.subr.mxu0 %v2949
        %2978 = vmatpush1.msra.mxu0 %v2948
        %2979 = vmatprep.subr.mxu0 0.0
        %2980 = vmatpush1.msra.mxu0 0.0
        %2981 = vmatprep.subr.mxu0 0.0
        %2982 = vmatpush1.msra.mxu0 0.0
        %2983 = vmatprep.subr.mxu0 0.0
        %2984 = vmatpush1.msra.mxu0 0.0
        %2985 = vmatprep.subr.mxu0 0.0
        %2986 = vmatpush1.msra.mxu0 0.0
        %2987 = vmatprep.subr.mxu0 0.0
        %2988 = vmatpush1.msra.mxu0 0.0
        %2989 = vmatprep.subr.mxu0 0.0
        %2990 = vmatpush1.msra.mxu0 0.0
        %2991 = vmatprep.subr.mxu0 0.0
        %2992 = vmatpush1.msra.mxu0 0.0
        %2993 = vmatprep.subr.mxu0 0.0
        %2994 = vmatpush1.msra.mxu0 0.0
        %2995 = vmatprep.subr.mxu0 0.0
        %2996 = vmatpush1.msra.mxu0 0.0
        %2997 = vmatprep.subr.mxu0 0.0
        %2998 = vmatpush1.msra.mxu0 0.0
        %2999 = vmatprep.subr.mxu0 0.0
        %3000 = vmatpush1.msra.mxu0 0.0
        %3001 = vmatprep.subr.mxu0 0.0
        %3002 = vmatpush1.msra.mxu0 0.0
        %3003 = vmatprep.subr.mxu0 0.0
        %3004 = vmatpush1.msra.mxu0 0.0
        %3005 = vmatprep.subr.mxu0 0.0
        %3006 = vmatpush1.msra.mxu0 0.0
        %3007 = vmatprep.subr.mxu0 0.0
        %3008 = vmatpush1.msra.mxu0 0.0
        %3009 = vmatprep.subr.mxu0 0.0
        %3010 = vmatpush1.msra.mxu0 0.0
        %3011 = vmatprep.subr.mxu0 0.0
        %3012 = vmatpush1.msra.mxu0 0.0
        %3013 = vmatprep.subr.mxu0 0.0
        %3014 = vmatpush1.msra.mxu0 0.0
        %3015 = vmatprep.subr.mxu0 0.0
        %3016 = vmatpush1.msra.mxu0 0.0
        %3017 = vmatprep.subr.mxu0 0.0
        %3018 = vmatpush1.msra.mxu0 0.0
        %3019 = vmatprep.subr.mxu0 0.0
        %3020 = vmatpush1.msra.mxu0 0.0
        %3021 = vmatprep.subr.mxu0 0.0
        %3022 = vmatpush1.msra.mxu0 0.0
        %3023 = vmatprep.subr.mxu0 0.0
        %3024 = vmatpush1.msra.mxu0 0.0
        %3025 = vmatprep.subr.mxu0 0.0
        %3026 = vmatpush1.msra.mxu0 0.0
        %3027 = vmatprep.mubr.f32.mxu0 0.0
        %3028 = vmatmul.mubr.f32.gmra.mrb[0].mxu0 %v2958
        %v3029 = vpop.f32.mrb[0].mxu0
        %v3030 = vadd.f32 0.0, %v3029
        %v3031 = vpop.f32.mrb[0].mxu0
        %v3032 = vadd.f32 0.0, %v3031
        %3033 = vmatprep.mubr.f32.mxu0 0.0
        %3034 = vmatmul.mubr.f32.gmra.mrb[0].mxu0 %v2961
        %v3035 = vpop.f32.mrb[0].mxu0
        %v3036 = vadd.f32 0.0, %v3035
        %v3037 = vpop.f32.mrb[0].mxu0
        %v3038 = vadd.f32 0.0, %v3037
        %3039 = vdwg.mxu0
        %3040 = vmatprep.subr.mxu0 %v2923
        %3041 = vmatpush1.msra.mxu0 %v2922
        %3042 = vmatprep.subr.mxu0 %v2927
        %3043 = vmatpush1.msra.mxu0 %v2926
        %3044 = vmatprep.subr.mxu0 %v2931
        %3045 = vmatpush1.msra.mxu0 %v2930
        %3046 = vmatprep.subr.mxu0 %v2935
        %3047 = vmatpush1.msra.mxu0 %v2934
        %3048 = vmatprep.subr.mxu0 %v2939
        %3049 = vmatpush1.msra.mxu0 %v2938
        %3050 = vmatprep.subr.mxu0 %v2943
        %3051 = vmatpush1.msra.mxu0 %v2942
        %3052 = vmatprep.subr.mxu0 %v2947
        %3053 = vmatpush1.msra.mxu0 %v2946
        %3054 = vmatprep.subr.mxu0 %v2951
        %3055 = vmatpush1.msra.mxu0 %v2950
        %3056 = vmatprep.subr.mxu0 0.0
        %3057 = vmatpush1.msra.mxu0 0.0
        %3058 = vmatprep.subr.mxu0 0.0
        %3059 = vmatpush1.msra.mxu0 0.0
        %3060 = vmatprep.subr.mxu0 0.0
        %3061 = vmatpush1.msra.mxu0 0.0
        %3062 = vmatprep.subr.mxu0 0.0
        %3063 = vmatpush1.msra.mxu0 0.0
        %3064 = vmatprep.subr.mxu0 0.0
        %3065 = vmatpush1.msra.mxu0 0.0
        %3066 = vmatprep.subr.mxu0 0.0
        %3067 = vmatpush1.msra.mxu0 0.0
        %3068 = vmatprep.subr.mxu0 0.0
        %3069 = vmatpush1.msra.mxu0 0.0
        %3070 = vmatprep.subr.mxu0 0.0
        %3071 = vmatpush1.msra.mxu0 0.0
        %3072 = vmatprep.subr.mxu0 0.0
        %3073 = vmatpush1.msra.mxu0 0.0
        %3074 = vmatprep.subr.mxu0 0.0
        %3075 = vmatpush1.msra.mxu0 0.0
        %3076 = vmatprep.subr.mxu0 0.0
        %3077 = vmatpush1.msra.mxu0 0.0
        %3078 = vmatprep.subr.mxu0 0.0
        %3079 = vmatpush1.msra.mxu0 0.0
        %3080 = vmatprep.subr.mxu0 0.0
        %3081 = vmatpush1.msra.mxu0 0.0
        %3082 = vmatprep.subr.mxu0 0.0
        %3083 = vmatpush1.msra.mxu0 0.0
        %3084 = vmatprep.subr.mxu0 0.0
        %3085 = vmatpush1.msra.mxu0 0.0
        %3086 = vmatprep.subr.mxu0 0.0
        %3087 = vmatpush1.msra.mxu0 0.0
        %3088 = vmatprep.subr.mxu0 0.0
        %3089 = vmatpush1.msra.mxu0 0.0
        %3090 = vmatprep.subr.mxu0 0.0
        %3091 = vmatpush1.msra.mxu0 0.0
        %3092 = vmatprep.subr.mxu0 0.0
        %3093 = vmatpush1.msra.mxu0 0.0
        %3094 = vmatprep.subr.mxu0 0.0
        %3095 = vmatpush1.msra.mxu0 0.0
        %3096 = vmatprep.subr.mxu0 0.0
        %3097 = vmatpush1.msra.mxu0 0.0
        %3098 = vmatprep.subr.mxu0 0.0
        %3099 = vmatpush1.msra.mxu0 0.0
        %3100 = vmatprep.subr.mxu0 0.0
        %3101 = vmatpush1.msra.mxu0 0.0
        %3102 = vmatprep.subr.mxu0 0.0
        %3103 = vmatpush1.msra.mxu0 0.0
        %3104 = vmatprep.mubr.f32.mxu0 0.0
        %3105 = vmatmul.mubr.f32.gmra.mrb[0].mxu0 %v2958
        %v3106 = vpop.f32.mrb[0].mxu0
        %v3107 = vadd.f32 0.0, %v3106
        %v3108 = vpop.f32.mrb[0].mxu0
        %v3109 = vadd.f32 0.0, %v3108
        %3110 = vmatprep.mubr.f32.mxu0 0.0
        %3111 = vmatmul.mubr.f32.gmra.mrb[0].mxu0 %v2961
        %v3112 = vpop.f32.mrb[0].mxu0
        %v3113 = vadd.f32 0.0, %v3112
        %v3114 = vpop.f32.mrb[0].mxu0
        %v3115 = vadd.f32 0.0, %v3114
        %3116 = vdwg.mxu0
        %v3117 = vrcp.pop %v2952
        %v3118 = vrcp.pop %v2953
        %v3119 = vrcp.pop %v2954
        %v3120 = vrcp.pop %v2955
        %v3121 = vmul.f32 %v3030, %v3117
        %v3122 = vmul.f32 %v3032, %v3118
        %v3123 = vmul.f32 %v3107, %v3119
        %v3124 = vmul.f32 %v3109, %v3120
        %v3125 = vmul.f32 %v3036, %v3117
        %v3126 = vmul.f32 %v3038, %v3118
        %v3127 = vmul.f32 %v3113, %v3119
        %v3128 = vmul.f32 %v3115, %v3120
        %v3129 = vld [vmem:[%s4] sm:$0xf]
        %v3130 = vld [vmem:[%s4 + $0x4] sm:$0xf]
        %v3131 = vld [vmem:[%s4 + $0x8] sm:$0xf]
        %v3132 = vld [vmem:[%s4 + $0xc] sm:$0xf]
        %v3133 = vld [vmem:[%s5] sm:$0xf]
        %v3134 = vld [vmem:[%s5 + $0x4] sm:$0xf]
        %v3135 = vld [vmem:[%s5 + $0x8] sm:$0xf]
        %v3136 = vld [vmem:[%s5 + $0xc] sm:$0xf]
        %v3137 = vld [vmem:[%s6] sm:$0xff]
        %v3138 = vld [vmem:[%s6 + $0x8] sm:$0xff]
        %v3139 = vld [vmem:[%s6 + $0x10] sm:$0xff]
        %v3140 = vld [vmem:[%s6 + $0x18] sm:$0xff]
        %v3141 = vpack.c.bf16 %v3125, %v3121
        %v3142 = vpack.c.bf16 %v3126, %v3122
        %v3143 = vpack.c.bf16 %v3127, %v3123
        %v3144 = vpack.c.bf16 %v3128, %v3124
        %v3149 = vunpack.c.l.b16 %v3133
        %v3150 = vunpack.c.l.b16 %v3134
        %v3151 = vunpack.c.l.b16 %v3135
        %v3152 = vunpack.c.l.b16 %v3136
        %v3153 = vpack.c.b16 %v3150, %v3149
        %v3154 = vpack.c.b16 %v3152, %v3151
        %vm3155 = vcmask 80896
        %v3157 = vsel %vm3155, %v3153, 0
        %v3160 = vsel %vm3155, %v3154, 0
        %v3163 = vsel %vm502, %v3141, 0
        %v3166 = vsel %vm502, %v3142, 0
        %v3169 = vsel %vm502, %v3143, 0
        %v3172 = vsel %vm502, %v3144, 0
        %3174 = vmatprep.subr.bf16.mxu0 %v3166
        %3175 = vmatpush1.bf16.msra.mxu0 %v3163
        %3176 = vmatprep.subr.bf16.mxu0 0
        %3177 = vmatpush1.bf16.msra.mxu0 0
        %3178 = vmatprep.subr.bf16.mxu0 0
        %3179 = vmatpush1.bf16.msra.mxu0 0
        %3180 = vmatprep.subr.bf16.mxu0 0
        %3181 = vmatpush1.bf16.msra.mxu0 0
        %3182 = vmatprep.subr.bf16.mxu0 0
        %3183 = vmatpush1.bf16.msra.mxu0 0
        %3184 = vmatprep.subr.bf16.mxu0 0
        %3185 = vmatpush1.bf16.msra.mxu0 0
        %3186 = vmatprep.subr.bf16.mxu0 0
        %3187 = vmatpush1.bf16.msra.mxu0 0
        %3188 = vmatprep.subr.bf16.mxu0 0
        %3189 = vmatpush1.bf16.msra.mxu0 0
        %3190 = vmatprep.subr.bf16.mxu0 0
        %3191 = vmatpush1.bf16.msra.mxu0 0
        %3192 = vmatprep.subr.bf16.mxu0 0
        %3193 = vmatpush1.bf16.msra.mxu0 0
        %3194 = vmatprep.subr.bf16.mxu0 0
        %3195 = vmatpush1.bf16.msra.mxu0 0
        %3196 = vmatprep.subr.bf16.mxu0 0
        %3197 = vmatpush1.bf16.msra.mxu0 0
        %3198 = vmatprep.subr.bf16.mxu0 0
        %3199 = vmatpush1.bf16.msra.mxu0 0
        %3200 = vmatprep.subr.bf16.mxu0 0
        %3201 = vmatpush1.bf16.msra.mxu0 0
        %3202 = vmatprep.subr.bf16.mxu0 0
        %3203 = vmatpush1.bf16.msra.mxu0 0
        %3204 = vmatprep.subr.bf16.mxu0 0
        %3205 = vmatpush1.bf16.msra.mxu0 0
        %3206 = vmatprep.mubr.bf16.mxu0 0
        %3207 = vmatmul.mubr.bf16.gmra.mrb[0].mxu0 %v3157
        %v3208 = vpop.f32.mrb[0].mxu0
        %v3209 = vadd.f32 0.0, %v3208
        %v3210 = vpop.f32.mrb[0].mxu0
        %v3211 = vadd.f32 0.0, %v3210
        %v3212 = vpop.f32.mrb[0].mxu0
        %v3213 = vadd.f32 0.0, %v3212
        %v3214 = vpop.f32.mrb[0].mxu0
        %v3215 = vadd.f32 0.0, %v3214
        %3216 = vmatprep.mubr.bf16.mxu0 0
        %3217 = vmatmul.mubr.bf16.gmra.mrb[0].mxu0 %v3160
        %v3218 = vpop.f32.mrb[0].mxu0
        %v3219 = vadd.f32 0.0, %v3218
        %v3220 = vpop.f32.mrb[0].mxu0
        %v3221 = vadd.f32 0.0, %v3220
        %v3222 = vpop.f32.mrb[0].mxu0
        %v3223 = vadd.f32 0.0, %v3222
        %v3224 = vpop.f32.mrb[0].mxu0
        %v3225 = vadd.f32 0.0, %v3224
        %3226 = vdwg.mxu0
        %3227 = vmatprep.subr.bf16.mxu0 %v3172
        %3228 = vmatpush1.bf16.msra.mxu0 %v3169
        %3229 = vmatprep.subr.bf16.mxu0 0
        %3230 = vmatpush1.bf16.msra.mxu0 0
        %3231 = vmatprep.subr.bf16.mxu0 0
        %3232 = vmatpush1.bf16.msra.mxu0 0
        %3233 = vmatprep.subr.bf16.mxu0 0
        %3234 = vmatpush1.bf16.msra.mxu0 0
        %3235 = vmatprep.subr.bf16.mxu0 0
        %3236 = vmatpush1.bf16.msra.mxu0 0
        %3237 = vmatprep.subr.bf16.mxu0 0
        %3238 = vmatpush1.bf16.msra.mxu0 0
        %3239 = vmatprep.subr.bf16.mxu0 0
        %3240 = vmatpush1.bf16.msra.mxu0 0
        %3241 = vmatprep.subr.bf16.mxu0 0
        %3242 = vmatpush1.bf16.msra.mxu0 0
        %3243 = vmatprep.subr.bf16.mxu0 0
        %3244 = vmatpush1.bf16.msra.mxu0 0
        %3245 = vmatprep.subr.bf16.mxu0 0
        %3246 = vmatpush1.bf16.msra.mxu0 0
        %3247 = vmatprep.subr.bf16.mxu0 0
        %3248 = vmatpush1.bf16.msra.mxu0 0
        %3249 = vmatprep.subr.bf16.mxu0 0
        %3250 = vmatpush1.bf16.msra.mxu0 0
        %3251 = vmatprep.subr.bf16.mxu0 0
        %3252 = vmatpush1.bf16.msra.mxu0 0
        %3253 = vmatprep.subr.bf16.mxu0 0
        %3254 = vmatpush1.bf16.msra.mxu0 0
        %3255 = vmatprep.subr.bf16.mxu0 0
        %3256 = vmatpush1.bf16.msra.mxu0 0
        %3257 = vmatprep.subr.bf16.mxu0 0
        %3258 = vmatpush1.bf16.msra.mxu0 0
        %3259 = vmatprep.mubr.bf16.mxu0 0
        %3260 = vmatmul.mubr.bf16.gmra.mrb[0].mxu0 %v3157
        %v3261 = vpop.f32.mrb[0].mxu0
        %v3262 = vadd.f32 0.0, %v3261
        %v3263 = vpop.f32.mrb[0].mxu0
        %v3264 = vadd.f32 0.0, %v3263
        %v3265 = vpop.f32.mrb[0].mxu0
        %v3266 = vadd.f32 0.0, %v3265
        %v3267 = vpop.f32.mrb[0].mxu0
        %v3268 = vadd.f32 0.0, %v3267
        %3269 = vmatprep.mubr.bf16.mxu0 0
        %3270 = vmatmul.mubr.bf16.gmra.mrb[0].mxu0 %v3160
        %v3271 = vpop.f32.mrb[0].mxu0
        %v3272 = vadd.f32 0.0, %v3271
        %v3273 = vpop.f32.mrb[0].mxu0
        %v3274 = vadd.f32 0.0, %v3273
        %v3275 = vpop.f32.mrb[0].mxu0
        %v3276 = vadd.f32 0.0, %v3275
        %v3277 = vpop.f32.mrb[0].mxu0
        %v3278 = vadd.f32 0.0, %v3277
        %3279 = vdwg.mxu0
        %v3284 = vunpack.c.l.b16 %v3129
        %v3285 = vunpack.c.l.b16 %v3130
        %v3286 = vunpack.c.l.b16 %v3131
        %v3287 = vunpack.c.l.b16 %v3132
        %v3288 = vpack.c.b16 %v3285, %v3284
        %v3289 = vpack.c.b16 %v3287, %v3286
        %v3292 = vunpack.c.l.b16 %v441
        %v3293 = vunpack.c.h.b16 %v441
        %v3294 = vunpack.c.l.b16 %v442
        %v3295 = vunpack.c.h.b16 %v442
        %v3296 = vpack.c.b16 %v3292, %v3292
        %v3297 = vpack.c.b16 %v3293, %v3293
        %v3298 = vpack.c.b16 %v3294, %v3294
        %v3299 = vpack.c.b16 %v3295, %v3295
        %vm3300 = vcmask 48128
        %v3302 = vsel %vm3300, %v3288, 0
        %v3305 = vsel %vm3300, %v3289, 0
        %vm3307 = vcmask 1042432
        %v3309 = vsel %vm3307, %v3296, 0
        %v3312 = vsel %vm3307, %v3297, 0
        %v3315 = vsel %vm3307, %v3298, 0
        %v3318 = vsel %vm3307, %v3299, 0
        %3320 = vmatprep.subr.bf16.mxu0 %v3312
        %3321 = vmatpush1.bf16.msra.mxu0 %v3309
        %3322 = vmatprep.subr.bf16.mxu0 0
        %3323 = vmatpush1.bf16.msra.mxu0 0
        %3324 = vmatprep.subr.bf16.mxu0 0
        %3325 = vmatpush1.bf16.msra.mxu0 0
        %3326 = vmatprep.subr.bf16.mxu0 0
        %3327 = vmatpush1.bf16.msra.mxu0 0
        %3328 = vmatprep.subr.bf16.mxu0 0
        %3329 = vmatpush1.bf16.msra.mxu0 0
        %3330 = vmatprep.subr.bf16.mxu0 0
        %3331 = vmatpush1.bf16.msra.mxu0 0
        %3332 = vmatprep.subr.bf16.mxu0 0
        %3333 = vmatpush1.bf16.msra.mxu0 0
        %3334 = vmatprep.subr.bf16.mxu0 0
        %3335 = vmatpush1.bf16.msra.mxu0 0
        %3336 = vmatprep.subr.bf16.mxu0 0
        %3337 = vmatpush1.bf16.msra.mxu0 0
        %3338 = vmatprep.subr.bf16.mxu0 0
        %3339 = vmatpush1.bf16.msra.mxu0 0
        %3340 = vmatprep.subr.bf16.mxu0 0
        %3341 = vmatpush1.bf16.msra.mxu0 0
        %3342 = vmatprep.subr.bf16.mxu0 0
        %3343 = vmatpush1.bf16.msra.mxu0 0
        %3344 = vmatprep.subr.bf16.mxu0 0
        %3345 = vmatpush1.bf16.msra.mxu0 0
        %3346 = vmatprep.subr.bf16.mxu0 0
        %3347 = vmatpush1.bf16.msra.mxu0 0
        %3348 = vmatprep.subr.bf16.mxu0 0
        %3349 = vmatpush1.bf16.msra.mxu0 0
        %3350 = vmatprep.subr.bf16.mxu0 0
        %3351 = vmatpush1.bf16.msra.mxu0 0
        %3352 = vmatprep.mubr.bf16.mxu0 0
        %3353 = vmatmul.mubr.bf16.gmra.mrb[0].mxu0 %v3302
        %v3354 = vpop.f32.mrb[0].mxu0
        %v3355 = vadd.f32 %v3209, %v3354
        %v3356 = vpop.f32.mrb[0].mxu0
        %v3357 = vadd.f32 %v3211, %v3356
        %v3358 = vpop.f32.mrb[0].mxu0
        %v3359 = vadd.f32 %v3213, %v3358
        %v3360 = vpop.f32.mrb[0].mxu0
        %v3361 = vadd.f32 %v3215, %v3360
        %3362 = vmatprep.mubr.bf16.mxu0 0
        %3363 = vmatmul.mubr.bf16.gmra.mrb[0].mxu0 %v3305
        %v3364 = vpop.f32.mrb[0].mxu0
        %v3365 = vadd.f32 %v3219, %v3364
        %v3366 = vpop.f32.mrb[0].mxu0
        %v3367 = vadd.f32 %v3221, %v3366
        %v3368 = vpop.f32.mrb[0].mxu0
        %v3369 = vadd.f32 %v3223, %v3368
        %v3370 = vpop.f32.mrb[0].mxu0
        %v3371 = vadd.f32 %v3225, %v3370
        %3372 = vdwg.mxu0
        %3373 = vmatprep.subr.bf16.mxu0 %v3318
        %3374 = vmatpush1.bf16.msra.mxu0 %v3315
        %3375 = vmatprep.subr.bf16.mxu0 0
        %3376 = vmatpush1.bf16.msra.mxu0 0
        %3377 = vmatprep.subr.bf16.mxu0 0
        %3378 = vmatpush1.bf16.msra.mxu0 0
        %3379 = vmatprep.subr.bf16.mxu0 0
        %3380 = vmatpush1.bf16.msra.mxu0 0
        %3381 = vmatprep.subr.bf16.mxu0 0
        %3382 = vmatpush1.bf16.msra.mxu0 0
        %3383 = vmatprep.subr.bf16.mxu0 0
        %3384 = vmatpush1.bf16.msra.mxu0 0
        %3385 = vmatprep.subr.bf16.mxu0 0
        %3386 = vmatpush1.bf16.msra.mxu0 0
        %3387 = vmatprep.subr.bf16.mxu0 0
        %3388 = vmatpush1.bf16.msra.mxu0 0
        %3389 = vmatprep.subr.bf16.mxu0 0
        %3390 = vmatpush1.bf16.msra.mxu0 0
        %3391 = vmatprep.subr.bf16.mxu0 0
        %3392 = vmatpush1.bf16.msra.mxu0 0
        %3393 = vmatprep.subr.bf16.mxu0 0
        %3394 = vmatpush1.bf16.msra.mxu0 0
        %3395 = vmatprep.subr.bf16.mxu0 0
        %3396 = vmatpush1.bf16.msra.mxu0 0
        %3397 = vmatprep.subr.bf16.mxu0 0
        %3398 = vmatpush1.bf16.msra.mxu0 0
        %3399 = vmatprep.subr.bf16.mxu0 0
        %3400 = vmatpush1.bf16.msra.mxu0 0
        %3401 = vmatprep.subr.bf16.mxu0 0
        %3402 = vmatpush1.bf16.msra.mxu0 0
        %3403 = vmatprep.subr.bf16.mxu0 0
        %3404 = vmatpush1.bf16.msra.mxu0 0
        %3405 = vmatprep.mubr.bf16.mxu0 0
        %3406 = vmatmul.mubr.bf16.gmra.mrb[0].mxu0 %v3302
        %v3407 = vpop.f32.mrb[0].mxu0
        %v3408 = vadd.f32 %v3262, %v3407
        %v3409 = vpop.f32.mrb[0].mxu0
        %v3410 = vadd.f32 %v3264, %v3409
        %v3411 = vpop.f32.mrb[0].mxu0
        %v3412 = vadd.f32 %v3266, %v3411
        %v3413 = vpop.f32.mrb[0].mxu0
        %v3414 = vadd.f32 %v3268, %v3413
        %3415 = vmatprep.mubr.bf16.mxu0 0
        %3416 = vmatmul.mubr.bf16.gmra.mrb[0].mxu0 %v3305
        %v3417 = vpop.f32.mrb[0].mxu0
        %v3418 = vadd.f32 %v3272, %v3417
        %v3419 = vpop.f32.mrb[0].mxu0
        %v3420 = vadd.f32 %v3274, %v3419
        %v3421 = vpop.f32.mrb[0].mxu0
        %v3422 = vadd.f32 %v3276, %v3421
        %v3423 = vpop.f32.mrb[0].mxu0
        %v3424 = vadd.f32 %v3278, %v3423
        %3425 = vdwg.mxu0
        %3427 = vset.pattern.permute.xlu0 0
        %3428 = vperm.xlu0 %3427, %v3137
        %v3429 = vpop.permute.xlu0 %3428
        %3432 = vset.pattern.permute.xlu0 0
        %3433 = vperm.xlu0 %3432, %v3138
        %v3434 = vpop.permute.xlu0 %3433
        %3437 = vset.pattern.permute.xlu0 0
        %3438 = vperm.xlu0 %3437, %v3139
        %v3439 = vpop.permute.xlu0 %3438
        %3442 = vset.pattern.permute.xlu0 0
        %3443 = vperm.xlu0 %3442, %v3140
        %v3444 = vpop.permute.xlu0 %3443
        %v3446 = vadd.f32 %v3355, %v3429
        %v3447 = vadd.f32 %v3357, %v3429
        %v3448 = vadd.f32 %v3408, %v3429
        %v3449 = vadd.f32 %v3410, %v3429
        %v3450 = vadd.f32 %v3359, %v3434
        %v3451 = vadd.f32 %v3361, %v3434
        %v3452 = vadd.f32 %v3412, %v3434
        %v3453 = vadd.f32 %v3414, %v3434
        %v3454 = vadd.f32 %v3365, %v3439
        %v3455 = vadd.f32 %v3367, %v3439
        %v3456 = vadd.f32 %v3418, %v3439
        %v3457 = vadd.f32 %v3420, %v3439
        %v3458 = vadd.f32 %v3369, %v3444
        %v3459 = vadd.f32 %v3371, %v3444
        %v3460 = vadd.f32 %v3422, %v3444
        %v3461 = vadd.f32 %v3424, %v3444
        %v3462 = vmax.f32 %v3446, 0.0
        %v3463 = vmax.f32 %v3447, 0.0
        %v3464 = vmax.f32 %v3448, 0.0
        %v3465 = vmax.f32 %v3449, 0.0
        %v3466 = vmax.f32 %v3450, 0.0
        %v3467 = vmax.f32 %v3451, 0.0
        %v3468 = vmax.f32 %v3452, 0.0
        %v3469 = vmax.f32 %v3453, 0.0
        %v3470 = vmax.f32 %v3454, 0.0
        %v3471 = vmax.f32 %v3455, 0.0
        %v3472 = vmax.f32 %v3456, 0.0
        %v3473 = vmax.f32 %v3457, 0.0
        %v3474 = vmax.f32 %v3458, 0.0
        %v3475 = vmax.f32 %v3459, 0.0
        %v3476 = vmax.f32 %v3460, 0.0
        %v3477 = vmax.f32 %v3461, 0.0
        %v3478 = vld [vmem:[%s7] sm:$0xf]
        %v3479 = vld [vmem:[%s7 + $0x4] sm:$0xf]
        %v3480 = vld [vmem:[%s8] sm:$0xff]
        %v3481 = vld [vmem:[%s8 + $0x8] sm:$0xff]
        %v3482 = vpack.c.bf16 %v3466, %v3462
        %v3483 = vpack.c.bf16 %v3467, %v3463
        %v3484 = vpack.c.bf16 %v3468, %v3464
        %v3485 = vpack.c.bf16 %v3469, %v3465
        %v3486 = vpack.c.bf16 %v3474, %v3470
        %v3487 = vpack.c.bf16 %v3475, %v3471
        %v3488 = vpack.c.bf16 %v3476, %v3472
        %v3489 = vpack.c.bf16 %v3477, %v3473
        %3491 = vset.pattern.permute.xlu0 0
        %3492 = vperm.xlu0 %3491, %v3480
        %v3493 = vpop.permute.xlu0 %3492
        %3496 = vset.pattern.permute.xlu0 0
        %3497 = vperm.xlu0 %3496, %v3481
        %v3498 = vpop.permute.xlu0 %3497
        %v3502 = vunpack.c.l.b16 %v3478
        %v3503 = vunpack.c.l.b16 %v3479
        %v3504 = vpack.c.b16 %v3503, %v3502
        %vm3505 = vcmask 261120
        %v3507 = vsel %vm3505, %v3504, 0
        %3509 = vmatprep.subr.bf16.mxu0 %v3483
        %3510 = vmatpush1.bf16.msra.mxu0 %v3482
        %3511 = vmatprep.subr.bf16.mxu0 %v3487
        %3512 = vmatpush1.bf16.msra.mxu0 %v3486
        %3513 = vmatprep.subr.bf16.mxu0 0
        %3514 = vmatpush1.bf16.msra.mxu0 0
        %3515 = vmatprep.subr.bf16.mxu0 0
        %3516 = vmatpush1.bf16.msra.mxu0 0
        %3517 = vmatprep.subr.bf16.mxu0 0
        %3518 = vmatpush1.bf16.msra.mxu0 0
        %3519 = vmatprep.subr.bf16.mxu0 0
        %3520 = vmatpush1.bf16.msra.mxu0 0
        %3521 = vmatprep.subr.bf16.mxu0 0
        %3522 = vmatpush1.bf16.msra.mxu0 0
        %3523 = vmatprep.subr.bf16.mxu0 0
        %3524 = vmatpush1.bf16.msra.mxu0 0
        %3525 = vmatprep.subr.bf16.mxu0 0
        %3526 = vmatpush1.bf16.msra.mxu0 0
        %3527 = vmatprep.subr.bf16.mxu0 0
        %3528 = vmatpush1.bf16.msra.mxu0 0
        %3529 = vmatprep.subr.bf16.mxu0 0
        %3530 = vmatpush1.bf16.msra.mxu0 0
        %3531 = vmatprep.subr.bf16.mxu0 0
        %3532 = vmatpush1.bf16.msra.mxu0 0
        %3533 = vmatprep.subr.bf16.mxu0 0
        %3534 = vmatpush1.bf16.msra.mxu0 0
        %3535 = vmatprep.subr.bf16.mxu0 0
        %3536 = vmatpush1.bf16.msra.mxu0 0
        %3537 = vmatprep.subr.bf16.mxu0 0
        %3538 = vmatpush1.bf16.msra.mxu0 0
        %3539 = vmatprep.subr.bf16.mxu0 0
        %3540 = vmatpush1.bf16.msra.mxu0 0
        %3541 = vmatprep.mubr.bf16.mxu0 0
        %3542 = vmatmul.mubr.bf16.gmra.mrb[0].mxu0 %v3507
        %v3543 = vpop.f32.mrb[0].mxu0
        %v3544 = vadd.f32 %v3493, %v3543
        %v3545 = vpop.f32.mrb[0].mxu0
        %v3546 = vadd.f32 %v3493, %v3545
        %v3547 = vpop.f32.mrb[0].mxu0
        %v3548 = vadd.f32 %v3498, %v3547
        %v3549 = vpop.f32.mrb[0].mxu0
        %v3550 = vadd.f32 %v3498, %v3549
        %3551 = vdwg.mxu0
        %3552 = vmatprep.subr.bf16.mxu0 %v3485
        %3553 = vmatpush1.bf16.msra.mxu0 %v3484
        %3554 = vmatprep.subr.bf16.mxu0 %v3489
        %3555 = vmatpush1.bf16.msra.mxu0 %v3488
        %3556 = vmatprep.subr.bf16.mxu0 0
        %3557 = vmatpush1.bf16.msra.mxu0 0
        %3558 = vmatprep.subr.bf16.mxu0 0
        %3559 = vmatpush1.bf16.msra.mxu0 0
        %3560 = vmatprep.subr.bf16.mxu0 0
        %3561 = vmatpush1.bf16.msra.mxu0 0
        %3562 = vmatprep.subr.bf16.mxu0 0
        %3563 = vmatpush1.bf16.msra.mxu0 0
        %3564 = vmatprep.subr.bf16.mxu0 0
        %3565 = vmatpush1.bf16.msra.mxu0 0
        %3566 = vmatprep.subr.bf16.mxu0 0
        %3567 = vmatpush1.bf16.msra.mxu0 0
        %3568 = vmatprep.subr.bf16.mxu0 0
        %3569 = vmatpush1.bf16.msra.mxu0 0
        %3570 = vmatprep.subr.bf16.mxu0 0
        %3571 = vmatpush1.bf16.msra.mxu0 0
        %3572 = vmatprep.subr.bf16.mxu0 0
        %3573 = vmatpush1.bf16.msra.mxu0 0
        %3574 = vmatprep.subr.bf16.mxu0 0
        %3575 = vmatpush1.bf16.msra.mxu0 0
        %3576 = vmatprep.subr.bf16.mxu0 0
        %3577 = vmatpush1.bf16.msra.mxu0 0
        %3578 = vmatprep.subr.bf16.mxu0 0
        %3579 = vmatpush1.bf16.msra.mxu0 0
        %3580 = vmatprep.subr.bf16.mxu0 0
        %3581 = vmatpush1.bf16.msra.mxu0 0
        %3582 = vmatprep.subr.bf16.mxu0 0
        %3583 = vmatpush1.bf16.msra.mxu0 0
        %3584 = vmatprep.mubr.bf16.mxu0 0
        %3585 = vmatmul.mubr.bf16.gmra.mrb[0].mxu0 %v3507
        %v3586 = vpop.f32.mrb[0].mxu0
        %v3587 = vadd.f32 %v3493, %v3586
        %v3588 = vpop.f32.mrb[0].mxu0
        %v3589 = vadd.f32 %v3493, %v3588
        %v3590 = vpop.f32.mrb[0].mxu0
        %v3591 = vadd.f32 %v3498, %v3590
        %v3592 = vpop.f32.mrb[0].mxu0
        %v3593 = vadd.f32 %v3498, %v3592
        %3594 = vdwg.mxu0
        %v3595 = vmax.f32 %v3544, 0.0
        %v3596 = vmax.f32 %v3546, 0.0
        %v3597 = vmax.f32 %v3587, 0.0
        %v3598 = vmax.f32 %v3589, 0.0
        %v3599 = vmax.f32 %v3548, 0.0
        %v3600 = vmax.f32 %v3550, 0.0
        %v3601 = vmax.f32 %v3591, 0.0
        %v3602 = vmax.f32 %v3593, 0.0
        %3603 = vst [vmem:[%s404] sm:$0xff] %v3595
        %3604 = vst [vmem:[%s404 + $0x8] sm:$0xff] %v3596
        %3605 = vst [vmem:[%s404 + $0x10] sm:$0xff] %v3597
        %3606 = vst [vmem:[%s404 + $0x18] sm:$0xff] %v3598
        %3607 = vst [vmem:[%s404 + $0x20] sm:$0xff] %v3599
        %3608 = vst [vmem:[%s404 + $0x28] sm:$0xff] %v3600
        %3609 = vst [vmem:[%s404 + $0x30] sm:$0xff] %v3601
        %3610 = vst [vmem:[%s404 + $0x38] sm:$0xff] %v3602
        %s3611 = sand.u32 %s258, 1
        %s3612 = scalar_lea.sflag [#allocation3], %s3611
        %s3613 = sand.u32 %s258, 1
        %s3614 = smul.addr %s3613, 64
        %s3615 = scalar_lea.vmem [#allocation2], %s3614
        // Predicated region
        $region57: #{tpu_custom_call.1} parent=55 // pred_check
          %p3616 = pneg %p268
        $region58: #{tpu_custom_call.1} parent=55 // pred_check_branch
          %3618 = sbr.rel (%p3616) target = $region60
        $region59: #{tpu_custom_call.1} parent=55 // pred_region
          %s3619 = smul.u32 4, %s28
          %s3621 = ssub.s32 1024, 1024
          %3622 = vsyncadd %s3612, %s3621
          %s3623 = smul.addr %s27, 8
          %s3624 = sadd.s32 %s3619, %s3623
          %s3625 = smul.addr %s3624, 128
          %s3626 = scalar_lea.hbm %s9, %s3625
          %s3627 = sshll.u32 %s3615, 4
          %s3628 = int_to_ptr.vmem [resolvable:$true] %s3627
          %3633 = dma.vmem_to_hbm [thread:$0]  %s3628, 1024, %s3626, %s3612, 512, 512, 32
        $region60: #{tpu_custom_call.1} parent=55 // pred_fallthru
          _
      $region56: #{tpu_custom_call.1} parent=5 // pred_fallthru
        _
      %p3634 = scmp.le.s32.totalorder 2, %s18
      // Predicated region
      $region61: #{tpu_custom_call.1} parent=5 // pred_check
        %p3635 = pneg %p3634
      $region62: #{tpu_custom_call.1} parent=5 // pred_check_branch
        %3637 = sbr.rel (%p3635) target = $region64
      $region63: #{tpu_custom_call.1} parent=5 // pred_region
        %s3638 = ssub.s32 %s18, 2
        // Predicated region
        $region65: #{tpu_custom_call.1} parent=63 // pred_check
          %p3639 = pneg %p274
        $region66: #{tpu_custom_call.1} parent=63 // pred_check_branch
          %3641 = sbr.rel (%p3639) target = $region68
        $region67: #{tpu_custom_call.1} parent=63 // pred_region
          %s3642 = sand.u32 %s259, 1
          %s3643 = scalar_lea.sflag [#allocation3], %s3642
          %s3644 = sand.u32 %s259, 1
          %s3645 = smul.addr %s3644, 64
          %s3646 = scalar_lea.vmem [#allocation2], %s3645
          %3647 = dma.done %s3643, 1024
        $region68: #{tpu_custom_call.1} parent=63 // pred_fallthru
          _
      $region64: #{tpu_custom_call.1} parent=5 // pred_fallthru
        _
    $region6: #{tpu_custom_call.1} parent=1 // loop_footer
      %s22 = sadd.s32 1, %s18
    $region7: #{tpu_custom_call.1} parent=1 // loop_footer_branch
      %17 = sbr.rel target = $region3
    $region8: #{tpu_custom_call.1} parent=1 // loop_exit
      _
    %3648 = vsyncpa [#allocation3], 1
    %s3649 = scalar_lea.sflag [#allocation3], 1
    %3650 = vsyncpa %s3649, 1

</llo_original>
